<compile_context>
chip_gen: v7x
topology: tpu7x:2x2x1
jax: 0.10.0
libtpu: 0.0.40
codegen_flags: <defaults>
</compile_context>

<pallas_src>
import functools
import math

import jax
import jax.numpy as jnp
from jax.experimental import pallas as pl
from jax.experimental.pallas import tpu as pltpu


# --------------------------- in-kernel helpers ------------------------------

_SQRT_HALF = 1.0 / math.sqrt(2.0)


def _erf(x):
    # Abramowitz & Stegun 7.1.26 rational approximation (|error| <= 1.5e-7).
    a1, a2, a3, a4, a5 = (0.254829592, -0.284496736, 1.421413741,
                          -1.453152027, 1.061405429)
    p = 0.3275911
    ax = jnp.abs(x)
    t = 1.0 / (1.0 + p * ax)
    poly = ((((a5 * t + a4) * t + a3) * t + a2) * t + a1) * t
    y = 1.0 - poly * jnp.exp(-ax * ax)
    return jnp.where(x >= 0.0, y, -y)


def _gelu_exact(x):
    # torch.nn.functional.gelu default (erf-based)
    return 0.5 * x * (1.0 + _erf(x * _SQRT_HALF))


def _layernorm(h, g, b, eps):
    mu = jnp.mean(h, axis=-1, keepdims=True)
    c = h - mu
    var = jnp.mean(c * c, axis=-1, keepdims=True)
    return c * jax.lax.rsqrt(var + eps) * g + b


# ------------------- fused Conv1d + BN + ReLU + MaxPool(2) ------------------

def _conv_bn_relu_pool_kernel(c0_ref, c1_ref, w_ref, b_ref, o_ref):
    # One grid step = one batch element.  c0/c1 hold the im2col rows of the
    # even/odd conv output positions, so conv + bias + ReLU + MaxPool1d(2)
    # fuse into two matmuls and one max (no pre-pool HBM writeback).
    w = w_ref[...]                                   # (K*Cin, Cout) bf16, BN folded
    b = b_ref[...]                                   # (1, Cout) f32
    y0 = jnp.dot(c0_ref[...].astype(jnp.bfloat16), w,
                 preferred_element_type=jnp.float32) + b
    y1 = jnp.dot(c1_ref[...].astype(jnp.bfloat16), w,
                 preferred_element_type=jnp.float32) + b
    # max(relu(a), relu(b)) == relu(max(a, b))
    o_ref[...] = jnp.maximum(jnp.maximum(y0, y1), 0.0)


def conv_bn_relu_pool(x, eff_w, eff_b, *, stride, padding):
    """x: (B, L, Cin) channels-last.  eff_w: (K*Cin, Cout) bf16 (BN pre-folded).
    Returns Conv1d + BN + ReLU + MaxPool1d(2) as (B, Lout//2, Cout) f32."""
    B, L, Cin = x.shape
    KC, Cout = eff_w.shape
    K = KC // Cin
    xpad = jnp.pad(x, ((0, 0), (padding, padding), (0, 0)))
    Lout = (L + 2 * padding - K) // stride + 1
    Lp = Lout // 2                                   # floor mode, as in torch
    idx = stride * jnp.arange(Lout)[:, None] + jnp.arange(K)[None, :]
    cols = xpad[:, idx, :].reshape(B, Lout, K * Cin)          # im2col (XLA gather)
    c0 = cols[:, 0::2][:, :Lp].reshape(B * Lp, KC)            # even conv positions
    c1 = cols[:, 1::2][:, :Lp].reshape(B * Lp, KC)            # odd conv positions
    out = pl.pallas_call(
        _conv_bn_relu_pool_kernel,
        out_shape=jax.ShapeDtypeStruct((B * Lp, Cout), jnp.float32),
        grid=(B,),
        in_specs=[
            pl.BlockSpec((Lp, KC), lambda b: (b, 0)),
            pl.BlockSpec((Lp, KC), lambda b: (b, 0)),
            pl.BlockSpec((KC, Cout), lambda b: (0, 0)),   # weights stay resident
            pl.BlockSpec((1, Cout), lambda b: (0, 0)),
        ],
        out_specs=pl.BlockSpec((Lp, Cout), lambda b: (b, 0)),
        compiler_params=pltpu.CompilerParams(dimension_semantics=("parallel",)),
    )(c0, c1, eff_w, eff_b)
    return out.reshape(B, Lp, Cout)


# ------------------- fused TransformerEncoderLayer kernel -------------------

def _encoder_layer_kernel(x_ref, hmask_ref,
                          wqkv_ref, bqkv_ref, wo_ref, bo_ref,
                          ln1g_ref, ln1b_ref,
                          wf1_ref, bf1_ref, wf2_ref, bf2_ref,
                          ln2g_ref, ln2b_ref,
                          o_ref, *, nhead, eps):
    S, D = x_ref.shape
    dh = D // nhead
    scale = 1.0 / math.sqrt(dh)

    x = x_ref[...]                                            # (S, D) f32

    # ---- multi-head self-attention (one batch element per grid step) ----
    qkv = jnp.dot(x.astype(jnp.bfloat16), wqkv_ref[...],
                  preferred_element_type=jnp.float32) + bqkv_ref[...]
    q = qkv[:, :D] * scale
    k = qkv[:, D:2 * D].astype(jnp.bfloat16)
    v = qkv[:, 2 * D:]

    attn = jnp.zeros((S, D), jnp.float32)
    for h in range(nhead):                                    # static unroll (H=8)
        mh = hmask_ref[pl.ds(h, 1), :]                        # (1, D) head-h lane mask
        qh = (q * mh).astype(jnp.bfloat16)
        # Masking Q keeps only head-h terms -> per-head QK^T with a lane-dense
        # 64-wide contraction instead of a Dh=8 contraction + transposes.
        s = jax.lax.dot_general(qh, k, (((1,), (1,)), ((), ())),
                                preferred_element_type=jnp.float32)
        s = s - jnp.max(s, axis=-1, keepdims=True)
        p = jnp.exp(s)
        p = p * pl.reciprocal(jnp.sum(p, axis=-1, keepdims=True), approx=True)
        # Masked V: head h only fills its own lanes, so summing over heads
        # reassembles the concatenated head outputs with no reshape/transpose.
        vh = (v * mh).astype(jnp.bfloat16)
        attn = attn + jnp.dot(p.astype(jnp.bfloat16), vh,
                              preferred_element_type=jnp.float32)

    attn_out = jnp.dot(attn.astype(jnp.bfloat16), wo_ref[...],
                       preferred_element_type=jnp.float32) + bo_ref[...]

    # ---- post-norm residual 1 ----
    h1 = _layernorm(x + attn_out, ln1g_ref[...], ln1b_ref[...], eps)

    # ---- feed-forward (exact erf GELU), dropout = identity in eval ----
    ff = jnp.dot(h1.astype(jnp.bfloat16), wf1_ref[...],
                 preferred_element_type=jnp.float32) + bf1_ref[...]
    ff = _gelu_exact(ff)
    ff = jnp.dot(ff.astype(jnp.bfloat16), wf2_ref[...],
                 preferred_element_type=jnp.float32) + bf2_ref[...]

    # ---- post-norm residual 2 ----
    o_ref[...] = _layernorm(h1 + ff, ln2g_ref[...], ln2b_ref[...], eps)


def transformer_encoder_layer(x, lp, head_mask, *, nhead, eps=1e-5):
    """x: (B, S, D) f32.  One fused pallas_call per layer; grid over the batch."""
    B, S, D = x.shape
    F = lp["w_ff1"].shape[1]
    x2 = x.reshape(B * S, D)
    kernel = functools.partial(_encoder_layer_kernel, nhead=nhead, eps=eps)

    def full(shape):
        return pl.BlockSpec(shape, lambda b: (0, 0))

    out = pl.pallas_call(
        kernel,
        out_shape=jax.ShapeDtypeStruct((B * S, D), jnp.float32),
        grid=(B,),
        in_specs=[
            pl.BlockSpec((S, D), lambda b: (b, 0)),    # activations (per batch)
            full((nhead, D)),                          # head lane masks
            full((D, 3 * D)), full((1, 3 * D)),        # in_proj  (bf16 / f32)
            full((D, D)), full((1, D)),                # out_proj
            full((1, D)), full((1, D)),                # ln1 gamma/beta
            full((D, F)), full((1, F)),                # linear1
            full((F, D)), full((1, D)),                # linear2
            full((1, D)), full((1, D)),                # ln2 gamma/beta
        ],
        out_specs=pl.BlockSpec((S, D), lambda b: (b, 0)),
        compiler_params=pltpu.CompilerParams(dimension_semantics=("parallel",)),
    )(x2, head_mask,
      lp["w_qkv"], lp["b_qkv"], lp["w_out"], lp["b_out"],
      lp["ln1_g"], lp["ln1_b"],
      lp["w_ff1"], lp["b_ff1"], lp["w_ff2"], lp["b_ff2"],
      lp["ln2_g"], lp["ln2_b"])
    return out.reshape(B, S, D)


# ------------------------------- mean pooling -------------------------------

def _mean_pool_kernel(x_ref, pool_ref, o_ref):
    # (B, B*S) @ (B*S, D) row-averaging matmul -> x.mean(dim=1)
    o_ref[...] = jnp.dot(pool_ref[...], x_ref[...],
                         preferred_element_type=jnp.float32)


def mean_over_seq(x):
    B, S, D = x.shape
    pool = jnp.repeat(jnp.eye(B, dtype=jnp.float32), S, axis=1) / float(S)
    return pl.pallas_call(
        _mean_pool_kernel,
        out_shape=jax.ShapeDtypeStruct((B, D), jnp.float32),
    )(x.reshape(B * S, D), pool)


# ------------------------------ model pieces --------------------------------

def positional_encoding(S, D):
    position = jnp.arange(S, dtype=jnp.float32)[:, None]
    div_term = jnp.exp(
        jnp.arange(0, D, 2, dtype=jnp.float32) * (-math.log(10000.0) / D))
    pe = jnp.zeros((S, D), dtype=jnp.float32)
    pe = pe.at[:, 0::2].set(jnp.sin(position * div_term))
    pe = pe.at[:, 1::2].set(jnp.cos(position * div_term))
    return pe


def make_head_mask(nhead, D):
    dh = D // nhead
    lane = jnp.arange(D)[None, :] // dh
    head = jnp.arange(nhead)[:, None]
    return (lane == head).astype(jnp.float32)        # (H, D)


def sensor_transformer_forward(x, params, *, nhead=8):
    """x: (B, L, input_dim=1)  ->  (B, d_model)."""
    # torch: x = transpose(1,2) -> NCL conv stack -> transpose(2,1).
    # Our convs are channels-last, so both transposes are absorbed in layout.
    h = conv_bn_relu_pool(x, params["conv1_w"], params["conv1_b"],
                          stride=2, padding=2)
    h = conv_bn_relu_pool(h, params["conv2_w"], params["conv2_b"],
                          stride=1, padding=1)
    B, S, D = h.shape
    h = h + positional_encoding(S, D)[None]           # PositionalEncoding
    head_mask = make_head_mask(nhead, D)
    for lp in params["layers"]:
        h = transformer_encoder_layer(h, lp, head_mask, nhead=nhead)
    return mean_over_seq(h)                           # x.mean(dim=1)
    # TODO(synk): self.pool_transformer (MaxPool1d(8)) is unused in the
    # reference forward and is therefore intentionally not implemented.


# ----------------------------- parameter setup ------------------------------

def init_torch_like_params(key, *, d_model=64, nhead=8, num_layers=2, dff=256):
    """Random parameters in PyTorch layouts (what SensorTransformer would hold)."""
    def nrm(k, shape, s=0.05):
        return s * jax.random.normal(k, shape, dtype=jnp.float32)

    keys = iter(jax.random.split(key, 4 + 8 * num_layers))
    eps = jnp.float32(1e-5)
    p = {
        # Conv1d(1, 32, 5, stride=2, padding=2) + BatchNorm1d(32)
        "conv1_w": nrm(next(keys), (32, 1, 5)),
        "conv1_b": nrm(next(keys), (32,)),
        "bn1": (jnp.ones((32,)), jnp.zeros((32,)),
                jnp.zeros((32,)), jnp.ones((32,)), eps),
        # Conv1d(32, 64, 3, stride=1, padding=1) + BatchNorm1d(64)
        "conv2_w": nrm(next(keys), (64, 32, 3)),
        "conv2_b": nrm(next(keys), (64,)),
        "bn2": (jnp.ones((64,)), jnp.zeros((64,)),
                jnp.zeros((64,)), jnp.ones((64,)), eps),
        "layers": [],
    }
    for _ in range(num_layers):
        p["layers"].append({
            "in_proj_w": nrm(next(keys), (3 * d_model, d_model)),
            "in_proj_b": nrm(next(keys), (3 * d_model,)),
            "out_proj_w": nrm(next(keys), (d_model, d_model)),
            "out_proj_b": nrm(next(keys), (d_model,)),
            "lin1_w": nrm(next(keys), (dff, d_model)),
            "lin1_b": nrm(next(keys), (dff,)),
            "lin2_w": nrm(next(keys), (d_model, dff)),
            "lin2_b": nrm(next(keys), (d_model,)),
            "ln1_g": jnp.ones((d_model,)), "ln1_b": jnp.zeros((d_model,)),
            "ln2_g": jnp.ones((d_model,)), "ln2_b": jnp.zeros((d_model,)),
        })
    return p


def pack_params(tp):
    """One-time conversion into kernel layout: BN folded into conv weights,
    matmul weights pre-transposed + bf16, biases/LN params as (1, N) rows."""
    def fold_conv(w, b, bn):
        Cout, Cin, K = w.shape
        gamma, beta, mean, var, eps = bn              # BatchNorm1d, eval stats
        scale = gamma / jnp.sqrt(var + eps)
        wm = jnp.transpose(w, (2, 1, 0)).reshape(K * Cin, Cout)   # (k*Cin+c, o)
        return ((wm * scale[None, :]).astype(jnp.bfloat16),
                ((b - mean) * scale + beta).reshape(1, Cout))

    w1, b1 = fold_conv(tp["conv1_w"], tp["conv1_b"], tp["bn1"])
    w2, b2 = fold_conv(tp["conv2_w"], tp["conv2_b"], tp["bn2"])
    packed = {"conv1_w": w1, "conv1_b": b1, "conv2_w": w2, "conv2_b": b2,
              "layers": []}
    for lp in tp["layers"]:
        packed["layers"].append({
            "w_qkv": lp["in_proj_w"].T.astype(jnp.bfloat16),
            "b_qkv": lp["in_proj_b"].reshape(1, -1),
            "w_out": lp["out_proj_w"].T.astype(jnp.bfloat16),
            "b_out": lp["out_proj_b"].reshape(1, -1),
            "w_ff1": lp["lin1_w"].T.astype(jnp.bfloat16),
            "b_ff1": lp["lin1_b"].reshape(1, -1),
            "w_ff2": lp["lin2_w"].T.astype(jnp.bfloat16),
            "b_ff2": lp["lin2_b"].reshape(1, -1),
            "ln1_g": lp["ln1_g"].reshape(1, -1), "ln1_b": lp["ln1_b"].reshape(1, -1),
            "ln2_g": lp["ln2_g"].reshape(1, -1), "ln2_b": lp["ln2_b"].reshape(1, -1),
        })
    return packed


# ---------------------------------- main -------------------------------------

if __name__ == "__main__":
    key = jax.random.PRNGKey(0)
    pkey, xkey = jax.random.split(key)

    params = pack_params(init_torch_like_params(pkey))

    # Input: (batch=2, seq_len=64, input_dim=1); the conv stack produces
    # (2, 8, 64) for the transformer and the model output is (2, 64).
    x = jax.random.normal(xkey, (2, 64, 1), dtype=jnp.float32)

    fwd = jax.jit(sensor_transformer_forward, static_argnames=("nhead",))
    out = fwd(x, params, nhead=8)
    out = jax.block_until_ready(out)
    assert out.shape == (2, 64), out.shape
    print("KERNEL_OK")
</pallas_src>

<mosaic_0001>
module attributes {stable_mosaic.version = 11 : i64} {
  func.func @_conv_bn_relu_pool_kernel(%arg0: i32, %arg1: memref<16x5xf32, #tpu.memory_space<vmem>>, %arg2: memref<16x5xf32, #tpu.memory_space<vmem>>, %arg3: memref<5x32xbf16, #tpu.memory_space<vmem>>, %arg4: memref<1x32xf32, #tpu.memory_space<vmem>>, %arg5: memref<16x32xf32, #tpu.memory_space<vmem>>) attributes {dimension_semantics = [#tpu.dimension_semantics<parallel>], iteration_bounds = array<i64: 2>, scalar_prefetch = 0 : i64, scratch_operands = 0 : i64, tpu.core_type = #tpu.core_type<tc>, window_params = [{transform_indices = @transform_0, window_bounds = array<i64: 16, 5>}, {transform_indices = @transform_1, window_bounds = array<i64: 16, 5>}, {pipeline_mode = #tpu.pipeline_mode<synchronous>, transform_indices = @transform_2, window_bounds = array<i64: 5, 32>}, {pipeline_mode = #tpu.pipeline_mode<synchronous>, transform_indices = @transform_3, window_bounds = array<i64: 1, 32>}, {transform_indices = @transform_4, window_bounds = array<i64: 16, 32>}]} {
    %c0 = arith.constant 0 : index
    %c0_0 = arith.constant 0 : index
    %0 = vector.load %arg3[%c0, %c0_0] : memref<5x32xbf16, #tpu.memory_space<vmem>>, vector<5x32xbf16>
    %c0_1 = arith.constant 0 : index
    %c0_2 = arith.constant 0 : index
    %1 = vector.load %arg4[%c0_1, %c0_2] : memref<1x32xf32, #tpu.memory_space<vmem>>, vector<1x32xf32>
    %c0_3 = arith.constant 0 : index
    %c0_4 = arith.constant 0 : index
    %2 = vector.load %arg1[%c0_3, %c0_4] : memref<16x5xf32, #tpu.memory_space<vmem>>, vector<16x5xf32>
    %3 = arith.truncf %2 : vector<16x5xf32> to vector<16x5xbf16>
    %cst = arith.constant dense<0.000000e+00> : vector<16x32xf32>
    %4 = tpu.matmul %3, %0, %cst {dimension_numbers = #tpu.dot_dimension_numbers<[1], [0], [0], [1], [0, 0, 1, 1], [], []>} : vector<16x5xbf16>, vector<5x32xbf16>, vector<16x32xf32> -> vector<16x32xf32>
    %5 = vector.broadcast %1 : vector<1x32xf32> to vector<16x32xf32>
    %6 = arith.addf %4, %5 : vector<16x32xf32>
    %c0_5 = arith.constant 0 : index
    %c0_6 = arith.constant 0 : index
    %7 = vector.load %arg2[%c0_5, %c0_6] : memref<16x5xf32, #tpu.memory_space<vmem>>, vector<16x5xf32>
    %8 = arith.truncf %7 : vector<16x5xf32> to vector<16x5xbf16>
    %cst_7 = arith.constant dense<0.000000e+00> : vector<16x32xf32>
    %9 = tpu.matmul %8, %0, %cst_7 {dimension_numbers = #tpu.dot_dimension_numbers<[1], [0], [0], [1], [0, 0, 1, 1], [], []>} : vector<16x5xbf16>, vector<5x32xbf16>, vector<16x32xf32> -> vector<16x32xf32>
    %10 = vector.broadcast %1 : vector<1x32xf32> to vector<16x32xf32>
    %11 = arith.addf %9, %10 : vector<16x32xf32>
    %12 = arith.maximumf %6, %11 : vector<16x32xf32>
    %cst_8 = arith.constant 0.000000e+00 : f32
    %13 = vector.broadcast %cst_8 : f32 to vector<16x32xf32>
    %14 = arith.maximumf %12, %13 : vector<16x32xf32>
    %c0_9 = arith.constant 0 : index
    %c0_10 = arith.constant 0 : index
    %15 = vector.load %arg5[%c0_9, %c0_10] : memref<16x32xf32, #tpu.memory_space<vmem>>, vector<16x32xf32>
    tpu.vector_store %arg5[%c0_9, %c0_10], %14 {strides = array<i32>} : memref<16x32xf32, #tpu.memory_space<vmem>>, vector<16x32xf32>,
    return
  }
  func.func @transform_0(%arg0: i32) -> (i32, i32) {
    %c0_i32 = arith.constant 0 : i32
    %c0_i32_0 = arith.constant 0 : i32
    return %arg0, %c0_i32 : i32, i32
  }
  func.func @transform_1(%arg0: i32) -> (i32, i32) {
    %c0_i32 = arith.constant 0 : i32
    %c0_i32_0 = arith.constant 0 : i32
    return %arg0, %c0_i32 : i32, i32
  }
  func.func @transform_2(%arg0: i32) -> (i32, i32) {
    %c0_i32 = arith.constant 0 : i32
    %c0_i32_0 = arith.constant 0 : i32
    %c0_i32_1 = arith.constant 0 : i32
    return %c0_i32, %c0_i32_0 : i32, i32
  }
  func.func @transform_3(%arg0: i32) -> (i32, i32) {
    %c0_i32 = arith.constant 0 : i32
    %c0_i32_0 = arith.constant 0 : i32
    %c0_i32_1 = arith.constant 0 : i32
    return %c0_i32, %c0_i32_0 : i32, i32
  }
  func.func @transform_4(%arg0: i32) -> (i32, i32) {
    %c0_i32 = arith.constant 0 : i32
    %c0_i32_0 = arith.constant 0 : i32
    return %arg0, %c0_i32 : i32, i32
  }
}

module attributes {stable_mosaic.version = 11 : i64} {
  func.func @_conv_bn_relu_pool_kernel(%arg0: i32, %arg1: memref<8x96xf32, #tpu.memory_space<vmem>>, %arg2: memref<8x96xf32, #tpu.memory_space<vmem>>, %arg3: memref<96x64xbf16, #tpu.memory_space<vmem>>, %arg4: memref<1x64xf32, #tpu.memory_space<vmem>>, %arg5: memref<8x64xf32, #tpu.memory_space<vmem>>) attributes {dimension_semantics = [#tpu.dimension_semantics<parallel>], iteration_bounds = array<i64: 2>, scalar_prefetch = 0 : i64, scratch_operands = 0 : i64, tpu.core_type = #tpu.core_type<tc>, window_params = [{transform_indices = @transform_0, window_bounds = array<i64: 8, 96>}, {transform_indices = @transform_1, window_bounds = array<i64: 8, 96>}, {pipeline_mode = #tpu.pipeline_mode<synchronous>, transform_indices = @transform_2, window_bounds = array<i64: 96, 64>}, {pipeline_mode = #tpu.pipeline_mode<synchronous>, transform_indices = @transform_3, window_bounds = array<i64: 1, 64>}, {transform_indices = @transform_4, window_bounds = array<i64: 8, 64>}]} {
    %c0 = arith.constant 0 : index
    %c0_0 = arith.constant 0 : index
    %0 = vector.load %arg3[%c0, %c0_0] : memref<96x64xbf16, #tpu.memory_space<vmem>>, vector<96x64xbf16>
    %c0_1 = arith.constant 0 : index
    %c0_2 = arith.constant 0 : index
    %1 = vector.load %arg4[%c0_1, %c0_2] : memref<1x64xf32, #tpu.memory_space<vmem>>, vector<1x64xf32>
    %c0_3 = arith.constant 0 : index
    %c0_4 = arith.constant 0 : index
    %2 = vector.load %arg1[%c0_3, %c0_4] : memref<8x96xf32, #tpu.memory_space<vmem>>, vector<8x96xf32>
    %3 = arith.truncf %2 : vector<8x96xf32> to vector<8x96xbf16>
    %cst = arith.constant dense<0.000000e+00> : vector<8x64xf32>
    %4 = tpu.matmul %3, %0, %cst {dimension_numbers = #tpu.dot_dimension_numbers<[1], [0], [0], [1], [0, 0, 1, 1], [], []>} : vector<8x96xbf16>, vector<96x64xbf16>, vector<8x64xf32> -> vector<8x64xf32>
    %5 = vector.broadcast %1 : vector<1x64xf32> to vector<8x64xf32>
    %6 = arith.addf %4, %5 : vector<8x64xf32>
    %c0_5 = arith.constant 0 : index
    %c0_6 = arith.constant 0 : index
    %7 = vector.load %arg2[%c0_5, %c0_6] : memref<8x96xf32, #tpu.memory_space<vmem>>, vector<8x96xf32>
    %8 = arith.truncf %7 : vector<8x96xf32> to vector<8x96xbf16>
    %cst_7 = arith.constant dense<0.000000e+00> : vector<8x64xf32>
    %9 = tpu.matmul %8, %0, %cst_7 {dimension_numbers = #tpu.dot_dimension_numbers<[1], [0], [0], [1], [0, 0, 1, 1], [], []>} : vector<8x96xbf16>, vector<96x64xbf16>, vector<8x64xf32> -> vector<8x64xf32>
    %10 = vector.broadcast %1 : vector<1x64xf32> to vector<8x64xf32>
    %11 = arith.addf %9, %10 : vector<8x64xf32>
    %12 = arith.maximumf %6, %11 : vector<8x64xf32>
    %cst_8 = arith.constant 0.000000e+00 : f32
    %13 = vector.broadcast %cst_8 : f32 to vector<8x64xf32>
    %14 = arith.maximumf %12, %13 : vector<8x64xf32>
    %c0_9 = arith.constant 0 : index
    %c0_10 = arith.constant 0 : index
    %15 = vector.load %arg5[%c0_9, %c0_10] : memref<8x64xf32, #tpu.memory_space<vmem>>, vector<8x64xf32>
    tpu.vector_store %arg5[%c0_9, %c0_10], %14 {strides = array<i32>} : memref<8x64xf32, #tpu.memory_space<vmem>>, vector<8x64xf32>,
    return
  }
  func.func @transform_0(%arg0: i32) -> (i32, i32) {
    %c0_i32 = arith.constant 0 : i32
    %c0_i32_0 = arith.constant 0 : i32
    return %arg0, %c0_i32 : i32, i32
  }
  func.func @transform_1(%arg0: i32) -> (i32, i32) {
    %c0_i32 = arith.constant 0 : i32
    %c0_i32_0 = arith.constant 0 : i32
    return %arg0, %c0_i32 : i32, i32
  }
  func.func @transform_2(%arg0: i32) -> (i32, i32) {
    %c0_i32 = arith.constant 0 : i32
    %c0_i32_0 = arith.constant 0 : i32
    %c0_i32_1 = arith.constant 0 : i32
    return %c0_i32, %c0_i32_0 : i32, i32
  }
  func.func @transform_3(%arg0: i32) -> (i32, i32) {
    %c0_i32 = arith.constant 0 : i32
    %c0_i32_0 = arith.constant 0 : i32
    %c0_i32_1 = arith.constant 0 : i32
    return %c0_i32, %c0_i32_0 : i32, i32
  }
  func.func @transform_4(%arg0: i32) -> (i32, i32) {
    %c0_i32 = arith.constant 0 : i32
    %c0_i32_0 = arith.constant 0 : i32
    return %arg0, %c0_i32 : i32, i32
  }
}

module attributes {stable_mosaic.version = 11 : i64} {
  func.func @_encoder_layer_kernel(%arg0: i32, %arg1: memref<8x64xf32, #tpu.memory_space<vmem>>, %arg2: memref<8x64xf32, #tpu.memory_space<vmem>>, %arg3: memref<64x192xbf16, #tpu.memory_space<vmem>>, %arg4: memref<1x192xf32, #tpu.memory_space<vmem>>, %arg5: memref<64x64xbf16, #tpu.memory_space<vmem>>, %arg6: memref<1x64xf32, #tpu.memory_space<vmem>>, %arg7: memref<1x64xf32, #tpu.memory_space<vmem>>, %arg8: memref<1x64xf32, #tpu.memory_space<vmem>>, %arg9: memref<64x256xbf16, #tpu.memory_space<vmem>>, %arg10: memref<1x256xf32, #tpu.memory_space<vmem>>, %arg11: memref<256x64xbf16, #tpu.memory_space<vmem>>, %arg12: memref<1x64xf32, #tpu.memory_space<vmem>>, %arg13: memref<1x64xf32, #tpu.memory_space<vmem>>, %arg14: memref<1x64xf32, #tpu.memory_space<vmem>>, %arg15: memref<8x64xf32, #tpu.memory_space<vmem>>) attributes {dimension_semantics = [#tpu.dimension_semantics<parallel>], iteration_bounds = array<i64: 2>, scalar_prefetch = 0 : i64, scratch_operands = 0 : i64, tpu.core_type = #tpu.core_type<tc>, window_params = [{transform_indices = @transform_0, window_bounds = array<i64: 8, 64>}, {pipeline_mode = #tpu.pipeline_mode<synchronous>, transform_indices = @transform_1, window_bounds = array<i64: 8, 64>}, {pipeline_mode = #tpu.pipeline_mode<synchronous>, transform_indices = @transform_2, window_bounds = array<i64: 64, 192>}, {pipeline_mode = #tpu.pipeline_mode<synchronous>, transform_indices = @transform_3, window_bounds = array<i64: 1, 192>}, {pipeline_mode = #tpu.pipeline_mode<synchronous>, transform_indices = @transform_4, window_bounds = array<i64: 64, 64>}, {pipeline_mode = #tpu.pipeline_mode<synchronous>, transform_indices = @transform_5, window_bounds = array<i64: 1, 64>}, {pipeline_mode = #tpu.pipeline_mode<synchronous>, transform_indices = @transform_6, window_bounds = array<i64: 1, 64>}, {pipeline_mode = #tpu.pipeline_mode<synchronous>, transform_indices = @transform_7, window_bounds = array<i64: 1, 64>}, {pipeline_mode = #tpu.pipeline_mode<synchronous>, transform_indices = @transform_8, window_bounds = array<i64: 64, 256>}, {pipeline_mode = #tpu.pipeline_mode<synchronous>, transform_indices = @transform_9, window_bounds = array<i64: 1, 256>}, {pipeline_mode = #tpu.pipeline_mode<synchronous>, transform_indices = @transform_10, window_bounds = array<i64: 256, 64>}, {pipeline_mode = #tpu.pipeline_mode<synchronous>, transform_indices = @transform_11, window_bounds = array<i64: 1, 64>}, {pipeline_mode = #tpu.pipeline_mode<synchronous>, transform_indices = @transform_12, window_bounds = array<i64: 1, 64>}, {pipeline_mode = #tpu.pipeline_mode<synchronous>, transform_indices = @transform_13, window_bounds = array<i64: 1, 64>}, {transform_indices = @transform_14, window_bounds = array<i64: 8, 64>}]} {
    %c0 = arith.constant 0 : index
    %c0_0 = arith.constant 0 : index
    %0 = vector.load %arg1[%c0, %c0_0] : memref<8x64xf32, #tpu.memory_space<vmem>>, vector<8x64xf32>
    %1 = arith.truncf %0 : vector<8x64xf32> to vector<8x64xbf16>
    %c0_1 = arith.constant 0 : index
    %c0_2 = arith.constant 0 : index
    %2 = vector.load %arg3[%c0_1, %c0_2] : memref<64x192xbf16, #tpu.memory_space<vmem>>, vector<64x192xbf16>
    %cst = arith.constant dense<0.000000e+00> : vector<8x192xf32>
    %3 = tpu.matmul %1, %2, %cst {dimension_numbers = #tpu.dot_dimension_numbers<[1], [0], [0], [1], [0, 0, 1, 1], [], []>} : vector<8x64xbf16>, vector<64x192xbf16>, vector<8x192xf32> -> vector<8x192xf32>
    %c0_3 = arith.constant 0 : index
    %c0_4 = arith.constant 0 : index
    %4 = vector.load %arg4[%c0_3, %c0_4] : memref<1x192xf32, #tpu.memory_space<vmem>>, vector<1x192xf32>
    %5 = vector.broadcast %4 : vector<1x192xf32> to vector<8x192xf32>
    %6 = arith.addf %3, %5 : vector<8x192xf32>
    %7 = vector.extract_strided_slice %6 {offsets = [0, 0], sizes = [8, 64], strides = [1, 1]} : vector<8x192xf32> to vector<8x64xf32>
    %cst_5 = arith.constant 0.353553385 : f32
    %8 = vector.broadcast %cst_5 : f32 to vector<8x64xf32>
    %9 = arith.mulf %7, %8 : vector<8x64xf32>
    %10 = vector.extract_strided_slice %6 {offsets = [0, 64], sizes = [8, 64], strides = [1, 1]} : vector<8x192xf32> to vector<8x64xf32>
    %11 = arith.truncf %10 : vector<8x64xf32> to vector<8x64xbf16>
    %12 = vector.extract_strided_slice %6 {offsets = [0, 128], sizes = [8, 64], strides = [1, 1]} : vector<8x192xf32> to vector<8x64xf32>
    %cst_6 = arith.constant 0.000000e+00 : f32
    %13 = vector.broadcast %cst_6 : f32 to vector<8x64xf32>
    %c0_7 = arith.constant 0 : index
    %c0_8 = arith.constant 0 : index
    %14 = vector.load %arg2[%c0_7, %c0_8] : memref<8x64xf32, #tpu.memory_space<vmem>>, vector<1x64xf32>
    %15 = vector.broadcast %14 : vector<1x64xf32> to vector<8x64xf32>
    %16 = arith.mulf %9, %15 : vector<8x64xf32>
    %17 = arith.truncf %16 : vector<8x64xf32> to vector<8x64xbf16>
    %cst_9 = arith.constant dense<0.000000e+00> : vector<8x8xf32>
    %18 = tpu.matmul %17, %11, %cst_9 {dimension_numbers = #tpu.dot_dimension_numbers<[1], [1], [0], [0], [0, 0, 1, 0], [], []>} : vector<8x64xbf16>, vector<8x64xbf16>, vector<8x8xf32> -> vector<8x8xf32>
    %cst_10 = arith.constant dense<0xFF800000> : vector<8xf32>
    %19 = vector.multi_reduction <maximumf>, %18, %cst_10 [1] : vector<8x8xf32> to vector<8xf32>
    %20 = vector.shape_cast %19 : vector<8xf32> to vector<8x1xf32>
    %21 = vector.broadcast %20 : vector<8x1xf32> to vector<8x8xf32>
    %22 = arith.subf %18, %21 : vector<8x8xf32>
    %23 = math.exp %22 : vector<8x8xf32>
    %cst_11 = arith.constant dense<0.000000e+00> : vector<8xf32>
    %24 = vector.multi_reduction <add>, %23, %cst_11 [1] : vector<8x8xf32> to vector<8xf32>
    %25 = vector.shape_cast %24 : vector<8xf32> to vector<8x1xf32>
    %26 = tpu.reciprocal %25 {approx = true} : vector<8x1xf32> -> vector<8x1xf32>
    %27 = vector.broadcast %26 : vector<8x1xf32> to vector<8x8xf32>
    %28 = arith.mulf %23, %27 : vector<8x8xf32>
    %29 = vector.broadcast %14 : vector<1x64xf32> to vector<8x64xf32>
    %30 = arith.mulf %12, %29 : vector<8x64xf32>
    %31 = arith.truncf %30 : vector<8x64xf32> to vector<8x64xbf16>
    %32 = arith.truncf %28 : vector<8x8xf32> to vector<8x8xbf16>
    %cst_12 = arith.constant dense<0.000000e+00> : vector<8x64xf32>
    %33 = tpu.matmul %32, %31, %cst_12 {dimension_numbers = #tpu.dot_dimension_numbers<[1], [0], [0], [1], [0, 0, 1, 1], [], []>} : vector<8x8xbf16>, vector<8x64xbf16>, vector<8x64xf32> -> vector<8x64xf32>
    %34 = arith.addf %13, %33 : vector<8x64xf32>
    %c1 = arith.constant 1 : index
    %c0_13 = arith.constant 0 : index
    %35 = vector.load %arg2[%c1, %c0_13] : memref<8x64xf32, #tpu.memory_space<vmem>>, vector<1x64xf32>
    %36 = vector.broadcast %35 : vector<1x64xf32> to vector<8x64xf32>
    %37 = arith.mulf %9, %36 : vector<8x64xf32>
    %38 = arith.truncf %37 : vector<8x64xf32> to vector<8x64xbf16>
    %cst_14 = arith.constant dense<0.000000e+00> : vector<8x8xf32>
    %39 = tpu.matmul %38, %11, %cst_14 {dimension_numbers = #tpu.dot_dimension_numbers<[1], [1], [0], [0], [0, 0, 1, 0], [], []>} : vector<8x64xbf16>, vector<8x64xbf16>, vector<8x8xf32> -> vector<8x8xf32>
    %cst_15 = arith.constant dense<0xFF800000> : vector<8xf32>
    %40 = vector.multi_reduction <maximumf>, %39, %cst_15 [1] : vector<8x8xf32> to vector<8xf32>
    %41 = vector.shape_cast %40 : vector<8xf32> to vector<8x1xf32>
    %42 = vector.broadcast %41 : vector<8x1xf32> to vector<8x8xf32>
    %43 = arith.subf %39, %42 : vector<8x8xf32>
    %44 = math.exp %43 : vector<8x8xf32>
    %cst_16 = arith.constant dense<0.000000e+00> : vector<8xf32>
    %45 = vector.multi_reduction <add>, %44, %cst_16 [1] : vector<8x8xf32> to vector<8xf32>
    %46 = vector.shape_cast %45 : vector<8xf32> to vector<8x1xf32>
    %47 = tpu.reciprocal %46 {approx = true} : vector<8x1xf32> -> vector<8x1xf32>
    %48 = vector.broadcast %47 : vector<8x1xf32> to vector<8x8xf32>
    %49 = arith.mulf %44, %48 : vector<8x8xf32>
    %50 = vector.broadcast %35 : vector<1x64xf32> to vector<8x64xf32>
    %51 = arith.mulf %12, %50 : vector<8x64xf32>
    %52 = arith.truncf %51 : vector<8x64xf32> to vector<8x64xbf16>
    %53 = arith.truncf %49 : vector<8x8xf32> to vector<8x8xbf16>
    %cst_17 = arith.constant dense<0.000000e+00> : vector<8x64xf32>
    %54 = tpu.matmul %53, %52, %cst_17 {dimension_numbers = #tpu.dot_dimension_numbers<[1], [0], [0], [1], [0, 0, 1, 1], [], []>} : vector<8x8xbf16>, vector<8x64xbf16>, vector<8x64xf32> -> vector<8x64xf32>
    %55 = arith.addf %34, %54 : vector<8x64xf32>
    %c2 = arith.constant 2 : index
    %c0_18 = arith.constant 0 : index
    %56 = vector.load %arg2[%c2, %c0_18] : memref<8x64xf32, #tpu.memory_space<vmem>>, vector<1x64xf32>
    %57 = vector.broadcast %56 : vector<1x64xf32> to vector<8x64xf32>
    %58 = arith.mulf %9, %57 : vector<8x64xf32>
    %59 = arith.truncf %58 : vector<8x64xf32> to vector<8x64xbf16>
    %cst_19 = arith.constant dense<0.000000e+00> : vector<8x8xf32>
    %60 = tpu.matmul %59, %11, %cst_19 {dimension_numbers = #tpu.dot_dimension_numbers<[1], [1], [0], [0], [0, 0, 1, 0], [], []>} : vector<8x64xbf16>, vector<8x64xbf16>, vector<8x8xf32> -> vector<8x8xf32>
    %cst_20 = arith.constant dense<0xFF800000> : vector<8xf32>
    %61 = vector.multi_reduction <maximumf>, %60, %cst_20 [1] : vector<8x8xf32> to vector<8xf32>
    %62 = vector.shape_cast %61 : vector<8xf32> to vector<8x1xf32>
    %63 = vector.broadcast %62 : vector<8x1xf32> to vector<8x8xf32>
    %64 = arith.subf %60, %63 : vector<8x8xf32>
    %65 = math.exp %64 : vector<8x8xf32>
    %cst_21 = arith.constant dense<0.000000e+00> : vector<8xf32>
    %66 = vector.multi_reduction <add>, %65, %cst_21 [1] : vector<8x8xf32> to vector<8xf32>
    %67 = vector.shape_cast %66 : vector<8xf32> to vector<8x1xf32>
    %68 = tpu.reciprocal %67 {approx = true} : vector<8x1xf32> -> vector<8x1xf32>
    %69 = vector.broadcast %68 : vector<8x1xf32> to vector<8x8xf32>
    %70 = arith.mulf %65, %69 : vector<8x8xf32>
    %71 = vector.broadcast %56 : vector<1x64xf32> to vector<8x64xf32>
    %72 = arith.mulf %12, %71 : vector<8x64xf32>
    %73 = arith.truncf %72 : vector<8x64xf32> to vector<8x64xbf16>
    %74 = arith.truncf %70 : vector<8x8xf32> to vector<8x8xbf16>
    %cst_22 = arith.constant dense<0.000000e+00> : vector<8x64xf32>
    %75 = tpu.matmul %74, %73, %cst_22 {dimension_numbers = #tpu.dot_dimension_numbers<[1], [0], [0], [1], [0, 0, 1, 1], [], []>} : vector<8x8xbf16>, vector<8x64xbf16>, vector<8x64xf32> -> vector<8x64xf32>
    %76 = arith.addf %55, %75 : vector<8x64xf32>
    %c3 = arith.constant 3 : index
    %c0_23 = arith.constant 0 : index
    %77 = vector.load %arg2[%c3, %c0_23] : memref<8x64xf32, #tpu.memory_space<vmem>>, vector<1x64xf32>
    %78 = vector.broadcast %77 : vector<1x64xf32> to vector<8x64xf32>
    %79 = arith.mulf %9, %78 : vector<8x64xf32>
    %80 = arith.truncf %79 : vector<8x64xf32> to vector<8x64xbf16>
    %cst_24 = arith.constant dense<0.000000e+00> : vector<8x8xf32>
    %81 = tpu.matmul %80, %11, %cst_24 {dimension_numbers = #tpu.dot_dimension_numbers<[1], [1], [0], [0], [0, 0, 1, 0], [], []>} : vector<8x64xbf16>, vector<8x64xbf16>, vector<8x8xf32> -> vector<8x8xf32>
    %cst_25 = arith.constant dense<0xFF800000> : vector<8xf32>
    %82 = vector.multi_reduction <maximumf>, %81, %cst_25 [1] : vector<8x8xf32> to vector<8xf32>
    %83 = vector.shape_cast %82 : vector<8xf32> to vector<8x1xf32>
    %84 = vector.broadcast %83 : vector<8x1xf32> to vector<8x8xf32>
    %85 = arith.subf %81, %84 : vector<8x8xf32>
    %86 = math.exp %85 : vector<8x8xf32>
    %cst_26 = arith.constant dense<0.000000e+00> : vector<8xf32>
    %87 = vector.multi_reduction <add>, %86, %cst_26 [1] : vector<8x8xf32> to vector<8xf32>
    %88 = vector.shape_cast %87 : vector<8xf32> to vector<8x1xf32>
    %89 = tpu.reciprocal %88 {approx = true} : vector<8x1xf32> -> vector<8x1xf32>
    %90 = vector.broadcast %89 : vector<8x1xf32> to vector<8x8xf32>
    %91 = arith.mulf %86, %90 : vector<8x8xf32>
    %92 = vector.broadcast %77 : vector<1x64xf32> to vector<8x64xf32>
    %93 = arith.mulf %12, %92 : vector<8x64xf32>
    %94 = arith.truncf %93 : vector<8x64xf32> to vector<8x64xbf16>
    %95 = arith.truncf %91 : vector<8x8xf32> to vector<8x8xbf16>
    %cst_27 = arith.constant dense<0.000000e+00> : vector<8x64xf32>
    %96 = tpu.matmul %95, %94, %cst_27 {dimension_numbers = #tpu.dot_dimension_numbers<[1], [0], [0], [1], [0, 0, 1, 1], [], []>} : vector<8x8xbf16>, vector<8x64xbf16>, vector<8x64xf32> -> vector<8x64xf32>
    %97 = arith.addf %76, %96 : vector<8x64xf32>
    %c4 = arith.constant 4 : index
    %c0_28 = arith.constant 0 : index
    %98 = vector.load %arg2[%c4, %c0_28] : memref<8x64xf32, #tpu.memory_space<vmem>>, vector<1x64xf32>
    %99 = vector.broadcast %98 : vector<1x64xf32> to vector<8x64xf32>
    %100 = arith.mulf %9, %99 : vector<8x64xf32>
    %101 = arith.truncf %100 : vector<8x64xf32> to vector<8x64xbf16>
    %cst_29 = arith.constant dense<0.000000e+00> : vector<8x8xf32>
    %102 = tpu.matmul %101, %11, %cst_29 {dimension_numbers = #tpu.dot_dimension_numbers<[1], [1], [0], [0], [0, 0, 1, 0], [], []>} : vector<8x64xbf16>, vector<8x64xbf16>, vector<8x8xf32> -> vector<8x8xf32>
    %cst_30 = arith.constant dense<0xFF800000> : vector<8xf32>
    %103 = vector.multi_reduction <maximumf>, %102, %cst_30 [1] : vector<8x8xf32> to vector<8xf32>
    %104 = vector.shape_cast %103 : vector<8xf32> to vector<8x1xf32>
    %105 = vector.broadcast %104 : vector<8x1xf32> to vector<8x8xf32>
    %106 = arith.subf %102, %105 : vector<8x8xf32>
    %107 = math.exp %106 : vector<8x8xf32>
    %cst_31 = arith.constant dense<0.000000e+00> : vector<8xf32>
    %108 = vector.multi_reduction <add>, %107, %cst_31 [1] : vector<8x8xf32> to vector<8xf32>
    %109 = vector.shape_cast %108 : vector<8xf32> to vector<8x1xf32>
    %110 = tpu.reciprocal %109 {approx = true} : vector<8x1xf32> -> vector<8x1xf32>
    %111 = vector.broadcast %110 : vector<8x1xf32> to vector<8x8xf32>
    %112 = arith.mulf %107, %111 : vector<8x8xf32>
    %113 = vector.broadcast %98 : vector<1x64xf32> to vector<8x64xf32>
    %114 = arith.mulf %12, %113 : vector<8x64xf32>
    %115 = arith.truncf %114 : vector<8x64xf32> to vector<8x64xbf16>
    %116 = arith.truncf %112 : vector<8x8xf32> to vector<8x8xbf16>
    %cst_32 = arith.constant dense<0.000000e+00> : vector<8x64xf32>
    %117 = tpu.matmul %116, %115, %cst_32 {dimension_numbers = #tpu.dot_dimension_numbers<[1], [0], [0], [1], [0, 0, 1, 1], [], []>} : vector<8x8xbf16>, vector<8x64xbf16>, vector<8x64xf32> -> vector<8x64xf32>
    %118 = arith.addf %97, %117 : vector<8x64xf32>
    %c5 = arith.constant 5 : index
    %c0_33 = arith.constant 0 : index
    %119 = vector.load %arg2[%c5, %c0_33] : memref<8x64xf32, #tpu.memory_space<vmem>>, vector<1x64xf32>
    %120 = vector.broadcast %119 : vector<1x64xf32> to vector<8x64xf32>
    %121 = arith.mulf %9, %120 : vector<8x64xf32>
    %122 = arith.truncf %121 : vector<8x64xf32> to vector<8x64xbf16>
    %cst_34 = arith.constant dense<0.000000e+00> : vector<8x8xf32>
    %123 = tpu.matmul %122, %11, %cst_34 {dimension_numbers = #tpu.dot_dimension_numbers<[1], [1], [0], [0], [0, 0, 1, 0], [], []>} : vector<8x64xbf16>, vector<8x64xbf16>, vector<8x8xf32> -> vector<8x8xf32>
    %cst_35 = arith.constant dense<0xFF800000> : vector<8xf32>
    %124 = vector.multi_reduction <maximumf>, %123, %cst_35 [1] : vector<8x8xf32> to vector<8xf32>
    %125 = vector.shape_cast %124 : vector<8xf32> to vector<8x1xf32>
    %126 = vector.broadcast %125 : vector<8x1xf32> to vector<8x8xf32>
    %127 = arith.subf %123, %126 : vector<8x8xf32>
    %128 = math.exp %127 : vector<8x8xf32>
    %cst_36 = arith.constant dense<0.000000e+00> : vector<8xf32>
    %129 = vector.multi_reduction <add>, %128, %cst_36 [1] : vector<8x8xf32> to vector<8xf32>
    %130 = vector.shape_cast %129 : vector<8xf32> to vector<8x1xf32>
    %131 = tpu.reciprocal %130 {approx = true} : vector<8x1xf32> -> vector<8x1xf32>
    %132 = vector.broadcast %131 : vector<8x1xf32> to vector<8x8xf32>
    %133 = arith.mulf %128, %132 : vector<8x8xf32>
    %134 = vector.broadcast %119 : vector<1x64xf32> to vector<8x64xf32>
    %135 = arith.mulf %12, %134 : vector<8x64xf32>
    %136 = arith.truncf %135 : vector<8x64xf32> to vector<8x64xbf16>
    %137 = arith.truncf %133 : vector<8x8xf32> to vector<8x8xbf16>
    %cst_37 = arith.constant dense<0.000000e+00> : vector<8x64xf32>
    %138 = tpu.matmul %137, %136, %cst_37 {dimension_numbers = #tpu.dot_dimension_numbers<[1], [0], [0], [1], [0, 0, 1, 1], [], []>} : vector<8x8xbf16>, vector<8x64xbf16>, vector<8x64xf32> -> vector<8x64xf32>
    %139 = arith.addf %118, %138 : vector<8x64xf32>
    %c6 = arith.constant 6 : index
    %c0_38 = arith.constant 0 : index
    %140 = vector.load %arg2[%c6, %c0_38] : memref<8x64xf32, #tpu.memory_space<vmem>>, vector<1x64xf32>
    %141 = vector.broadcast %140 : vector<1x64xf32> to vector<8x64xf32>
    %142 = arith.mulf %9, %141 : vector<8x64xf32>
    %143 = arith.truncf %142 : vector<8x64xf32> to vector<8x64xbf16>
    %cst_39 = arith.constant dense<0.000000e+00> : vector<8x8xf32>
    %144 = tpu.matmul %143, %11, %cst_39 {dimension_numbers = #tpu.dot_dimension_numbers<[1], [1], [0], [0], [0, 0, 1, 0], [], []>} : vector<8x64xbf16>, vector<8x64xbf16>, vector<8x8xf32> -> vector<8x8xf32>
    %cst_40 = arith.constant dense<0xFF800000> : vector<8xf32>
    %145 = vector.multi_reduction <maximumf>, %144, %cst_40 [1] : vector<8x8xf32> to vector<8xf32>
    %146 = vector.shape_cast %145 : vector<8xf32> to vector<8x1xf32>
    %147 = vector.broadcast %146 : vector<8x1xf32> to vector<8x8xf32>
    %148 = arith.subf %144, %147 : vector<8x8xf32>
    %149 = math.exp %148 : vector<8x8xf32>
    %cst_41 = arith.constant dense<0.000000e+00> : vector<8xf32>
    %150 = vector.multi_reduction <add>, %149, %cst_41 [1] : vector<8x8xf32> to vector<8xf32>
    %151 = vector.shape_cast %150 : vector<8xf32> to vector<8x1xf32>
    %152 = tpu.reciprocal %151 {approx = true} : vector<8x1xf32> -> vector<8x1xf32>
    %153 = vector.broadcast %152 : vector<8x1xf32> to vector<8x8xf32>
    %154 = arith.mulf %149, %153 : vector<8x8xf32>
    %155 = vector.broadcast %140 : vector<1x64xf32> to vector<8x64xf32>
    %156 = arith.mulf %12, %155 : vector<8x64xf32>
    %157 = arith.truncf %156 : vector<8x64xf32> to vector<8x64xbf16>
    %158 = arith.truncf %154 : vector<8x8xf32> to vector<8x8xbf16>
    %cst_42 = arith.constant dense<0.000000e+00> : vector<8x64xf32>
    %159 = tpu.matmul %158, %157, %cst_42 {dimension_numbers = #tpu.dot_dimension_numbers<[1], [0], [0], [1], [0, 0, 1, 1], [], []>} : vector<8x8xbf16>, vector<8x64xbf16>, vector<8x64xf32> -> vector<8x64xf32>
    %160 = arith.addf %139, %159 : vector<8x64xf32>
    %c7 = arith.constant 7 : index
    %c0_43 = arith.constant 0 : index
    %161 = vector.load %arg2[%c7, %c0_43] : memref<8x64xf32, #tpu.memory_space<vmem>>, vector<1x64xf32>
    %162 = vector.broadcast %161 : vector<1x64xf32> to vector<8x64xf32>
    %163 = arith.mulf %9, %162 : vector<8x64xf32>
    %164 = arith.truncf %163 : vector<8x64xf32> to vector<8x64xbf16>
    %cst_44 = arith.constant dense<0.000000e+00> : vector<8x8xf32>
    %165 = tpu.matmul %164, %11, %cst_44 {dimension_numbers = #tpu.dot_dimension_numbers<[1], [1], [0], [0], [0, 0, 1, 0], [], []>} : vector<8x64xbf16>, vector<8x64xbf16>, vector<8x8xf32> -> vector<8x8xf32>
    %cst_45 = arith.constant dense<0xFF800000> : vector<8xf32>
    %166 = vector.multi_reduction <maximumf>, %165, %cst_45 [1] : vector<8x8xf32> to vector<8xf32>
    %167 = vector.shape_cast %166 : vector<8xf32> to vector<8x1xf32>
    %168 = vector.broadcast %167 : vector<8x1xf32> to vector<8x8xf32>
    %169 = arith.subf %165, %168 : vector<8x8xf32>
    %170 = math.exp %169 : vector<8x8xf32>
    %cst_46 = arith.constant dense<0.000000e+00> : vector<8xf32>
    %171 = vector.multi_reduction <add>, %170, %cst_46 [1] : vector<8x8xf32> to vector<8xf32>
    %172 = vector.shape_cast %171 : vector<8xf32> to vector<8x1xf32>
    %173 = tpu.reciprocal %172 {approx = true} : vector<8x1xf32> -> vector<8x1xf32>
    %174 = vector.broadcast %173 : vector<8x1xf32> to vector<8x8xf32>
    %175 = arith.mulf %170, %174 : vector<8x8xf32>
    %176 = vector.broadcast %161 : vector<1x64xf32> to vector<8x64xf32>
    %177 = arith.mulf %12, %176 : vector<8x64xf32>
    %178 = arith.truncf %177 : vector<8x64xf32> to vector<8x64xbf16>
    %179 = arith.truncf %175 : vector<8x8xf32> to vector<8x8xbf16>
    %cst_47 = arith.constant dense<0.000000e+00> : vector<8x64xf32>
    %180 = tpu.matmul %179, %178, %cst_47 {dimension_numbers = #tpu.dot_dimension_numbers<[1], [0], [0], [1], [0, 0, 1, 1], [], []>} : vector<8x8xbf16>, vector<8x64xbf16>, vector<8x64xf32> -> vector<8x64xf32>
    %181 = arith.addf %160, %180 : vector<8x64xf32>
    %182 = arith.truncf %181 : vector<8x64xf32> to vector<8x64xbf16>
    %c0_48 = arith.constant 0 : index
    %c0_49 = arith.constant 0 : index
    %183 = vector.load %arg5[%c0_48, %c0_49] : memref<64x64xbf16, #tpu.memory_space<vmem>>, vector<64x64xbf16>
    %cst_50 = arith.constant dense<0.000000e+00> : vector<8x64xf32>
    %184 = tpu.matmul %182, %183, %cst_50 {dimension_numbers = #tpu.dot_dimension_numbers<[1], [0], [0], [1], [0, 0, 1, 1], [], []>} : vector<8x64xbf16>, vector<64x64xbf16>, vector<8x64xf32> -> vector<8x64xf32>
    %c0_51 = arith.constant 0 : index
    %c0_52 = arith.constant 0 : index
    %185 = vector.load %arg6[%c0_51, %c0_52] : memref<1x64xf32, #tpu.memory_space<vmem>>, vector<1x64xf32>
    %186 = vector.broadcast %185 : vector<1x64xf32> to vector<8x64xf32>
    %187 = arith.addf %184, %186 : vector<8x64xf32>
    %188 = arith.addf %0, %187 : vector<8x64xf32>
    %c0_53 = arith.constant 0 : index
    %c0_54 = arith.constant 0 : index
    %189 = vector.load %arg7[%c0_53, %c0_54] : memref<1x64xf32, #tpu.memory_space<vmem>>, vector<1x64xf32>
    %c0_55 = arith.constant 0 : index
    %c0_56 = arith.constant 0 : index
    %190 = vector.load %arg8[%c0_55, %c0_56] : memref<1x64xf32, #tpu.memory_space<vmem>>, vector<1x64xf32>
    %cst_57 = arith.constant dense<0.000000e+00> : vector<8xf32>
    %191 = vector.multi_reduction <add>, %188, %cst_57 [1] : vector<8x64xf32> to vector<8xf32>
    %192 = vector.shape_cast %191 : vector<8xf32> to vector<8x1xf32>
    %cst_58 = arith.constant 6.400000e+01 : f32
    %193 = vector.broadcast %cst_58 : f32 to vector<8x1xf32>
    %194 = arith.divf %192, %193 : vector<8x1xf32>
    %195 = vector.broadcast %194 : vector<8x1xf32> to vector<8x64xf32>
    %196 = arith.subf %188, %195 : vector<8x64xf32>
    %197 = arith.mulf %196, %196 : vector<8x64xf32>
    %cst_59 = arith.constant dense<0.000000e+00> : vector<8xf32>
    %198 = vector.multi_reduction <add>, %197, %cst_59 [1] : vector<8x64xf32> to vector<8xf32>
    %199 = vector.shape_cast %198 : vector<8xf32> to vector<8x1xf32>
    %cst_60 = arith.constant 6.400000e+01 : f32
    %200 = vector.broadcast %cst_60 : f32 to vector<8x1xf32>
    %201 = arith.divf %199, %200 : vector<8x1xf32>
    %cst_61 = arith.constant 9.99999974E-6 : f32
    %202 = vector.broadcast %cst_61 : f32 to vector<8x1xf32>
    %203 = arith.addf %201, %202 : vector<8x1xf32>
    %204 = math.rsqrt %203 : vector<8x1xf32>
    %205 = vector.broadcast %204 : vector<8x1xf32> to vector<8x64xf32>
    %206 = arith.mulf %196, %205 : vector<8x64xf32>
    %207 = vector.broadcast %189 : vector<1x64xf32> to vector<8x64xf32>
    %208 = arith.mulf %206, %207 : vector<8x64xf32>
    %209 = vector.broadcast %190 : vector<1x64xf32> to vector<8x64xf32>
    %210 = arith.addf %208, %209 : vector<8x64xf32>
    %211 = arith.truncf %210 : vector<8x64xf32> to vector<8x64xbf16>
    %c0_62 = arith.constant 0 : index
    %c0_63 = arith.constant 0 : index
    %212 = vector.load %arg9[%c0_62, %c0_63] : memref<64x256xbf16, #tpu.memory_space<vmem>>, vector<64x256xbf16>
    %cst_64 = arith.constant dense<0.000000e+00> : vector<8x256xf32>
    %213 = tpu.matmul %211, %212, %cst_64 {dimension_numbers = #tpu.dot_dimension_numbers<[1], [0], [0], [1], [0, 0, 1, 1], [], []>} : vector<8x64xbf16>, vector<64x256xbf16>, vector<8x256xf32> -> vector<8x256xf32>
    %c0_65 = arith.constant 0 : index
    %c0_66 = arith.constant 0 : index
    %214 = vector.load %arg10[%c0_65, %c0_66] : memref<1x256xf32, #tpu.memory_space<vmem>>, vector<1x256xf32>
    %215 = vector.broadcast %214 : vector<1x256xf32> to vector<8x256xf32>
    %216 = arith.addf %213, %215 : vector<8x256xf32>
    %cst_67 = arith.constant 5.000000e-01 : f32
    %217 = vector.broadcast %cst_67 : f32 to vector<8x256xf32>
    %218 = arith.mulf %217, %216 : vector<8x256xf32>
    %cst_68 = arith.constant 0.707106769 : f32
    %219 = vector.broadcast %cst_68 : f32 to vector<8x256xf32>
    %220 = arith.mulf %216, %219 : vector<8x256xf32>
    %221 = math.absf %220 : vector<8x256xf32>
    %cst_69 = arith.constant 0.327591091 : f32
    %222 = vector.broadcast %cst_69 : f32 to vector<8x256xf32>
    %223 = arith.mulf %222, %221 : vector<8x256xf32>
    %cst_70 = arith.constant 1.000000e+00 : f32
    %224 = vector.broadcast %cst_70 : f32 to vector<8x256xf32>
    %225 = arith.addf %224, %223 : vector<8x256xf32>
    %cst_71 = arith.constant 1.000000e+00 : f32
    %226 = vector.broadcast %cst_71 : f32 to vector<8x256xf32>
    %227 = arith.divf %226, %225 : vector<8x256xf32>
    %cst_72 = arith.constant 1.06140542 : f32
    %228 = vector.broadcast %cst_72 : f32 to vector<8x256xf32>
    %229 = arith.mulf %228, %227 : vector<8x256xf32>
    %cst_73 = arith.constant -1.45315206 : f32
    %230 = vector.broadcast %cst_73 : f32 to vector<8x256xf32>
    %231 = arith.addf %229, %230 : vector<8x256xf32>
    %232 = arith.mulf %231, %227 : vector<8x256xf32>
    %cst_74 = arith.constant 1.42141378 : f32
    %233 = vector.broadcast %cst_74 : f32 to vector<8x256xf32>
    %234 = arith.addf %232, %233 : vector<8x256xf32>
    %235 = arith.mulf %234, %227 : vector<8x256xf32>
    %cst_75 = arith.constant -0.284496725 : f32
    %236 = vector.broadcast %cst_75 : f32 to vector<8x256xf32>
    %237 = arith.addf %235, %236 : vector<8x256xf32>
    %238 = arith.mulf %237, %227 : vector<8x256xf32>
    %cst_76 = arith.constant 0.254829586 : f32
    %239 = vector.broadcast %cst_76 : f32 to vector<8x256xf32>
    %240 = arith.addf %238, %239 : vector<8x256xf32>
    %241 = arith.mulf %240, %227 : vector<8x256xf32>
    %cst_77 = arith.constant 0.000000e+00 : f32
    %242 = vector.broadcast %cst_77 : f32 to vector<8x256xf32>
    %243 = arith.subf %242, %221 : vector<8x256xf32>
    %244 = arith.mulf %243, %221 : vector<8x256xf32>
    %245 = math.exp %244 : vector<8x256xf32>
    %246 = arith.mulf %241, %245 : vector<8x256xf32>
    %cst_78 = arith.constant 1.000000e+00 : f32
    %247 = vector.broadcast %cst_78 : f32 to vector<8x256xf32>
    %248 = arith.subf %247, %246 : vector<8x256xf32>
    %cst_79 = arith.constant 0.000000e+00 : f32
    %249 = vector.broadcast %cst_79 : f32 to vector<8x256xf32>
    %250 = arith.cmpf oge, %220, %249 : vector<8x256xf32>
    %cst_80 = arith.constant 0.000000e+00 : f32
    %251 = vector.broadcast %cst_80 : f32 to vector<8x256xf32>
    %252 = arith.subf %251, %248 : vector<8x256xf32>
    %253 = arith.select %250, %248, %252 : vector<8x256xi1>, vector<8x256xf32>
    %cst_81 = arith.constant 1.000000e+00 : f32
    %254 = vector.broadcast %cst_81 : f32 to vector<8x256xf32>
    %255 = arith.addf %254, %253 : vector<8x256xf32>
    %256 = arith.mulf %218, %255 : vector<8x256xf32>
    %257 = arith.truncf %256 : vector<8x256xf32> to vector<8x256xbf16>
    %c0_82 = arith.constant 0 : index
    %c0_83 = arith.constant 0 : index
    %258 = vector.load %arg11[%c0_82, %c0_83] : memref<256x64xbf16, #tpu.memory_space<vmem>>, vector<256x64xbf16>
    %cst_84 = arith.constant dense<0.000000e+00> : vector<8x64xf32>
    %259 = tpu.matmul %257, %258, %cst_84 {dimension_numbers = #tpu.dot_dimension_numbers<[1], [0], [0], [1], [0, 0, 1, 1], [], []>} : vector<8x256xbf16>, vector<256x64xbf16>, vector<8x64xf32> -> vector<8x64xf32>
    %c0_85 = arith.constant 0 : index
    %c0_86 = arith.constant 0 : index
    %260 = vector.load %arg12[%c0_85, %c0_86] : memref<1x64xf32, #tpu.memory_space<vmem>>, vector<1x64xf32>
    %261 = vector.broadcast %260 : vector<1x64xf32> to vector<8x64xf32>
    %262 = arith.addf %259, %261 : vector<8x64xf32>
    %263 = arith.addf %210, %262 : vector<8x64xf32>
    %c0_87 = arith.constant 0 : index
    %c0_88 = arith.constant 0 : index
    %264 = vector.load %arg13[%c0_87, %c0_88] : memref<1x64xf32, #tpu.memory_space<vmem>>, vector<1x64xf32>
    %c0_89 = arith.constant 0 : index
    %c0_90 = arith.constant 0 : index
    %265 = vector.load %arg14[%c0_89, %c0_90] : memref<1x64xf32, #tpu.memory_space<vmem>>, vector<1x64xf32>
    %cst_91 = arith.constant dense<0.000000e+00> : vector<8xf32>
    %266 = vector.multi_reduction <add>, %263, %cst_91 [1] : vector<8x64xf32> to vector<8xf32>
    %267 = vector.shape_cast %266 : vector<8xf32> to vector<8x1xf32>
    %cst_92 = arith.constant 6.400000e+01 : f32
    %268 = vector.broadcast %cst_92 : f32 to vector<8x1xf32>
    %269 = arith.divf %267, %268 : vector<8x1xf32>
    %270 = vector.broadcast %269 : vector<8x1xf32> to vector<8x64xf32>
    %271 = arith.subf %263, %270 : vector<8x64xf32>
    %272 = arith.mulf %271, %271 : vector<8x64xf32>
    %cst_93 = arith.constant dense<0.000000e+00> : vector<8xf32>
    %273 = vector.multi_reduction <add>, %272, %cst_93 [1] : vector<8x64xf32> to vector<8xf32>
    %274 = vector.shape_cast %273 : vector<8xf32> to vector<8x1xf32>
    %cst_94 = arith.constant 6.400000e+01 : f32
    %275 = vector.broadcast %cst_94 : f32 to vector<8x1xf32>
    %276 = arith.divf %274, %275 : vector<8x1xf32>
    %cst_95 = arith.constant 9.99999974E-6 : f32
    %277 = vector.broadcast %cst_95 : f32 to vector<8x1xf32>
    %278 = arith.addf %276, %277 : vector<8x1xf32>
    %279 = math.rsqrt %278 : vector<8x1xf32>
    %280 = vector.broadcast %279 : vector<8x1xf32> to vector<8x64xf32>
    %281 = arith.mulf %271, %280 : vector<8x64xf32>
    %282 = vector.broadcast %264 : vector<1x64xf32> to vector<8x64xf32>
    %283 = arith.mulf %281, %282 : vector<8x64xf32>
    %284 = vector.broadcast %265 : vector<1x64xf32> to vector<8x64xf32>
    %285 = arith.addf %283, %284 : vector<8x64xf32>
    %c0_96 = arith.constant 0 : index
    %c0_97 = arith.constant 0 : index
    %286 = vector.load %arg15[%c0_96, %c0_97] : memref<8x64xf32, #tpu.memory_space<vmem>>, vector<8x64xf32>
    tpu.vector_store %arg15[%c0_96, %c0_97], %285 {strides = array<i32>} : memref<8x64xf32, #tpu.memory_space<vmem>>, vector<8x64xf32>,
    return
  }
  func.func @transform_0(%arg0: i32) -> (i32, i32) {
    %c0_i32 = arith.constant 0 : i32
    %c0_i32_0 = arith.constant 0 : i32
    return %arg0, %c0_i32 : i32, i32
  }
  func.func @transform_1(%arg0: i32) -> (i32, i32) {
    %c0_i32 = arith.constant 0 : i32
    %c0_i32_0 = arith.constant 0 : i32
    %c0_i32_1 = arith.constant 0 : i32
    return %c0_i32, %c0_i32_0 : i32, i32
  }
  func.func @transform_2(%arg0: i32) -> (i32, i32) {
    %c0_i32 = arith.constant 0 : i32
    %c0_i32_0 = arith.constant 0 : i32
    %c0_i32_1 = arith.constant 0 : i32
    return %c0_i32, %c0_i32_0 : i32, i32
  }
  func.func @transform_3(%arg0: i32) -> (i32, i32) {
    %c0_i32 = arith.constant 0 : i32
    %c0_i32_0 = arith.constant 0 : i32
    %c0_i32_1 = arith.constant 0 : i32
    return %c0_i32, %c0_i32_0 : i32, i32
  }
  func.func @transform_4(%arg0: i32) -> (i32, i32) {
    %c0_i32 = arith.constant 0 : i32
    %c0_i32_0 = arith.constant 0 : i32
    %c0_i32_1 = arith.constant 0 : i32
    return %c0_i32, %c0_i32_0 : i32, i32
  }
  func.func @transform_5(%arg0: i32) -> (i32, i32) {
    %c0_i32 = arith.constant 0 : i32
    %c0_i32_0 = arith.constant 0 : i32
    %c0_i32_1 = arith.constant 0 : i32
    return %c0_i32, %c0_i32_0 : i32, i32
  }
  func.func @transform_6(%arg0: i32) -> (i32, i32) {
    %c0_i32 = arith.constant 0 : i32
    %c0_i32_0 = arith.constant 0 : i32
    %c0_i32_1 = arith.constant 0 : i32
    return %c0_i32, %c0_i32_0 : i32, i32
  }
  func.func @transform_7(%arg0: i32) -> (i32, i32) {
    %c0_i32 = arith.constant 0 : i32
    %c0_i32_0 = arith.constant 0 : i32
    %c0_i32_1 = arith.constant 0 : i32
    return %c0_i32, %c0_i32_0 : i32, i32
  }
  func.func @transform_8(%arg0: i32) -> (i32, i32) {
    %c0_i32 = arith.constant 0 : i32
    %c0_i32_0 = arith.constant 0 : i32
    %c0_i32_1 = arith.constant 0 : i32
    return %c0_i32, %c0_i32_0 : i32, i32
  }
  func.func @transform_9(%arg0: i32) -> (i32, i32) {
    %c0_i32 = arith.constant 0 : i32
    %c0_i32_0 = arith.constant 0 : i32
    %c0_i32_1 = arith.constant 0 : i32
    return %c0_i32, %c0_i32_0 : i32, i32
  }
  func.func @transform_10(%arg0: i32) -> (i32, i32) {
    %c0_i32 = arith.constant 0 : i32
    %c0_i32_0 = arith.constant 0 : i32
    %c0_i32_1 = arith.constant 0 : i32
    return %c0_i32, %c0_i32_0 : i32, i32
  }
  func.func @transform_11(%arg0: i32) -> (i32, i32) {
    %c0_i32 = arith.constant 0 : i32
    %c0_i32_0 = arith.constant 0 : i32
    %c0_i32_1 = arith.constant 0 : i32
    return %c0_i32, %c0_i32_0 : i32, i32
  }
  func.func @transform_12(%arg0: i32) -> (i32, i32) {
    %c0_i32 = arith.constant 0 : i32
    %c0_i32_0 = arith.constant 0 : i32
    %c0_i32_1 = arith.constant 0 : i32
    return %c0_i32, %c0_i32_0 : i32, i32
  }
  func.func @transform_13(%arg0: i32) -> (i32, i32) {
    %c0_i32 = arith.constant 0 : i32
    %c0_i32_0 = arith.constant 0 : i32
    %c0_i32_1 = arith.constant 0 : i32
    return %c0_i32, %c0_i32_0 : i32, i32
  }
  func.func @transform_14(%arg0: i32) -> (i32, i32) {
    %c0_i32 = arith.constant 0 : i32
    %c0_i32_0 = arith.constant 0 : i32
    return %arg0, %c0_i32 : i32, i32
  }
}

module attributes {stable_mosaic.version = 11 : i64} {
  func.func @_mean_pool_kernel(%arg0: memref<16x64xf32, #tpu.memory_space<vmem>>, %arg1: memref<2x16xf32, #tpu.memory_space<vmem>>, %arg2: memref<2x64xf32, #tpu.memory_space<vmem>>) attributes {dimension_semantics = [], scalar_prefetch = 0 : i64, scratch_operands = 0 : i64, tpu.core_type = #tpu.core_type<tc>} {
    %c0 = arith.constant 0 : index
    %c0_0 = arith.constant 0 : index
    %0 = vector.load %arg1[%c0, %c0_0] : memref<2x16xf32, #tpu.memory_space<vmem>>, vector<2x16xf32>
    %c0_1 = arith.constant 0 : index
    %c0_2 = arith.constant 0 : index
    %1 = vector.load %arg0[%c0_1, %c0_2] : memref<16x64xf32, #tpu.memory_space<vmem>>, vector<16x64xf32>
    %cst = arith.constant dense<0.000000e+00> : vector<2x64xf32>
    %2 = tpu.matmul %0, %1, %cst {dimension_numbers = #tpu.dot_dimension_numbers<[1], [0], [0], [1], [0, 0, 1, 1], [], []>} : vector<2x16xf32>, vector<16x64xf32>, vector<2x64xf32> -> vector<2x64xf32>
    %c0_3 = arith.constant 0 : index
    %c0_4 = arith.constant 0 : index
    %3 = vector.load %arg2[%c0_3, %c0_4] : memref<2x64xf32, #tpu.memory_space<vmem>>, vector<2x64xf32>
    tpu.vector_store %arg2[%c0_3, %c0_4], %2 {strides = array<i32>} : memref<2x64xf32, #tpu.memory_space<vmem>>, vector<2x64xf32>,
    return
  }
}

</mosaic_0001>

<llo_original>
// kernel: sensor_transformer_forward.5
$region0: #{sensor_transformer_forward.5}
  #allocation0 [shape = 'u32[]', space=smem, size = 0x4, offset = 0x4, fixed_abs, tag = 'smem constant byte address 0x4 - core index']
  #allocation1 [shape = 'u32[144,128]{1,0:T(1,128)}', space=vmem, size = 0x12000, scoped, tag = 'internal scratch']
  %s0 = inlined_call_operand.vmem [shape: f32[32,5], index: 0, kind: input, shape index: {}]
  %s1 = inlined_call_operand.vmem [shape: f32[32,5], index: 1, kind: input, shape index: {}]
  %s2 = inlined_call_operand.vmem [shape: bf16[5,32], index: 2, kind: input, shape index: {}]
  %s3 = inlined_call_operand.vmem [shape: f32[1,32], index: 3, kind: input, shape index: {}]
  %s4 = inlined_call_operand.vmem [shape: f32[32,32], index: 4, kind: output, shape index: {}]
  %s5 = sld [smem:[#allocation0]]
  $region49: #{sensor_transformer_forward.5} parent=0
    _
  %s7 = ssub.s32 1, %s5
  %s8 = scalar_select 0, %s7, %s5
  loop: start=0, step=1, limit=4
  $region2: #{sensor_transformer_forward.5} parent=0 // loop_pre_header
    _
  $region3: #{sensor_transformer_forward.5} parent=0 // loop_header
    %s10 = sphi 0, %s14
    %p11 = scmp.ge.s32.totalorder %s10, 4
    %s20 = sphi 0, %s22
    %s23 = sphi 0, %s20
    %s24 = sphi 0, %s23
    %s40 = sphi 0, %s24
    %s46 = sphi 0, %s48
    %s49 = sphi 0, %s46
    %s50 = sphi 0, %s49
    %s66 = sphi 0, %s50
    %s70 = sphi 0, %s70
    %s72 = sphi 0, %s70
    %s73 = sphi 0, %s72
    %s87 = sphi 0, %s73
    %s91 = sphi 0, %s91
    %s93 = sphi 0, %s91
    %s94 = sphi 0, %s93
    %s108 = sphi 0, %s94
    %s114 = sphi 0, %s116
    %s117 = sphi 0, %s114
    %s118 = sphi 0, %s117
    %s134 = sphi 0, %s118
  $region4: #{sensor_transformer_forward.5} parent=0 // loop_header_branch
    %13 = sbr.rel (%p11) target = $region8
  $region5: #{sensor_transformer_forward.5} parent=0 // loop_body
    %s15 = ssub.s32 %s10, 1
    %s16 = ssub.s32 %s10, 2
    %s17 = sadd.s32 %s10, 1
    %s18 = ssub.s32 %s10, %s17
    %p19 = scmp.eq.s32.totalorder %s18, 0
    %s21 = sadd.s32 %s20, 1
    %s22 = scalar_select %p19, %s20, %s21
    %p25 = pneg %p19
    %p26 = scmp.eq.s32.totalorder %s10, 1
    %p27 = por %p25, %p26
    %p28 = scmp.ne.s32.totalorder %s20, %s23
    %p29 = scmp.eq.s32.totalorder %s10, 0
    %p30 = por %p28, %p29
    %p31 = scmp.ne.s32.totalorder %s20, %s23
    %p32 = scmp.eq.s32.totalorder %s15, 1
    %p33 = por %p31, %p32
    %p34 = scmp.ne.s32.totalorder %s23, %s24
    %p35 = scmp.eq.s32.totalorder %s15, 0
    %p36 = por %p34, %p35
    %p37 = scmp.ne.s32.totalorder %s23, %s24
    %p38 = scmp.eq.s32.totalorder %s16, 1
    %p39 = por %p37, %p38
    %p41 = scmp.ne.s32.totalorder %s24, %s40
    %p42 = scmp.eq.s32.totalorder %s16, 0
    %p43 = por %p41, %p42
    %s44 = ssub.s32 %s10, %s17
    %p45 = scmp.eq.s32.totalorder %s44, 0
    %s47 = sadd.s32 %s46, 1
    %s48 = scalar_select %p45, %s46, %s47
    %p51 = pneg %p45
    %p52 = scmp.eq.s32.totalorder %s10, 1
    %p53 = por %p51, %p52
    %p54 = scmp.ne.s32.totalorder %s46, %s49
    %p55 = scmp.eq.s32.totalorder %s10, 0
    %p56 = por %p54, %p55
    %p57 = scmp.ne.s32.totalorder %s46, %s49
    %p58 = scmp.eq.s32.totalorder %s15, 1
    %p59 = por %p57, %p58
    %p60 = scmp.ne.s32.totalorder %s49, %s50
    %p61 = scmp.eq.s32.totalorder %s15, 0
    %p62 = por %p60, %p61
    %p63 = scmp.ne.s32.totalorder %s49, %s50
    %p64 = scmp.eq.s32.totalorder %s16, 1
    %p65 = por %p63, %p64
    %p67 = scmp.ne.s32.totalorder %s50, %s66
    %p68 = scmp.eq.s32.totalorder %s16, 0
    %p69 = por %p67, %p68
    %s71 = sadd.s32 %s70, 1
    %p74 = scmp.eq.s32.totalorder %s10, 1
    %p75 = scmp.ne.s32.totalorder %s70, %s72
    %p76 = scmp.eq.s32.totalorder %s10, 0
    %p77 = por %p75, %p76
    %p78 = scmp.ne.s32.totalorder %s70, %s72
    %p79 = scmp.eq.s32.totalorder %s15, 1
    %p80 = por %p78, %p79
    %p81 = scmp.ne.s32.totalorder %s72, %s73
    %p82 = scmp.eq.s32.totalorder %s15, 0
    %p83 = por %p81, %p82
    %p84 = scmp.ne.s32.totalorder %s72, %s73
    %p85 = scmp.eq.s32.totalorder %s16, 1
    %p86 = por %p84, %p85
    %p88 = scmp.ne.s32.totalorder %s73, %s87
    %p89 = scmp.eq.s32.totalorder %s16, 0
    %p90 = por %p88, %p89
    %s92 = sadd.s32 %s91, 1
    %p95 = scmp.eq.s32.totalorder %s10, 1
    %p96 = scmp.ne.s32.totalorder %s91, %s93
    %p97 = scmp.eq.s32.totalorder %s10, 0
    %p98 = por %p96, %p97
    %p99 = scmp.ne.s32.totalorder %s91, %s93
    %p100 = scmp.eq.s32.totalorder %s15, 1
    %p101 = por %p99, %p100
    %p102 = scmp.ne.s32.totalorder %s93, %s94
    %p103 = scmp.eq.s32.totalorder %s15, 0
    %p104 = por %p102, %p103
    %p105 = scmp.ne.s32.totalorder %s93, %s94
    %p106 = scmp.eq.s32.totalorder %s16, 1
    %p107 = por %p105, %p106
    %p109 = scmp.ne.s32.totalorder %s94, %s108
    %p110 = scmp.eq.s32.totalorder %s16, 0
    %p111 = por %p109, %p110
    %s112 = ssub.s32 %s10, %s17
    %p113 = scmp.eq.s32.totalorder %s112, 0
    %s115 = sadd.s32 %s114, 1
    %s116 = scalar_select %p113, %s114, %s115
    %p119 = pneg %p113
    %p120 = scmp.eq.s32.totalorder %s10, 1
    %p121 = por %p119, %p120
    %p122 = scmp.ne.s32.totalorder %s114, %s117
    %p123 = scmp.eq.s32.totalorder %s10, 0
    %p124 = por %p122, %p123
    %p125 = scmp.ne.s32.totalorder %s114, %s117
    %p126 = scmp.eq.s32.totalorder %s15, 1
    %p127 = por %p125, %p126
    %p128 = scmp.ne.s32.totalorder %s117, %s118
    %p129 = scmp.eq.s32.totalorder %s15, 0
    %p130 = por %p128, %p129
    %p131 = scmp.ne.s32.totalorder %s117, %s118
    %p132 = scmp.eq.s32.totalorder %s16, 1
    %p133 = por %p131, %p132
    %p135 = scmp.ne.s32.totalorder %s118, %s134
    %p136 = scmp.eq.s32.totalorder %s16, 0
    %p137 = por %p135, %p136
    %p138 = scmp.le.s32.totalorder 1, %s10
    %p139 = scmp.lt.s32.totalorder %s10, 3
    %p140 = pnand %p138, %p139
    %p141 = pneg %p140
    // Predicated region
    $region9: #{sensor_transformer_forward.5} parent=5 // pred_check
      _
    $region10: #{sensor_transformer_forward.5} parent=5 // pred_check_branch
      %143 = sbr.rel (%p140) target = $region12
    $region11: #{sensor_transformer_forward.5} parent=5 // pred_region
      %s144 = ssub.s32 %s10, 1
      // Predicated region
      $region13: #{sensor_transformer_forward.5} parent=11 // pred_check
        %p145 = pneg %p83
      $region14: #{sensor_transformer_forward.5} parent=11 // pred_check_branch
        %147 = sbr.rel (%p145) target = $region16
      $region15: #{sensor_transformer_forward.5} parent=11 // pred_region
        _
      $region16: #{sensor_transformer_forward.5} parent=11 // pred_fallthru
        _
      // Predicated region
      $region17: #{sensor_transformer_forward.5} parent=11 // pred_check
        %p148 = pneg %p104
      $region18: #{sensor_transformer_forward.5} parent=11 // pred_check_branch
        %150 = sbr.rel (%p148) target = $region20
      $region19: #{sensor_transformer_forward.5} parent=11 // pred_region
        _
      $region20: #{sensor_transformer_forward.5} parent=11 // pred_fallthru
        _
    $region12: #{sensor_transformer_forward.5} parent=5 // pred_fallthru
      _
    %p151 = scmp.lt.s32.totalorder %s10, 2
    // Predicated region
    $region21: #{sensor_transformer_forward.5} parent=5 // pred_check
      %p152 = pneg %p151
    $region22: #{sensor_transformer_forward.5} parent=5 // pred_check_branch
      %154 = sbr.rel (%p152) target = $region24
    $region23: #{sensor_transformer_forward.5} parent=5 // pred_region
      // Predicated region
      $region25: #{sensor_transformer_forward.5} parent=23 // pred_check
        %p155 = pneg %p30
      $region26: #{sensor_transformer_forward.5} parent=23 // pred_check_branch
        %157 = sbr.rel (%p155) target = $region28
      $region27: #{sensor_transformer_forward.5} parent=23 // pred_region
        %s158 = smul.u32 2, %s10
        %p159 = scmp.lt.s32.totalorder %s158, 3
        %s160 = scalar_select %p159, %s158, 3
        %s161 = smul.addr %s160, 8
        %s162 = scalar_lea.vmem %s0, %s161
        %s163 = smul.u32 2, %s10
      $region28: #{sensor_transformer_forward.5} parent=23 // pred_fallthru
        _
      // Predicated region
      $region29: #{sensor_transformer_forward.5} parent=23 // pred_check
        %p164 = pneg %p56
      $region30: #{sensor_transformer_forward.5} parent=23 // pred_check_branch
        %166 = sbr.rel (%p164) target = $region32
      $region31: #{sensor_transformer_forward.5} parent=23 // pred_region
        %s167 = smul.u32 2, %s10
        %p168 = scmp.lt.s32.totalorder %s167, 3
        %s169 = scalar_select %p168, %s167, 3
        %s170 = smul.addr %s169, 8
        %s171 = scalar_lea.vmem %s1, %s170
        %s172 = smul.u32 2, %s10
      $region32: #{sensor_transformer_forward.5} parent=23 // pred_fallthru
        _
    $region24: #{sensor_transformer_forward.5} parent=5 // pred_fallthru
      _
    %p173 = scmp.le.s32.totalorder 1, %s10
    %p174 = scmp.lt.s32.totalorder %s10, 3
    %p175 = pnand %p173, %p174
    %p176 = pneg %p175
    // Predicated region
    $region33: #{sensor_transformer_forward.5} parent=5 // pred_check
      _
    $region34: #{sensor_transformer_forward.5} parent=5 // pred_check_branch
      %178 = sbr.rel (%p175) target = $region36
    $region35: #{sensor_transformer_forward.5} parent=5 // pred_region
      %s179 = ssub.s32 %s10, 1
      %s180 = smul.u32 2, %s15
      %p181 = scmp.lt.s32.totalorder %s180, 3
      %s182 = scalar_select %p181, %s180, 3
      %s183 = smul.addr %s182, 8
      %s184 = scalar_lea.vmem %s0, %s183
      %p185 = pneg %p36
      %p186 = pneg %p33
      %s187 = smul.u32 2, %s15
      %p188 = scmp.lt.s32.totalorder %s187, 3
      %s189 = scalar_select %p188, %s187, 3
      %s190 = smul.addr %s189, 8
      %s191 = scalar_lea.vmem %s1, %s190
      %p192 = pneg %p62
      %p193 = pneg %p59
      %p194 = pneg %p83
      %p195 = pneg %p80
      %p196 = pneg %p104
      %p197 = pneg %p101
      %p198 = pneg %p130
      %p199 = pneg %p127
      %s200 = smul.u32 2, %s15
      %p201 = scmp.lt.s32.totalorder %s200, 3
      %s202 = scalar_select %p201, %s200, 3
      %s203 = smul.addr %s202, 8
      %s204 = scalar_lea.vmem %s4, %s203
      %s205 = smul.u32 2, %s15
      %p206 = scmp.lt.s32.totalorder %s205, 3
      %s207 = scalar_select %p206, %s205, 3
      %s208 = smul.addr %s207, 8
      %s209 = scalar_lea.vmem %s0, %s208
      %s210 = smul.u32 2, %s15
      %s211 = smul.u32 2, %s15
      %p212 = scmp.lt.s32.totalorder %s211, 3
      %s213 = scalar_select %p212, %s211, 3
      %s214 = smul.addr %s213, 8
      %s215 = scalar_lea.vmem %s1, %s214
      %s216 = smul.u32 2, %s15
      %s217 = smul.u32 2, %s15
      %p218 = scmp.lt.s32.totalorder %s217, 3
      %s219 = scalar_select %p218, %s217, 3
      %s220 = smul.addr %s219, 8
      %s221 = scalar_lea.vmem %s4, %s220
      %s222 = smul.u32 2, %s15
      %v224 = vld [vmem:[%s2] sm:$0x7]
      %v225 = vld [vmem:[%s3] sm:$0x1]
      %v226 = vld [vmem:[%s209] sm:$0xff]
      %v227 = vld [vmem:[%s209 + $0x8] sm:$0xff]
      %v228 = vpack.c.bf16 %v227, %v226
      %v230 = vlaneseq
      %v231 = vshrl.u32 %v230, 7
      %v232 = vsub.s32 0, %v231
      %v233 = vrot.slane %v225, %v232
      %vm235 = vcmask 39936
      %v237 = vsel %vm235, %v228, 0
      %vm239 = vcmask 1041408
      %vm240 = vcmask 1042432
      %v241 = vsel %vm239, 4294967295, 65535
      %v242 = vsel %vm240, %v241, 0
      %v244 = vand.u32 %v224, %v242
      %246 = vmatprep.subr.bf16.mxu0 0
      %247 = vmatpush1.bf16.msra.mxu0 %v244
      %248 = vmatprep.subr.bf16.mxu0 0
      %249 = vmatpush1.bf16.msra.mxu0 0
      %250 = vmatprep.subr.bf16.mxu0 0
      %251 = vmatpush1.bf16.msra.mxu0 0
      %252 = vmatprep.subr.bf16.mxu0 0
      %253 = vmatpush1.bf16.msra.mxu0 0
      %254 = vmatprep.subr.bf16.mxu0 0
      %255 = vmatpush1.bf16.msra.mxu0 0
      %256 = vmatprep.subr.bf16.mxu0 0
      %257 = vmatpush1.bf16.msra.mxu0 0
      %258 = vmatprep.subr.bf16.mxu0 0
      %259 = vmatpush1.bf16.msra.mxu0 0
      %260 = vmatprep.subr.bf16.mxu0 0
      %261 = vmatpush1.bf16.msra.mxu0 0
      %262 = vmatprep.subr.bf16.mxu0 0
      %263 = vmatpush1.bf16.msra.mxu0 0
      %264 = vmatprep.subr.bf16.mxu0 0
      %265 = vmatpush1.bf16.msra.mxu0 0
      %266 = vmatprep.subr.bf16.mxu0 0
      %267 = vmatpush1.bf16.msra.mxu0 0
      %268 = vmatprep.subr.bf16.mxu0 0
      %269 = vmatpush1.bf16.msra.mxu0 0
      %270 = vmatprep.subr.bf16.mxu0 0
      %271 = vmatpush1.bf16.msra.mxu0 0
      %272 = vmatprep.subr.bf16.mxu0 0
      %273 = vmatpush1.bf16.msra.mxu0 0
      %274 = vmatprep.subr.bf16.mxu0 0
      %275 = vmatpush1.bf16.msra.mxu0 0
      %276 = vmatprep.subr.bf16.mxu0 0
      %277 = vmatpush1.bf16.msra.mxu0 0
      %278 = vmatprep.mubr.bf16.mxu0 0
      %279 = vmatmul.mubr.bf16.gmra.mrb[0].mxu0 %v237
      %v280 = vpop.f32.mrb[0].mxu0
      %v281 = vadd.f32 %v233, %v280
      %v282 = vpop.f32.mrb[0].mxu0
      %v283 = vpop.f32.mrb[0].mxu0
      %v284 = vadd.f32 %v233, %v283
      %v285 = vpop.f32.mrb[0].mxu0
      %286 = vdwg.mxu0
      %v287 = vld [vmem:[%s215] sm:$0xff]
      %v288 = vld [vmem:[%s215 + $0x8] sm:$0xff]
      %v289 = vpack.c.bf16 %v288, %v287
      %v291 = vsel %vm235, %v289, 0
      %293 = vmatprep.subr.bf16.mxu0 0
      %294 = vmatpush1.bf16.msra.mxu0 %v244
      %295 = vmatprep.subr.bf16.mxu0 0
      %296 = vmatpush1.bf16.msra.mxu0 0
      %297 = vmatprep.subr.bf16.mxu0 0
      %298 = vmatpush1.bf16.msra.mxu0 0
      %299 = vmatprep.subr.bf16.mxu0 0
      %300 = vmatpush1.bf16.msra.mxu0 0
      %301 = vmatprep.subr.bf16.mxu0 0
      %302 = vmatpush1.bf16.msra.mxu0 0
      %303 = vmatprep.subr.bf16.mxu0 0
      %304 = vmatpush1.bf16.msra.mxu0 0
      %305 = vmatprep.subr.bf16.mxu0 0
      %306 = vmatpush1.bf16.msra.mxu0 0
      %307 = vmatprep.subr.bf16.mxu0 0
      %308 = vmatpush1.bf16.msra.mxu0 0
      %309 = vmatprep.subr.bf16.mxu0 0
      %310 = vmatpush1.bf16.msra.mxu0 0
      %311 = vmatprep.subr.bf16.mxu0 0
      %312 = vmatpush1.bf16.msra.mxu0 0
      %313 = vmatprep.subr.bf16.mxu0 0
      %314 = vmatpush1.bf16.msra.mxu0 0
      %315 = vmatprep.subr.bf16.mxu0 0
      %316 = vmatpush1.bf16.msra.mxu0 0
      %317 = vmatprep.subr.bf16.mxu0 0
      %318 = vmatpush1.bf16.msra.mxu0 0
      %319 = vmatprep.subr.bf16.mxu0 0
      %320 = vmatpush1.bf16.msra.mxu0 0
      %321 = vmatprep.subr.bf16.mxu0 0
      %322 = vmatpush1.bf16.msra.mxu0 0
      %323 = vmatprep.subr.bf16.mxu0 0
      %324 = vmatpush1.bf16.msra.mxu0 0
      %325 = vmatprep.mubr.bf16.mxu0 0
      %326 = vmatmul.mubr.bf16.gmra.mrb[0].mxu0 %v291
      %v327 = vpop.f32.mrb[0].mxu0
      %v328 = vadd.f32 %v233, %v327
      %v329 = vpop.f32.mrb[0].mxu0
      %v330 = vpop.f32.mrb[0].mxu0
      %v331 = vadd.f32 %v233, %v330
      %v332 = vpop.f32.mrb[0].mxu0
      %333 = vdwg.mxu0
      %v334 = vmax.f32 %v281, %v328
      %v335 = vmax.f32 %v284, %v331
      %v336 = vmax.f32 %v334, 0.0
      %v337 = vmax.f32 %v335, 0.0
      %vm338 = vcmask 261120
      %339 = vst.msk [vmem:[%s221] sm:$0xff] %vm338, %v336
      %340 = vst.msk [vmem:[%s221 + $0x8] sm:$0xff] %vm338, %v337
      %s341 = smul.u32 2, %s15
      %p342 = scmp.lt.s32.totalorder %s341, 3
      %s343 = scalar_select %p342, %s341, 3
      %s344 = smul.addr %s343, 8
      %s345 = scalar_lea.vmem %s4, %s344
      // Predicated region
      $region37: #{sensor_transformer_forward.5} parent=35 // pred_check
        %p346 = pneg %p127
      $region38: #{sensor_transformer_forward.5} parent=35 // pred_check_branch
        %348 = sbr.rel (%p346) target = $region40
      $region39: #{sensor_transformer_forward.5} parent=35 // pred_region
        %s349 = smul.u32 2, %s15
      $region40: #{sensor_transformer_forward.5} parent=35 // pred_fallthru
        _
    $region36: #{sensor_transformer_forward.5} parent=5 // pred_fallthru
      _
    %p350 = scmp.le.s32.totalorder 2, %s10
    // Predicated region
    $region41: #{sensor_transformer_forward.5} parent=5 // pred_check
      %p351 = pneg %p350
    $region42: #{sensor_transformer_forward.5} parent=5 // pred_check_branch
      %353 = sbr.rel (%p351) target = $region44
    $region43: #{sensor_transformer_forward.5} parent=5 // pred_region
      %s354 = ssub.s32 %s10, 2
      // Predicated region
      $region45: #{sensor_transformer_forward.5} parent=43 // pred_check
        %p355 = pneg %p133
      $region46: #{sensor_transformer_forward.5} parent=43 // pred_check_branch
        %357 = sbr.rel (%p355) target = $region48
      $region47: #{sensor_transformer_forward.5} parent=43 // pred_region
        %s358 = smul.u32 2, %s16
        %p359 = scmp.lt.s32.totalorder %s358, 3
        %s360 = scalar_select %p359, %s358, 3
        %s361 = smul.addr %s360, 8
        %s362 = scalar_lea.vmem %s4, %s361
      $region48: #{sensor_transformer_forward.5} parent=43 // pred_fallthru
        _
    $region44: #{sensor_transformer_forward.5} parent=5 // pred_fallthru
      _
  $region6: #{sensor_transformer_forward.5} parent=0 // loop_footer
    %s14 = sadd.s32 1, %s10
  $region7: #{sensor_transformer_forward.5} parent=0 // loop_footer_branch
    %9 = sbr.rel target = $region3
  $region8: #{sensor_transformer_forward.5} parent=0 // loop_exit
    _

// kernel: sensor_transformer_forward.6
$region0: #{sensor_transformer_forward.6}
  #allocation0 [shape = 'u32[]', space=smem, size = 0x4, offset = 0x4, fixed_abs, tag = 'smem constant byte address 0x4 - core index']
  #allocation1 [shape = 'u32[144,128]{1,0:T(1,128)}', space=vmem, size = 0x12000, scoped, tag = 'internal scratch']
  %s0 = inlined_call_operand.vmem [shape: f32[16,96], index: 0, kind: input, shape index: {}]
  %s1 = inlined_call_operand.vmem [shape: f32[16,96], index: 1, kind: input, shape index: {}]
  %s2 = inlined_call_operand.vmem [shape: bf16[96,64], index: 2, kind: input, shape index: {}]
  %s3 = inlined_call_operand.vmem [shape: f32[1,64], index: 3, kind: input, shape index: {}]
  %s4 = inlined_call_operand.vmem [shape: f32[16,64], index: 4, kind: output, shape index: {}]
  %s5 = sld [smem:[#allocation0]]
  $region49: #{sensor_transformer_forward.6} parent=0
    _
  %s7 = ssub.s32 1, %s5
  %s8 = scalar_select 0, %s7, %s5
  loop: start=0, step=1, limit=4
  $region2: #{sensor_transformer_forward.6} parent=0 // loop_pre_header
    _
  $region3: #{sensor_transformer_forward.6} parent=0 // loop_header
    %s10 = sphi 0, %s14
    %p11 = scmp.ge.s32.totalorder %s10, 4
    %s20 = sphi 0, %s22
    %s23 = sphi 0, %s20
    %s24 = sphi 0, %s23
    %s40 = sphi 0, %s24
    %s46 = sphi 0, %s48
    %s49 = sphi 0, %s46
    %s50 = sphi 0, %s49
    %s66 = sphi 0, %s50
    %s70 = sphi 0, %s70
    %s72 = sphi 0, %s70
    %s73 = sphi 0, %s72
    %s87 = sphi 0, %s73
    %s91 = sphi 0, %s91
    %s93 = sphi 0, %s91
    %s94 = sphi 0, %s93
    %s108 = sphi 0, %s94
    %s114 = sphi 0, %s116
    %s117 = sphi 0, %s114
    %s118 = sphi 0, %s117
    %s134 = sphi 0, %s118
  $region4: #{sensor_transformer_forward.6} parent=0 // loop_header_branch
    %13 = sbr.rel (%p11) target = $region8
  $region5: #{sensor_transformer_forward.6} parent=0 // loop_body
    %s15 = ssub.s32 %s10, 1
    %s16 = ssub.s32 %s10, 2
    %s17 = sadd.s32 %s10, 1
    %s18 = ssub.s32 %s10, %s17
    %p19 = scmp.eq.s32.totalorder %s18, 0
    %s21 = sadd.s32 %s20, 1
    %s22 = scalar_select %p19, %s20, %s21
    %p25 = pneg %p19
    %p26 = scmp.eq.s32.totalorder %s10, 1
    %p27 = por %p25, %p26
    %p28 = scmp.ne.s32.totalorder %s20, %s23
    %p29 = scmp.eq.s32.totalorder %s10, 0
    %p30 = por %p28, %p29
    %p31 = scmp.ne.s32.totalorder %s20, %s23
    %p32 = scmp.eq.s32.totalorder %s15, 1
    %p33 = por %p31, %p32
    %p34 = scmp.ne.s32.totalorder %s23, %s24
    %p35 = scmp.eq.s32.totalorder %s15, 0
    %p36 = por %p34, %p35
    %p37 = scmp.ne.s32.totalorder %s23, %s24
    %p38 = scmp.eq.s32.totalorder %s16, 1
    %p39 = por %p37, %p38
    %p41 = scmp.ne.s32.totalorder %s24, %s40
    %p42 = scmp.eq.s32.totalorder %s16, 0
    %p43 = por %p41, %p42
    %s44 = ssub.s32 %s10, %s17
    %p45 = scmp.eq.s32.totalorder %s44, 0
    %s47 = sadd.s32 %s46, 1
    %s48 = scalar_select %p45, %s46, %s47
    %p51 = pneg %p45
    %p52 = scmp.eq.s32.totalorder %s10, 1
    %p53 = por %p51, %p52
    %p54 = scmp.ne.s32.totalorder %s46, %s49
    %p55 = scmp.eq.s32.totalorder %s10, 0
    %p56 = por %p54, %p55
    %p57 = scmp.ne.s32.totalorder %s46, %s49
    %p58 = scmp.eq.s32.totalorder %s15, 1
    %p59 = por %p57, %p58
    %p60 = scmp.ne.s32.totalorder %s49, %s50
    %p61 = scmp.eq.s32.totalorder %s15, 0
    %p62 = por %p60, %p61
    %p63 = scmp.ne.s32.totalorder %s49, %s50
    %p64 = scmp.eq.s32.totalorder %s16, 1
    %p65 = por %p63, %p64
    %p67 = scmp.ne.s32.totalorder %s50, %s66
    %p68 = scmp.eq.s32.totalorder %s16, 0
    %p69 = por %p67, %p68
    %s71 = sadd.s32 %s70, 1
    %p74 = scmp.eq.s32.totalorder %s10, 1
    %p75 = scmp.ne.s32.totalorder %s70, %s72
    %p76 = scmp.eq.s32.totalorder %s10, 0
    %p77 = por %p75, %p76
    %p78 = scmp.ne.s32.totalorder %s70, %s72
    %p79 = scmp.eq.s32.totalorder %s15, 1
    %p80 = por %p78, %p79
    %p81 = scmp.ne.s32.totalorder %s72, %s73
    %p82 = scmp.eq.s32.totalorder %s15, 0
    %p83 = por %p81, %p82
    %p84 = scmp.ne.s32.totalorder %s72, %s73
    %p85 = scmp.eq.s32.totalorder %s16, 1
    %p86 = por %p84, %p85
    %p88 = scmp.ne.s32.totalorder %s73, %s87
    %p89 = scmp.eq.s32.totalorder %s16, 0
    %p90 = por %p88, %p89
    %s92 = sadd.s32 %s91, 1
    %p95 = scmp.eq.s32.totalorder %s10, 1
    %p96 = scmp.ne.s32.totalorder %s91, %s93
    %p97 = scmp.eq.s32.totalorder %s10, 0
    %p98 = por %p96, %p97
    %p99 = scmp.ne.s32.totalorder %s91, %s93
    %p100 = scmp.eq.s32.totalorder %s15, 1
    %p101 = por %p99, %p100
    %p102 = scmp.ne.s32.totalorder %s93, %s94
    %p103 = scmp.eq.s32.totalorder %s15, 0
    %p104 = por %p102, %p103
    %p105 = scmp.ne.s32.totalorder %s93, %s94
    %p106 = scmp.eq.s32.totalorder %s16, 1
    %p107 = por %p105, %p106
    %p109 = scmp.ne.s32.totalorder %s94, %s108
    %p110 = scmp.eq.s32.totalorder %s16, 0
    %p111 = por %p109, %p110
    %s112 = ssub.s32 %s10, %s17
    %p113 = scmp.eq.s32.totalorder %s112, 0
    %s115 = sadd.s32 %s114, 1
    %s116 = scalar_select %p113, %s114, %s115
    %p119 = pneg %p113
    %p120 = scmp.eq.s32.totalorder %s10, 1
    %p121 = por %p119, %p120
    %p122 = scmp.ne.s32.totalorder %s114, %s117
    %p123 = scmp.eq.s32.totalorder %s10, 0
    %p124 = por %p122, %p123
    %p125 = scmp.ne.s32.totalorder %s114, %s117
    %p126 = scmp.eq.s32.totalorder %s15, 1
    %p127 = por %p125, %p126
    %p128 = scmp.ne.s32.totalorder %s117, %s118
    %p129 = scmp.eq.s32.totalorder %s15, 0
    %p130 = por %p128, %p129
    %p131 = scmp.ne.s32.totalorder %s117, %s118
    %p132 = scmp.eq.s32.totalorder %s16, 1
    %p133 = por %p131, %p132
    %p135 = scmp.ne.s32.totalorder %s118, %s134
    %p136 = scmp.eq.s32.totalorder %s16, 0
    %p137 = por %p135, %p136
    %p138 = scmp.le.s32.totalorder 1, %s10
    %p139 = scmp.lt.s32.totalorder %s10, 3
    %p140 = pnand %p138, %p139
    %p141 = pneg %p140
    // Predicated region
    $region9: #{sensor_transformer_forward.6} parent=5 // pred_check
      _
    $region10: #{sensor_transformer_forward.6} parent=5 // pred_check_branch
      %143 = sbr.rel (%p140) target = $region12
    $region11: #{sensor_transformer_forward.6} parent=5 // pred_region
      %s144 = ssub.s32 %s10, 1
      // Predicated region
      $region13: #{sensor_transformer_forward.6} parent=11 // pred_check
        %p145 = pneg %p83
      $region14: #{sensor_transformer_forward.6} parent=11 // pred_check_branch
        %147 = sbr.rel (%p145) target = $region16
      $region15: #{sensor_transformer_forward.6} parent=11 // pred_region
        _
      $region16: #{sensor_transformer_forward.6} parent=11 // pred_fallthru
        _
      // Predicated region
      $region17: #{sensor_transformer_forward.6} parent=11 // pred_check
        %p148 = pneg %p104
      $region18: #{sensor_transformer_forward.6} parent=11 // pred_check_branch
        %150 = sbr.rel (%p148) target = $region20
      $region19: #{sensor_transformer_forward.6} parent=11 // pred_region
        _
      $region20: #{sensor_transformer_forward.6} parent=11 // pred_fallthru
        _
    $region12: #{sensor_transformer_forward.6} parent=5 // pred_fallthru
      _
    %p151 = scmp.lt.s32.totalorder %s10, 2
    // Predicated region
    $region21: #{sensor_transformer_forward.6} parent=5 // pred_check
      %p152 = pneg %p151
    $region22: #{sensor_transformer_forward.6} parent=5 // pred_check_branch
      %154 = sbr.rel (%p152) target = $region24
    $region23: #{sensor_transformer_forward.6} parent=5 // pred_region
      // Predicated region
      $region25: #{sensor_transformer_forward.6} parent=23 // pred_check
        %p155 = pneg %p30
      $region26: #{sensor_transformer_forward.6} parent=23 // pred_check_branch
        %157 = sbr.rel (%p155) target = $region28
      $region27: #{sensor_transformer_forward.6} parent=23 // pred_region
        %p158 = scmp.lt.s32.totalorder %s10, 1
        %s159 = scalar_select %p158, %s10, 1
        %s160 = smul.addr %s159, 8
        %s161 = scalar_lea.vmem %s0, %s160
      $region28: #{sensor_transformer_forward.6} parent=23 // pred_fallthru
        _
      // Predicated region
      $region29: #{sensor_transformer_forward.6} parent=23 // pred_check
        %p162 = pneg %p56
      $region30: #{sensor_transformer_forward.6} parent=23 // pred_check_branch
        %164 = sbr.rel (%p162) target = $region32
      $region31: #{sensor_transformer_forward.6} parent=23 // pred_region
        %p165 = scmp.lt.s32.totalorder %s10, 1
        %s166 = scalar_select %p165, %s10, 1
        %s167 = smul.addr %s166, 8
        %s168 = scalar_lea.vmem %s1, %s167
      $region32: #{sensor_transformer_forward.6} parent=23 // pred_fallthru
        _
    $region24: #{sensor_transformer_forward.6} parent=5 // pred_fallthru
      _
    %p169 = scmp.le.s32.totalorder 1, %s10
    %p170 = scmp.lt.s32.totalorder %s10, 3
    %p171 = pnand %p169, %p170
    %p172 = pneg %p171
    // Predicated region
    $region33: #{sensor_transformer_forward.6} parent=5 // pred_check
      _
    $region34: #{sensor_transformer_forward.6} parent=5 // pred_check_branch
      %174 = sbr.rel (%p171) target = $region36
    $region35: #{sensor_transformer_forward.6} parent=5 // pred_region
      %s175 = ssub.s32 %s10, 1
      %p176 = scmp.lt.s32.totalorder %s15, 1
      %s177 = scalar_select %p176, %s15, 1
      %s178 = smul.addr %s177, 8
      %s179 = scalar_lea.vmem %s0, %s178
      %p180 = pneg %p36
      %p181 = pneg %p33
      %p182 = scmp.lt.s32.totalorder %s15, 1
      %s183 = scalar_select %p182, %s15, 1
      %s184 = smul.addr %s183, 8
      %s185 = scalar_lea.vmem %s1, %s184
      %p186 = pneg %p62
      %p187 = pneg %p59
      %p188 = pneg %p83
      %p189 = pneg %p80
      %p190 = pneg %p104
      %p191 = pneg %p101
      %p192 = pneg %p130
      %p193 = pneg %p127
      %p194 = scmp.lt.s32.totalorder %s15, 1
      %s195 = scalar_select %p194, %s15, 1
      %s196 = smul.addr %s195, 8
      %s197 = scalar_lea.vmem %s4, %s196
      %p198 = scmp.lt.s32.totalorder %s15, 1
      %s199 = scalar_select %p198, %s15, 1
      %s200 = smul.addr %s199, 8
      %s201 = scalar_lea.vmem %s0, %s200
      %p202 = scmp.lt.s32.totalorder %s15, 1
      %s203 = scalar_select %p202, %s15, 1
      %s204 = smul.addr %s203, 8
      %s205 = scalar_lea.vmem %s1, %s204
      %p206 = scmp.lt.s32.totalorder %s15, 1
      %s207 = scalar_select %p206, %s15, 1
      %s208 = smul.addr %s207, 8
      %s209 = scalar_lea.vmem %s4, %s208
      %v211 = vld [vmem:[%s2] sm:$0xf]
      %v212 = vld [vmem:[%s2 + $0x4] sm:$0xf]
      %v213 = vld [vmem:[%s2 + $0x8] sm:$0xf]
      %v214 = vld [vmem:[%s2 + $0xc] sm:$0xf]
      %v215 = vld [vmem:[%s2 + $0x10] sm:$0xf]
      %v216 = vld [vmem:[%s2 + $0x14] sm:$0xf]
      %v217 = vld [vmem:[%s2 + $0x18] sm:$0xf]
      %v218 = vld [vmem:[%s2 + $0x1c] sm:$0xf]
      %v219 = vld [vmem:[%s2 + $0x20] sm:$0xf]
      %v220 = vld [vmem:[%s2 + $0x24] sm:$0xf]
      %v221 = vld [vmem:[%s2 + $0x28] sm:$0xf]
      %v222 = vld [vmem:[%s2 + $0x2c] sm:$0xf]
      %v223 = vld [vmem:[%s3] sm:$0x1]
      %v224 = vld [vmem:[%s201] sm:$0xff]
      %v225 = vpack.c.bf16 %v224, %v224
      %v227 = vlaneseq
      %v228 = vshrl.u32 %v227, 7
      %v229 = vsub.s32 0, %v228
      %v230 = vrot.slane %v223, %v229
      %v244 = vunpack.c.l.b16 %v211
      %v245 = vunpack.c.l.b16 %v212
      %v246 = vunpack.c.l.b16 %v213
      %v247 = vunpack.c.l.b16 %v214
      %v248 = vunpack.c.l.b16 %v215
      %v249 = vunpack.c.l.b16 %v216
      %v250 = vunpack.c.l.b16 %v217
      %v251 = vunpack.c.l.b16 %v218
      %v252 = vunpack.c.l.b16 %v219
      %v253 = vunpack.c.l.b16 %v220
      %v254 = vunpack.c.l.b16 %v221
      %v255 = vunpack.c.l.b16 %v222
      %v256 = vpack.c.b16 %v245, %v244
      %v257 = vpack.c.b16 %v247, %v246
      %v258 = vpack.c.b16 %v249, %v248
      %v259 = vpack.c.b16 %v251, %v250
      %v260 = vpack.c.b16 %v253, %v252
      %v261 = vpack.c.b16 %v255, %v254
      %vm268 = vcmask 785408
      %v270 = vsel %vm268, %v225, 0
      %272 = vmatprep.subr.bf16.mxu0 0
      %273 = vmatpush1.bf16.msra.mxu0 %v256
      %274 = vmatprep.subr.bf16.mxu0 0
      %275 = vmatpush1.bf16.msra.mxu0 %v257
      %276 = vmatprep.subr.bf16.mxu0 0
      %277 = vmatpush1.bf16.msra.mxu0 %v258
      %278 = vmatprep.subr.bf16.mxu0 0
      %279 = vmatpush1.bf16.msra.mxu0 %v259
      %280 = vmatprep.subr.bf16.mxu0 0
      %281 = vmatpush1.bf16.msra.mxu0 %v260
      %282 = vmatprep.subr.bf16.mxu0 0
      %283 = vmatpush1.bf16.msra.mxu0 %v261
      %284 = vmatprep.subr.bf16.mxu0 0
      %285 = vmatpush1.bf16.msra.mxu0 0
      %286 = vmatprep.subr.bf16.mxu0 0
      %287 = vmatpush1.bf16.msra.mxu0 0
      %288 = vmatprep.subr.bf16.mxu0 0
      %289 = vmatpush1.bf16.msra.mxu0 0
      %290 = vmatprep.subr.bf16.mxu0 0
      %291 = vmatpush1.bf16.msra.mxu0 0
      %292 = vmatprep.subr.bf16.mxu0 0
      %293 = vmatpush1.bf16.msra.mxu0 0
      %294 = vmatprep.subr.bf16.mxu0 0
      %295 = vmatpush1.bf16.msra.mxu0 0
      %296 = vmatprep.subr.bf16.mxu0 0
      %297 = vmatpush1.bf16.msra.mxu0 0
      %298 = vmatprep.subr.bf16.mxu0 0
      %299 = vmatpush1.bf16.msra.mxu0 0
      %300 = vmatprep.subr.bf16.mxu0 0
      %301 = vmatpush1.bf16.msra.mxu0 0
      %302 = vmatprep.subr.bf16.mxu0 0
      %303 = vmatpush1.bf16.msra.mxu0 0
      %304 = vmatprep.mubr.bf16.mxu0 0
      %305 = vmatmul.mubr.bf16.gmra.mrb[0].mxu0 %v270
      %v306 = vpop.f32.mrb[0].mxu0
      %v307 = vadd.f32 %v230, %v306
      %v308 = vpop.f32.mrb[0].mxu0
      %v309 = vpop.f32.mrb[0].mxu0
      %v310 = vpop.f32.mrb[0].mxu0
      %311 = vdwg.mxu0
      %v312 = vld [vmem:[%s205] sm:$0xff]
      %v313 = vpack.c.bf16 %v312, %v312
      %v315 = vsel %vm268, %v313, 0
      %317 = vmatprep.subr.bf16.mxu0 0
      %318 = vmatpush1.bf16.msra.mxu0 %v256
      %319 = vmatprep.subr.bf16.mxu0 0
      %320 = vmatpush1.bf16.msra.mxu0 %v257
      %321 = vmatprep.subr.bf16.mxu0 0
      %322 = vmatpush1.bf16.msra.mxu0 %v258
      %323 = vmatprep.subr.bf16.mxu0 0
      %324 = vmatpush1.bf16.msra.mxu0 %v259
      %325 = vmatprep.subr.bf16.mxu0 0
      %326 = vmatpush1.bf16.msra.mxu0 %v260
      %327 = vmatprep.subr.bf16.mxu0 0
      %328 = vmatpush1.bf16.msra.mxu0 %v261
      %329 = vmatprep.subr.bf16.mxu0 0
      %330 = vmatpush1.bf16.msra.mxu0 0
      %331 = vmatprep.subr.bf16.mxu0 0
      %332 = vmatpush1.bf16.msra.mxu0 0
      %333 = vmatprep.subr.bf16.mxu0 0
      %334 = vmatpush1.bf16.msra.mxu0 0
      %335 = vmatprep.subr.bf16.mxu0 0
      %336 = vmatpush1.bf16.msra.mxu0 0
      %337 = vmatprep.subr.bf16.mxu0 0
      %338 = vmatpush1.bf16.msra.mxu0 0
      %339 = vmatprep.subr.bf16.mxu0 0
      %340 = vmatpush1.bf16.msra.mxu0 0
      %341 = vmatprep.subr.bf16.mxu0 0
      %342 = vmatpush1.bf16.msra.mxu0 0
      %343 = vmatprep.subr.bf16.mxu0 0
      %344 = vmatpush1.bf16.msra.mxu0 0
      %345 = vmatprep.subr.bf16.mxu0 0
      %346 = vmatpush1.bf16.msra.mxu0 0
      %347 = vmatprep.subr.bf16.mxu0 0
      %348 = vmatpush1.bf16.msra.mxu0 0
      %349 = vmatprep.mubr.bf16.mxu0 0
      %350 = vmatmul.mubr.bf16.gmra.mrb[0].mxu0 %v315
      %v351 = vpop.f32.mrb[0].mxu0
      %v352 = vadd.f32 %v230, %v351
      %v353 = vpop.f32.mrb[0].mxu0
      %v354 = vpop.f32.mrb[0].mxu0
      %v355 = vpop.f32.mrb[0].mxu0
      %356 = vdwg.mxu0
      %v357 = vmax.f32 %v307, %v352
      %v358 = vmax.f32 %v357, 0.0
      %vm359 = vcmask 523264
      %360 = vst.msk [vmem:[%s209] sm:$0xff] %vm359, %v358
      %p361 = scmp.lt.s32.totalorder %s15, 1
      %s362 = scalar_select %p361, %s15, 1
      %s363 = smul.addr %s362, 8
      %s364 = scalar_lea.vmem %s4, %s363
      // Predicated region
      $region37: #{sensor_transformer_forward.6} parent=35 // pred_check
        %p365 = pneg %p127
      $region38: #{sensor_transformer_forward.6} parent=35 // pred_check_branch
        %367 = sbr.rel (%p365) target = $region40
      $region39: #{sensor_transformer_forward.6} parent=35 // pred_region
        _
      $region40: #{sensor_transformer_forward.6} parent=35 // pred_fallthru
        _
    $region36: #{sensor_transformer_forward.6} parent=5 // pred_fallthru
      _
    %p368 = scmp.le.s32.totalorder 2, %s10
    // Predicated region
    $region41: #{sensor_transformer_forward.6} parent=5 // pred_check
      %p369 = pneg %p368
    $region42: #{sensor_transformer_forward.6} parent=5 // pred_check_branch
      %371 = sbr.rel (%p369) target = $region44
    $region43: #{sensor_transformer_forward.6} parent=5 // pred_region
      %s372 = ssub.s32 %s10, 2
      // Predicated region
      $region45: #{sensor_transformer_forward.6} parent=43 // pred_check
        %p373 = pneg %p133
      $region46: #{sensor_transformer_forward.6} parent=43 // pred_check_branch
        %375 = sbr.rel (%p373) target = $region48
      $region47: #{sensor_transformer_forward.6} parent=43 // pred_region
        %p376 = scmp.lt.s32.totalorder %s16, 1
        %s377 = scalar_select %p376, %s16, 1
        %s378 = smul.addr %s377, 8
        %s379 = scalar_lea.vmem %s4, %s378
      $region48: #{sensor_transformer_forward.6} parent=43 // pred_fallthru
        _
    $region44: #{sensor_transformer_forward.6} parent=5 // pred_fallthru
      _
  $region6: #{sensor_transformer_forward.6} parent=0 // loop_footer
    %s14 = sadd.s32 1, %s10
  $region7: #{sensor_transformer_forward.6} parent=0 // loop_footer_branch
    %9 = sbr.rel target = $region3
  $region8: #{sensor_transformer_forward.6} parent=0 // loop_exit
    _

// kernel: sensor_transformer_forward.9
$region0: #{sensor_transformer_forward.9}
  #allocation0 [shape = 'u32[]', space=smem, size = 0x4, offset = 0x4, fixed_abs, tag = 'smem constant byte address 0x4 - core index']
  #allocation1 [shape = 'u32[144,128]{1,0:T(1,128)}', space=vmem, size = 0x12000, scoped, tag = 'internal scratch']
  %s0 = inlined_call_operand.vmem [shape: f32[16,64], index: 0, kind: input, shape index: {}]
  %s1 = inlined_call_operand.vmem [shape: f32[2,16], index: 1, kind: input, shape index: {}]
  %s2 = inlined_call_operand.hbm [shape: f32[2,64], index: 2, kind: output, shape index: {}]
  %s3 = sld [smem:[#allocation0]]
  $region18: #{sensor_transformer_forward.9} parent=0
    _
  %s5 = ssub.s32 1, %s3
  %s6 = scalar_select 0, %s5, %s3
  $region1: #{sensor_transformer_forward.9} parent=0
    #allocation2 [shape = 'u8[1024]{0}', space=vmem, size = 0x400, scoped, tag = 'output window, operand 0, single buffered']
    #allocation3 [shape = 's32[1]{0}', space=sflag, size = 0x4, scoped, tag = 'scoped memory for sensor_transformer_forward.9']
    %7 = vsyncpa [#allocation3], 0
    // Predicated region
    $region2: #{sensor_transformer_forward.9} parent=1 // pred_check
      _
    $region3: #{sensor_transformer_forward.9} parent=1 // pred_check_branch
      %9 = sbr.rel (0) target = $region5
    $region4: #{sensor_transformer_forward.9} parent=1 // pred_region
      _
    $region5: #{sensor_transformer_forward.9} parent=1 // pred_fallthru
      _
    // Predicated region
    $region6: #{sensor_transformer_forward.9} parent=1 // pred_check
      _
    $region7: #{sensor_transformer_forward.9} parent=1 // pred_check_branch
      %11 = sbr.rel (0) target = $region9
    $region8: #{sensor_transformer_forward.9} parent=1 // pred_region
      _
    $region9: #{sensor_transformer_forward.9} parent=1 // pred_fallthru
      _
    %v12 = vld [vmem:[%s1] sm:$0x3]
    %v13 = vld [vmem:[%s0] sm:$0xff]
    %v14 = vld [vmem:[%s0 + $0x8] sm:$0xff]
    %vm15 = vcmask 130048
    %v17 = vsel %vm15, %v12, 0
    %19 = vmatprep.subr.mxu0 0.0
    %20 = vmatpush1.msra.mxu0 %v13
    %21 = vmatprep.subr.mxu0 0.0
    %22 = vmatpush1.msra.mxu0 %v14
    %23 = vmatprep.subr.mxu0 0.0
    %24 = vmatpush1.msra.mxu0 0.0
    %25 = vmatprep.subr.mxu0 0.0
    %26 = vmatpush1.msra.mxu0 0.0
    %27 = vmatprep.subr.mxu0 0.0
    %28 = vmatpush1.msra.mxu0 0.0
    %29 = vmatprep.subr.mxu0 0.0
    %30 = vmatpush1.msra.mxu0 0.0
    %31 = vmatprep.subr.mxu0 0.0
    %32 = vmatpush1.msra.mxu0 0.0
    %33 = vmatprep.subr.mxu0 0.0
    %34 = vmatpush1.msra.mxu0 0.0
    %35 = vmatprep.subr.mxu0 0.0
    %36 = vmatpush1.msra.mxu0 0.0
    %37 = vmatprep.subr.mxu0 0.0
    %38 = vmatpush1.msra.mxu0 0.0
    %39 = vmatprep.subr.mxu0 0.0
    %40 = vmatpush1.msra.mxu0 0.0
    %41 = vmatprep.subr.mxu0 0.0
    %42 = vmatpush1.msra.mxu0 0.0
    %43 = vmatprep.subr.mxu0 0.0
    %44 = vmatpush1.msra.mxu0 0.0
    %45 = vmatprep.subr.mxu0 0.0
    %46 = vmatpush1.msra.mxu0 0.0
    %47 = vmatprep.subr.mxu0 0.0
    %48 = vmatpush1.msra.mxu0 0.0
    %49 = vmatprep.subr.mxu0 0.0
    %50 = vmatpush1.msra.mxu0 0.0
    %51 = vmatprep.subr.mxu0 0.0
    %52 = vmatpush1.msra.mxu0 0.0
    %53 = vmatprep.subr.mxu0 0.0
    %54 = vmatpush1.msra.mxu0 0.0
    %55 = vmatprep.subr.mxu0 0.0
    %56 = vmatpush1.msra.mxu0 0.0
    %57 = vmatprep.subr.mxu0 0.0
    %58 = vmatpush1.msra.mxu0 0.0
    %59 = vmatprep.subr.mxu0 0.0
    %60 = vmatpush1.msra.mxu0 0.0
    %61 = vmatprep.subr.mxu0 0.0
    %62 = vmatpush1.msra.mxu0 0.0
    %63 = vmatprep.subr.mxu0 0.0
    %64 = vmatpush1.msra.mxu0 0.0
    %65 = vmatprep.subr.mxu0 0.0
    %66 = vmatpush1.msra.mxu0 0.0
    %67 = vmatprep.subr.mxu0 0.0
    %68 = vmatpush1.msra.mxu0 0.0
    %69 = vmatprep.subr.mxu0 0.0
    %70 = vmatpush1.msra.mxu0 0.0
    %71 = vmatprep.subr.mxu0 0.0
    %72 = vmatpush1.msra.mxu0 0.0
    %73 = vmatprep.subr.mxu0 0.0
    %74 = vmatpush1.msra.mxu0 0.0
    %75 = vmatprep.subr.mxu0 0.0
    %76 = vmatpush1.msra.mxu0 0.0
    %77 = vmatprep.subr.mxu0 0.0
    %78 = vmatpush1.msra.mxu0 0.0
    %79 = vmatprep.subr.mxu0 0.0
    %80 = vmatpush1.msra.mxu0 0.0
    %81 = vmatprep.subr.mxu0 0.0
    %82 = vmatpush1.msra.mxu0 0.0
    %83 = vmatprep.mubr.f32.mxu0 0.0
    %84 = vmatmul.mubr.f32.gmra.mrb[0].mxu0 %v17
    %v85 = vpop.f32.mrb[0].mxu0
    %v86 = vadd.f32 0.0, %v85
    %v87 = vpop.f32.mrb[0].mxu0
    %88 = vdwg.mxu0
    %vm89 = vcmask 517120
    %90 = vst.msk [vmem:[#allocation2] sm:$0x3] %vm89, %v86
    // Predicated region
    $region10: #{sensor_transformer_forward.9} parent=1 // pred_check
      _
    $region11: #{sensor_transformer_forward.9} parent=1 // pred_check_branch
      %92 = sbr.rel (0) target = $region13
    $region12: #{sensor_transformer_forward.9} parent=1 // pred_region
      %s94 = ssub.s32 32, 32
      %95 = vsyncadd [#allocation3], %s94
      %s97 = sshll.u32 [#allocation2], 4
      %s98 = int_to_ptr.vmem [resolvable:$true] %s97
      %100 = dma.vmem_to_hbm [thread:$0]  %s98, 32, %s2, [#allocation3]
    $region13: #{sensor_transformer_forward.9} parent=1 // pred_fallthru
      _
    // Predicated region
    $region14: #{sensor_transformer_forward.9} parent=1 // pred_check
      _
    $region15: #{sensor_transformer_forward.9} parent=1 // pred_check_branch
      %102 = sbr.rel (0) target = $region17
    $region16: #{sensor_transformer_forward.9} parent=1 // pred_region
      %103 = dma.done [#allocation3], 32
    $region17: #{sensor_transformer_forward.9} parent=1 // pred_fallthru
      _
    %104 = vsyncpa [#allocation3], 1

// kernel: sensor_transformer_forward.7
$region0: #{sensor_transformer_forward.7}
  #allocation0 [shape = 'u32[]', space=smem, size = 0x4, offset = 0x4, fixed_abs, tag = 'smem constant byte address 0x4 - core index']
  #allocation1 [shape = 'u32[144,128]{1,0:T(1,128)}', space=vmem, size = 0x12000, scoped, tag = 'internal scratch']
  %s0 = inlined_call_operand.vmem [shape: f32[16,64], index: 0, kind: input, shape index: {}]
  %s1 = inlined_call_operand.vmem [shape: f32[8,64], index: 1, kind: input, shape index: {}]
  %s2 = inlined_call_operand.vmem [shape: bf16[64,192], index: 2, kind: input, shape index: {}]
  %s3 = inlined_call_operand.vmem [shape: f32[1,192], index: 3, kind: input, shape index: {}]
  %s4 = inlined_call_operand.vmem [shape: bf16[64,64], index: 4, kind: input, shape index: {}]
  %s5 = inlined_call_operand.vmem [shape: f32[1,64], index: 5, kind: input, shape index: {}]
  %s6 = inlined_call_operand.vmem [shape: f32[1,64], index: 6, kind: input, shape index: {}]
  %s7 = inlined_call_operand.vmem [shape: f32[1,64], index: 7, kind: input, shape index: {}]
  %s8 = inlined_call_operand.vmem [shape: bf16[64,256], index: 8, kind: input, shape index: {}]
  %s9 = inlined_call_operand.vmem [shape: f32[1,256], index: 9, kind: input, shape index: {}]
  %s10 = inlined_call_operand.vmem [shape: bf16[256,64], index: 10, kind: input, shape index: {}]
  %s11 = inlined_call_operand.vmem [shape: f32[1,64], index: 11, kind: input, shape index: {}]
  %s12 = inlined_call_operand.vmem [shape: f32[1,64], index: 12, kind: input, shape index: {}]
  %s13 = inlined_call_operand.vmem [shape: f32[1,64], index: 13, kind: input, shape index: {}]
  %s14 = inlined_call_operand.vmem [shape: f32[16,64], index: 14, kind: output, shape index: {}]
  %s15 = sld [smem:[#allocation0]]
  $region89: #{sensor_transformer_forward.7} parent=0
    _
  %s17 = ssub.s32 1, %s15
  %s18 = scalar_select 0, %s17, %s15
  loop: start=0, step=1, limit=4
  $region2: #{sensor_transformer_forward.7} parent=0 // loop_pre_header
    _
  $region3: #{sensor_transformer_forward.7} parent=0 // loop_header
    %s20 = sphi 0, %s24
    %p21 = scmp.ge.s32.totalorder %s20, 4
    %s30 = sphi 0, %s32
    %s33 = sphi 0, %s30
    %s34 = sphi 0, %s33
    %s50 = sphi 0, %s34
    %s54 = sphi 0, %s54
    %s56 = sphi 0, %s54
    %s57 = sphi 0, %s56
    %s71 = sphi 0, %s57
    %s75 = sphi 0, %s75
    %s77 = sphi 0, %s75
    %s78 = sphi 0, %s77
    %s92 = sphi 0, %s78
    %s96 = sphi 0, %s96
    %s98 = sphi 0, %s96
    %s99 = sphi 0, %s98
    %s113 = sphi 0, %s99
    %s117 = sphi 0, %s117
    %s119 = sphi 0, %s117
    %s120 = sphi 0, %s119
    %s134 = sphi 0, %s120
    %s138 = sphi 0, %s138
    %s140 = sphi 0, %s138
    %s141 = sphi 0, %s140
    %s155 = sphi 0, %s141
    %s159 = sphi 0, %s159
    %s161 = sphi 0, %s159
    %s162 = sphi 0, %s161
    %s176 = sphi 0, %s162
    %s180 = sphi 0, %s180
    %s182 = sphi 0, %s180
    %s183 = sphi 0, %s182
    %s197 = sphi 0, %s183
    %s201 = sphi 0, %s201
    %s203 = sphi 0, %s201
    %s204 = sphi 0, %s203
    %s218 = sphi 0, %s204
    %s222 = sphi 0, %s222
    %s224 = sphi 0, %s222
    %s225 = sphi 0, %s224
    %s239 = sphi 0, %s225
    %s243 = sphi 0, %s243
    %s245 = sphi 0, %s243
    %s246 = sphi 0, %s245
    %s260 = sphi 0, %s246
    %s264 = sphi 0, %s264
    %s266 = sphi 0, %s264
    %s267 = sphi 0, %s266
    %s281 = sphi 0, %s267
    %s285 = sphi 0, %s285
    %s287 = sphi 0, %s285
    %s288 = sphi 0, %s287
    %s302 = sphi 0, %s288
    %s306 = sphi 0, %s306
    %s308 = sphi 0, %s306
    %s309 = sphi 0, %s308
    %s323 = sphi 0, %s309
    %s329 = sphi 0, %s331
    %s332 = sphi 0, %s329
    %s333 = sphi 0, %s332
    %s349 = sphi 0, %s333
  $region4: #{sensor_transformer_forward.7} parent=0 // loop_header_branch
    %23 = sbr.rel (%p21) target = $region8
  $region5: #{sensor_transformer_forward.7} parent=0 // loop_body
    %s25 = ssub.s32 %s20, 1
    %s26 = ssub.s32 %s20, 2
    %s27 = sadd.s32 %s20, 1
    %s28 = ssub.s32 %s20, %s27
    %p29 = scmp.eq.s32.totalorder %s28, 0
    %s31 = sadd.s32 %s30, 1
    %s32 = scalar_select %p29, %s30, %s31
    %p35 = pneg %p29
    %p36 = scmp.eq.s32.totalorder %s20, 1
    %p37 = por %p35, %p36
    %p38 = scmp.ne.s32.totalorder %s30, %s33
    %p39 = scmp.eq.s32.totalorder %s20, 0
    %p40 = por %p38, %p39
    %p41 = scmp.ne.s32.totalorder %s30, %s33
    %p42 = scmp.eq.s32.totalorder %s25, 1
    %p43 = por %p41, %p42
    %p44 = scmp.ne.s32.totalorder %s33, %s34
    %p45 = scmp.eq.s32.totalorder %s25, 0
    %p46 = por %p44, %p45
    %p47 = scmp.ne.s32.totalorder %s33, %s34
    %p48 = scmp.eq.s32.totalorder %s26, 1
    %p49 = por %p47, %p48
    %p51 = scmp.ne.s32.totalorder %s34, %s50
    %p52 = scmp.eq.s32.totalorder %s26, 0
    %p53 = por %p51, %p52
    %s55 = sadd.s32 %s54, 1
    %p58 = scmp.eq.s32.totalorder %s20, 1
    %p59 = scmp.ne.s32.totalorder %s54, %s56
    %p60 = scmp.eq.s32.totalorder %s20, 0
    %p61 = por %p59, %p60
    %p62 = scmp.ne.s32.totalorder %s54, %s56
    %p63 = scmp.eq.s32.totalorder %s25, 1
    %p64 = por %p62, %p63
    %p65 = scmp.ne.s32.totalorder %s56, %s57
    %p66 = scmp.eq.s32.totalorder %s25, 0
    %p67 = por %p65, %p66
    %p68 = scmp.ne.s32.totalorder %s56, %s57
    %p69 = scmp.eq.s32.totalorder %s26, 1
    %p70 = por %p68, %p69
    %p72 = scmp.ne.s32.totalorder %s57, %s71
    %p73 = scmp.eq.s32.totalorder %s26, 0
    %p74 = por %p72, %p73
    %s76 = sadd.s32 %s75, 1
    %p79 = scmp.eq.s32.totalorder %s20, 1
    %p80 = scmp.ne.s32.totalorder %s75, %s77
    %p81 = scmp.eq.s32.totalorder %s20, 0
    %p82 = por %p80, %p81
    %p83 = scmp.ne.s32.totalorder %s75, %s77
    %p84 = scmp.eq.s32.totalorder %s25, 1
    %p85 = por %p83, %p84
    %p86 = scmp.ne.s32.totalorder %s77, %s78
    %p87 = scmp.eq.s32.totalorder %s25, 0
    %p88 = por %p86, %p87
    %p89 = scmp.ne.s32.totalorder %s77, %s78
    %p90 = scmp.eq.s32.totalorder %s26, 1
    %p91 = por %p89, %p90
    %p93 = scmp.ne.s32.totalorder %s78, %s92
    %p94 = scmp.eq.s32.totalorder %s26, 0
    %p95 = por %p93, %p94
    %s97 = sadd.s32 %s96, 1
    %p100 = scmp.eq.s32.totalorder %s20, 1
    %p101 = scmp.ne.s32.totalorder %s96, %s98
    %p102 = scmp.eq.s32.totalorder %s20, 0
    %p103 = por %p101, %p102
    %p104 = scmp.ne.s32.totalorder %s96, %s98
    %p105 = scmp.eq.s32.totalorder %s25, 1
    %p106 = por %p104, %p105
    %p107 = scmp.ne.s32.totalorder %s98, %s99
    %p108 = scmp.eq.s32.totalorder %s25, 0
    %p109 = por %p107, %p108
    %p110 = scmp.ne.s32.totalorder %s98, %s99
    %p111 = scmp.eq.s32.totalorder %s26, 1
    %p112 = por %p110, %p111
    %p114 = scmp.ne.s32.totalorder %s99, %s113
    %p115 = scmp.eq.s32.totalorder %s26, 0
    %p116 = por %p114, %p115
    %s118 = sadd.s32 %s117, 1
    %p121 = scmp.eq.s32.totalorder %s20, 1
    %p122 = scmp.ne.s32.totalorder %s117, %s119
    %p123 = scmp.eq.s32.totalorder %s20, 0
    %p124 = por %p122, %p123
    %p125 = scmp.ne.s32.totalorder %s117, %s119
    %p126 = scmp.eq.s32.totalorder %s25, 1
    %p127 = por %p125, %p126
    %p128 = scmp.ne.s32.totalorder %s119, %s120
    %p129 = scmp.eq.s32.totalorder %s25, 0
    %p130 = por %p128, %p129
    %p131 = scmp.ne.s32.totalorder %s119, %s120
    %p132 = scmp.eq.s32.totalorder %s26, 1
    %p133 = por %p131, %p132
    %p135 = scmp.ne.s32.totalorder %s120, %s134
    %p136 = scmp.eq.s32.totalorder %s26, 0
    %p137 = por %p135, %p136
    %s139 = sadd.s32 %s138, 1
    %p142 = scmp.eq.s32.totalorder %s20, 1
    %p143 = scmp.ne.s32.totalorder %s138, %s140
    %p144 = scmp.eq.s32.totalorder %s20, 0
    %p145 = por %p143, %p144
    %p146 = scmp.ne.s32.totalorder %s138, %s140
    %p147 = scmp.eq.s32.totalorder %s25, 1
    %p148 = por %p146, %p147
    %p149 = scmp.ne.s32.totalorder %s140, %s141
    %p150 = scmp.eq.s32.totalorder %s25, 0
    %p151 = por %p149, %p150
    %p152 = scmp.ne.s32.totalorder %s140, %s141
    %p153 = scmp.eq.s32.totalorder %s26, 1
    %p154 = por %p152, %p153
    %p156 = scmp.ne.s32.totalorder %s141, %s155
    %p157 = scmp.eq.s32.totalorder %s26, 0
    %p158 = por %p156, %p157
    %s160 = sadd.s32 %s159, 1
    %p163 = scmp.eq.s32.totalorder %s20, 1
    %p164 = scmp.ne.s32.totalorder %s159, %s161
    %p165 = scmp.eq.s32.totalorder %s20, 0
    %p166 = por %p164, %p165
    %p167 = scmp.ne.s32.totalorder %s159, %s161
    %p168 = scmp.eq.s32.totalorder %s25, 1
    %p169 = por %p167, %p168
    %p170 = scmp.ne.s32.totalorder %s161, %s162
    %p171 = scmp.eq.s32.totalorder %s25, 0
    %p172 = por %p170, %p171
    %p173 = scmp.ne.s32.totalorder %s161, %s162
    %p174 = scmp.eq.s32.totalorder %s26, 1
    %p175 = por %p173, %p174
    %p177 = scmp.ne.s32.totalorder %s162, %s176
    %p178 = scmp.eq.s32.totalorder %s26, 0
    %p179 = por %p177, %p178
    %s181 = sadd.s32 %s180, 1
    %p184 = scmp.eq.s32.totalorder %s20, 1
    %p185 = scmp.ne.s32.totalorder %s180, %s182
    %p186 = scmp.eq.s32.totalorder %s20, 0
    %p187 = por %p185, %p186
    %p188 = scmp.ne.s32.totalorder %s180, %s182
    %p189 = scmp.eq.s32.totalorder %s25, 1
    %p190 = por %p188, %p189
    %p191 = scmp.ne.s32.totalorder %s182, %s183
    %p192 = scmp.eq.s32.totalorder %s25, 0
    %p193 = por %p191, %p192
    %p194 = scmp.ne.s32.totalorder %s182, %s183
    %p195 = scmp.eq.s32.totalorder %s26, 1
    %p196 = por %p194, %p195
    %p198 = scmp.ne.s32.totalorder %s183, %s197
    %p199 = scmp.eq.s32.totalorder %s26, 0
    %p200 = por %p198, %p199
    %s202 = sadd.s32 %s201, 1
    %p205 = scmp.eq.s32.totalorder %s20, 1
    %p206 = scmp.ne.s32.totalorder %s201, %s203
    %p207 = scmp.eq.s32.totalorder %s20, 0
    %p208 = por %p206, %p207
    %p209 = scmp.ne.s32.totalorder %s201, %s203
    %p210 = scmp.eq.s32.totalorder %s25, 1
    %p211 = por %p209, %p210
    %p212 = scmp.ne.s32.totalorder %s203, %s204
    %p213 = scmp.eq.s32.totalorder %s25, 0
    %p214 = por %p212, %p213
    %p215 = scmp.ne.s32.totalorder %s203, %s204
    %p216 = scmp.eq.s32.totalorder %s26, 1
    %p217 = por %p215, %p216
    %p219 = scmp.ne.s32.totalorder %s204, %s218
    %p220 = scmp.eq.s32.totalorder %s26, 0
    %p221 = por %p219, %p220
    %s223 = sadd.s32 %s222, 1
    %p226 = scmp.eq.s32.totalorder %s20, 1
    %p227 = scmp.ne.s32.totalorder %s222, %s224
    %p228 = scmp.eq.s32.totalorder %s20, 0
    %p229 = por %p227, %p228
    %p230 = scmp.ne.s32.totalorder %s222, %s224
    %p231 = scmp.eq.s32.totalorder %s25, 1
    %p232 = por %p230, %p231
    %p233 = scmp.ne.s32.totalorder %s224, %s225
    %p234 = scmp.eq.s32.totalorder %s25, 0
    %p235 = por %p233, %p234
    %p236 = scmp.ne.s32.totalorder %s224, %s225
    %p237 = scmp.eq.s32.totalorder %s26, 1
    %p238 = por %p236, %p237
    %p240 = scmp.ne.s32.totalorder %s225, %s239
    %p241 = scmp.eq.s32.totalorder %s26, 0
    %p242 = por %p240, %p241
    %s244 = sadd.s32 %s243, 1
    %p247 = scmp.eq.s32.totalorder %s20, 1
    %p248 = scmp.ne.s32.totalorder %s243, %s245
    %p249 = scmp.eq.s32.totalorder %s20, 0
    %p250 = por %p248, %p249
    %p251 = scmp.ne.s32.totalorder %s243, %s245
    %p252 = scmp.eq.s32.totalorder %s25, 1
    %p253 = por %p251, %p252
    %p254 = scmp.ne.s32.totalorder %s245, %s246
    %p255 = scmp.eq.s32.totalorder %s25, 0
    %p256 = por %p254, %p255
    %p257 = scmp.ne.s32.totalorder %s245, %s246
    %p258 = scmp.eq.s32.totalorder %s26, 1
    %p259 = por %p257, %p258
    %p261 = scmp.ne.s32.totalorder %s246, %s260
    %p262 = scmp.eq.s32.totalorder %s26, 0
    %p263 = por %p261, %p262
    %s265 = sadd.s32 %s264, 1
    %p268 = scmp.eq.s32.totalorder %s20, 1
    %p269 = scmp.ne.s32.totalorder %s264, %s266
    %p270 = scmp.eq.s32.totalorder %s20, 0
    %p271 = por %p269, %p270
    %p272 = scmp.ne.s32.totalorder %s264, %s266
    %p273 = scmp.eq.s32.totalorder %s25, 1
    %p274 = por %p272, %p273
    %p275 = scmp.ne.s32.totalorder %s266, %s267
    %p276 = scmp.eq.s32.totalorder %s25, 0
    %p277 = por %p275, %p276
    %p278 = scmp.ne.s32.totalorder %s266, %s267
    %p279 = scmp.eq.s32.totalorder %s26, 1
    %p280 = por %p278, %p279
    %p282 = scmp.ne.s32.totalorder %s267, %s281
    %p283 = scmp.eq.s32.totalorder %s26, 0
    %p284 = por %p282, %p283
    %s286 = sadd.s32 %s285, 1
    %p289 = scmp.eq.s32.totalorder %s20, 1
    %p290 = scmp.ne.s32.totalorder %s285, %s287
    %p291 = scmp.eq.s32.totalorder %s20, 0
    %p292 = por %p290, %p291
    %p293 = scmp.ne.s32.totalorder %s285, %s287
    %p294 = scmp.eq.s32.totalorder %s25, 1
    %p295 = por %p293, %p294
    %p296 = scmp.ne.s32.totalorder %s287, %s288
    %p297 = scmp.eq.s32.totalorder %s25, 0
    %p298 = por %p296, %p297
    %p299 = scmp.ne.s32.totalorder %s287, %s288
    %p300 = scmp.eq.s32.totalorder %s26, 1
    %p301 = por %p299, %p300
    %p303 = scmp.ne.s32.totalorder %s288, %s302
    %p304 = scmp.eq.s32.totalorder %s26, 0
    %p305 = por %p303, %p304
    %s307 = sadd.s32 %s306, 1
    %p310 = scmp.eq.s32.totalorder %s20, 1
    %p311 = scmp.ne.s32.totalorder %s306, %s308
    %p312 = scmp.eq.s32.totalorder %s20, 0
    %p313 = por %p311, %p312
    %p314 = scmp.ne.s32.totalorder %s306, %s308
    %p315 = scmp.eq.s32.totalorder %s25, 1
    %p316 = por %p314, %p315
    %p317 = scmp.ne.s32.totalorder %s308, %s309
    %p318 = scmp.eq.s32.totalorder %s25, 0
    %p319 = por %p317, %p318
    %p320 = scmp.ne.s32.totalorder %s308, %s309
    %p321 = scmp.eq.s32.totalorder %s26, 1
    %p322 = por %p320, %p321
    %p324 = scmp.ne.s32.totalorder %s309, %s323
    %p325 = scmp.eq.s32.totalorder %s26, 0
    %p326 = por %p324, %p325
    %s327 = ssub.s32 %s20, %s27
    %p328 = scmp.eq.s32.totalorder %s327, 0
    %s330 = sadd.s32 %s329, 1
    %s331 = scalar_select %p328, %s329, %s330
    %p334 = pneg %p328
    %p335 = scmp.eq.s32.totalorder %s20, 1
    %p336 = por %p334, %p335
    %p337 = scmp.ne.s32.totalorder %s329, %s332
    %p338 = scmp.eq.s32.totalorder %s20, 0
    %p339 = por %p337, %p338
    %p340 = scmp.ne.s32.totalorder %s329, %s332
    %p341 = scmp.eq.s32.totalorder %s25, 1
    %p342 = por %p340, %p341
    %p343 = scmp.ne.s32.totalorder %s332, %s333
    %p344 = scmp.eq.s32.totalorder %s25, 0
    %p345 = por %p343, %p344
    %p346 = scmp.ne.s32.totalorder %s332, %s333
    %p347 = scmp.eq.s32.totalorder %s26, 1
    %p348 = por %p346, %p347
    %p350 = scmp.ne.s32.totalorder %s333, %s349
    %p351 = scmp.eq.s32.totalorder %s26, 0
    %p352 = por %p350, %p351
    %p353 = scmp.le.s32.totalorder 1, %s20
    %p354 = scmp.lt.s32.totalorder %s20, 3
    %p355 = pnand %p353, %p354
    %p356 = pneg %p355
    // Predicated region
    $region9: #{sensor_transformer_forward.7} parent=5 // pred_check
      _
    $region10: #{sensor_transformer_forward.7} parent=5 // pred_check_branch
      %358 = sbr.rel (%p355) target = $region12
    $region11: #{sensor_transformer_forward.7} parent=5 // pred_region
      %s359 = ssub.s32 %s20, 1
      // Predicated region
      $region13: #{sensor_transformer_forward.7} parent=11 // pred_check
        %p360 = pneg %p67
      $region14: #{sensor_transformer_forward.7} parent=11 // pred_check_branch
        %362 = sbr.rel (%p360) target = $region16
      $region15: #{sensor_transformer_forward.7} parent=11 // pred_region
        _
      $region16: #{sensor_transformer_forward.7} parent=11 // pred_fallthru
        _
      // Predicated region
      $region17: #{sensor_transformer_forward.7} parent=11 // pred_check
        %p363 = pneg %p88
      $region18: #{sensor_transformer_forward.7} parent=11 // pred_check_branch
        %365 = sbr.rel (%p363) target = $region20
      $region19: #{sensor_transformer_forward.7} parent=11 // pred_region
        _
      $region20: #{sensor_transformer_forward.7} parent=11 // pred_fallthru
        _
      // Predicated region
      $region21: #{sensor_transformer_forward.7} parent=11 // pred_check
        %p366 = pneg %p109
      $region22: #{sensor_transformer_forward.7} parent=11 // pred_check_branch
        %368 = sbr.rel (%p366) target = $region24
      $region23: #{sensor_transformer_forward.7} parent=11 // pred_region
        _
      $region24: #{sensor_transformer_forward.7} parent=11 // pred_fallthru
        _
      // Predicated region
      $region25: #{sensor_transformer_forward.7} parent=11 // pred_check
        %p369 = pneg %p130
      $region26: #{sensor_transformer_forward.7} parent=11 // pred_check_branch
        %371 = sbr.rel (%p369) target = $region28
      $region27: #{sensor_transformer_forward.7} parent=11 // pred_region
        _
      $region28: #{sensor_transformer_forward.7} parent=11 // pred_fallthru
        _
      // Predicated region
      $region29: #{sensor_transformer_forward.7} parent=11 // pred_check
        %p372 = pneg %p151
      $region30: #{sensor_transformer_forward.7} parent=11 // pred_check_branch
        %374 = sbr.rel (%p372) target = $region32
      $region31: #{sensor_transformer_forward.7} parent=11 // pred_region
        _
      $region32: #{sensor_transformer_forward.7} parent=11 // pred_fallthru
        _
      // Predicated region
      $region33: #{sensor_transformer_forward.7} parent=11 // pred_check
        %p375 = pneg %p172
      $region34: #{sensor_transformer_forward.7} parent=11 // pred_check_branch
        %377 = sbr.rel (%p375) target = $region36
      $region35: #{sensor_transformer_forward.7} parent=11 // pred_region
        _
      $region36: #{sensor_transformer_forward.7} parent=11 // pred_fallthru
        _
      // Predicated region
      $region37: #{sensor_transformer_forward.7} parent=11 // pred_check
        %p378 = pneg %p193
      $region38: #{sensor_transformer_forward.7} parent=11 // pred_check_branch
        %380 = sbr.rel (%p378) target = $region40
      $region39: #{sensor_transformer_forward.7} parent=11 // pred_region
        _
      $region40: #{sensor_transformer_forward.7} parent=11 // pred_fallthru
        _
      // Predicated region
      $region41: #{sensor_transformer_forward.7} parent=11 // pred_check
        %p381 = pneg %p214
      $region42: #{sensor_transformer_forward.7} parent=11 // pred_check_branch
        %383 = sbr.rel (%p381) target = $region44
      $region43: #{sensor_transformer_forward.7} parent=11 // pred_region
        _
      $region44: #{sensor_transformer_forward.7} parent=11 // pred_fallthru
        _
      // Predicated region
      $region45: #{sensor_transformer_forward.7} parent=11 // pred_check
        %p384 = pneg %p235
      $region46: #{sensor_transformer_forward.7} parent=11 // pred_check_branch
        %386 = sbr.rel (%p384) target = $region48
      $region47: #{sensor_transformer_forward.7} parent=11 // pred_region
        _
      $region48: #{sensor_transformer_forward.7} parent=11 // pred_fallthru
        _
      // Predicated region
      $region49: #{sensor_transformer_forward.7} parent=11 // pred_check
        %p387 = pneg %p256
      $region50: #{sensor_transformer_forward.7} parent=11 // pred_check_branch
        %389 = sbr.rel (%p387) target = $region52
      $region51: #{sensor_transformer_forward.7} parent=11 // pred_region
        _
      $region52: #{sensor_transformer_forward.7} parent=11 // pred_fallthru
        _
      // Predicated region
      $region53: #{sensor_transformer_forward.7} parent=11 // pred_check
        %p390 = pneg %p277
      $region54: #{sensor_transformer_forward.7} parent=11 // pred_check_branch
        %392 = sbr.rel (%p390) target = $region56
      $region55: #{sensor_transformer_forward.7} parent=11 // pred_region
        _
      $region56: #{sensor_transformer_forward.7} parent=11 // pred_fallthru
        _
      // Predicated region
      $region57: #{sensor_transformer_forward.7} parent=11 // pred_check
        %p393 = pneg %p298
      $region58: #{sensor_transformer_forward.7} parent=11 // pred_check_branch
        %395 = sbr.rel (%p393) target = $region60
      $region59: #{sensor_transformer_forward.7} parent=11 // pred_region
        _
      $region60: #{sensor_transformer_forward.7} parent=11 // pred_fallthru
        _
      // Predicated region
      $region61: #{sensor_transformer_forward.7} parent=11 // pred_check
        %p396 = pneg %p319
      $region62: #{sensor_transformer_forward.7} parent=11 // pred_check_branch
        %398 = sbr.rel (%p396) target = $region64
      $region63: #{sensor_transformer_forward.7} parent=11 // pred_region
        _
      $region64: #{sensor_transformer_forward.7} parent=11 // pred_fallthru
        _
    $region12: #{sensor_transformer_forward.7} parent=5 // pred_fallthru
      _
    %p399 = scmp.lt.s32.totalorder %s20, 2
    // Predicated region
    $region65: #{sensor_transformer_forward.7} parent=5 // pred_check
      %p400 = pneg %p399
    $region66: #{sensor_transformer_forward.7} parent=5 // pred_check_branch
      %402 = sbr.rel (%p400) target = $region68
    $region67: #{sensor_transformer_forward.7} parent=5 // pred_region
      // Predicated region
      $region69: #{sensor_transformer_forward.7} parent=67 // pred_check
        %p403 = pneg %p40
      $region70: #{sensor_transformer_forward.7} parent=67 // pred_check_branch
        %405 = sbr.rel (%p403) target = $region72
      $region71: #{sensor_transformer_forward.7} parent=67 // pred_region
        %p406 = scmp.lt.s32.totalorder %s20, 1
        %s407 = scalar_select %p406, %s20, 1
        %s408 = smul.addr %s407, 8
        %s409 = scalar_lea.vmem %s0, %s408
      $region72: #{sensor_transformer_forward.7} parent=67 // pred_fallthru
        _
    $region68: #{sensor_transformer_forward.7} parent=5 // pred_fallthru
      _
    %p410 = scmp.le.s32.totalorder 1, %s20
    %p411 = scmp.lt.s32.totalorder %s20, 3
    %p412 = pnand %p410, %p411
    %p413 = pneg %p412
    // Predicated region
    $region73: #{sensor_transformer_forward.7} parent=5 // pred_check
      _
    $region74: #{sensor_transformer_forward.7} parent=5 // pred_check_branch
      %415 = sbr.rel (%p412) target = $region76
    $region75: #{sensor_transformer_forward.7} parent=5 // pred_region
      %s416 = ssub.s32 %s20, 1
      %p417 = scmp.lt.s32.totalorder %s25, 1
      %s418 = scalar_select %p417, %s25, 1
      %s419 = smul.addr %s418, 8
      %s420 = scalar_lea.vmem %s0, %s419
      %p421 = pneg %p46
      %p422 = pneg %p43
      %p423 = pneg %p67
      %p424 = pneg %p64
      %p425 = pneg %p88
      %p426 = pneg %p85
      %p427 = pneg %p109
      %p428 = pneg %p106
      %p429 = pneg %p130
      %p430 = pneg %p127
      %p431 = pneg %p151
      %p432 = pneg %p148
      %p433 = pneg %p172
      %p434 = pneg %p169
      %p435 = pneg %p193
      %p436 = pneg %p190
      %p437 = pneg %p214
      %p438 = pneg %p211
      %p439 = pneg %p235
      %p440 = pneg %p232
      %p441 = pneg %p256
      %p442 = pneg %p253
      %p443 = pneg %p277
      %p444 = pneg %p274
      %p445 = pneg %p298
      %p446 = pneg %p295
      %p447 = pneg %p319
      %p448 = pneg %p316
      %p449 = pneg %p345
      %p450 = pneg %p342
      %p451 = scmp.lt.s32.totalorder %s25, 1
      %s452 = scalar_select %p451, %s25, 1
      %s453 = smul.addr %s452, 8
      %s454 = scalar_lea.vmem %s14, %s453
      %p455 = scmp.lt.s32.totalorder %s25, 1
      %s456 = scalar_select %p455, %s25, 1
      %s457 = smul.addr %s456, 8
      %s458 = scalar_lea.vmem %s0, %s457
      %p459 = scmp.lt.s32.totalorder %s25, 1
      %s460 = scalar_select %p459, %s25, 1
      %s461 = smul.addr %s460, 8
      %s462 = scalar_lea.vmem %s14, %s461
      %v464 = vld [vmem:[%s458] sm:$0xff]
      %v465 = vpack.c.bf16 %v464, %v464
      %v466 = vld [vmem:[%s2] sm:$0xff]
      %v467 = vld [vmem:[%s2 + $0x8] sm:$0xff]
      %v468 = vld [vmem:[%s2 + $0x10] sm:$0xff]
      %v469 = vld [vmem:[%s2 + $0x18] sm:$0xff]
      %v470 = vld [vmem:[%s2 + $0x20] sm:$0xff]
      %v471 = vld [vmem:[%s2 + $0x28] sm:$0xff]
      %v472 = vld [vmem:[%s2 + $0x30] sm:$0xff]
      %v473 = vld [vmem:[%s2 + $0x38] sm:$0xff]
      %v474 = vld [vmem:[%s3] sm:$0x3]
      %v476 = vlaneseq
      %v477 = vshrl.u32 %v476, 7
      %v478 = vsub.s32 0, %v477
      %v479 = vrot.slane %v474, %v478
      %v480 = vlaneseq
      %v481 = vshrl.u32 %v480, 7
      %v482 = vsub.s32 1, %v481
      %v483 = vrot.slane %v474, %v482
      %v494 = vunpack.c.l.b16 %v466
      %v495 = vunpack.c.h.b16 %v466
      %v496 = vunpack.c.l.b16 %v467
      %v497 = vunpack.c.h.b16 %v467
      %v498 = vunpack.c.l.b16 %v468
      %v499 = vunpack.c.h.b16 %v468
      %v500 = vunpack.c.l.b16 %v469
      %v501 = vunpack.c.h.b16 %v469
      %v502 = vunpack.c.l.b16 %v470
      %v503 = vunpack.c.h.b16 %v470
      %v504 = vunpack.c.l.b16 %v471
      %v505 = vunpack.c.h.b16 %v471
      %v506 = vunpack.c.l.b16 %v472
      %v507 = vunpack.c.h.b16 %v472
      %v508 = vunpack.c.l.b16 %v473
      %v509 = vunpack.c.h.b16 %v473
      %v510 = vpack.c.b16 %v496, %v494
      %v511 = vpack.c.b16 %v497, %v495
      %v512 = vpack.c.b16 %v500, %v498
      %v513 = vpack.c.b16 %v501, %v499
      %v514 = vpack.c.b16 %v504, %v502
      %v515 = vpack.c.b16 %v505, %v503
      %v516 = vpack.c.b16 %v508, %v506
      %v517 = vpack.c.b16 %v509, %v507
      %vm526 = vcmask 523264
      %v528 = vsel %vm526, %v465, 0
      %530 = vmatprep.subr.bf16.mxu0 %v511
      %531 = vmatpush1.bf16.msra.mxu0 %v510
      %532 = vmatprep.subr.bf16.mxu0 %v513
      %533 = vmatpush1.bf16.msra.mxu0 %v512
      %534 = vmatprep.subr.bf16.mxu0 %v515
      %535 = vmatpush1.bf16.msra.mxu0 %v514
      %536 = vmatprep.subr.bf16.mxu0 %v517
      %537 = vmatpush1.bf16.msra.mxu0 %v516
      %538 = vmatprep.subr.bf16.mxu0 0
      %539 = vmatpush1.bf16.msra.mxu0 0
      %540 = vmatprep.subr.bf16.mxu0 0
      %541 = vmatpush1.bf16.msra.mxu0 0
      %542 = vmatprep.subr.bf16.mxu0 0
      %543 = vmatpush1.bf16.msra.mxu0 0
      %544 = vmatprep.subr.bf16.mxu0 0
      %545 = vmatpush1.bf16.msra.mxu0 0
      %546 = vmatprep.subr.bf16.mxu0 0
      %547 = vmatpush1.bf16.msra.mxu0 0
      %548 = vmatprep.subr.bf16.mxu0 0
      %549 = vmatpush1.bf16.msra.mxu0 0
      %550 = vmatprep.subr.bf16.mxu0 0
      %551 = vmatpush1.bf16.msra.mxu0 0
      %552 = vmatprep.subr.bf16.mxu0 0
      %553 = vmatpush1.bf16.msra.mxu0 0
      %554 = vmatprep.subr.bf16.mxu0 0
      %555 = vmatpush1.bf16.msra.mxu0 0
      %556 = vmatprep.subr.bf16.mxu0 0
      %557 = vmatpush1.bf16.msra.mxu0 0
      %558 = vmatprep.subr.bf16.mxu0 0
      %559 = vmatpush1.bf16.msra.mxu0 0
      %560 = vmatprep.subr.bf16.mxu0 0
      %561 = vmatpush1.bf16.msra.mxu0 0
      %562 = vmatprep.mubr.bf16.mxu0 0
      %563 = vmatmul.mubr.bf16.gmra.mrb[0].mxu0 %v528
      %v564 = vpop.f32.mrb[0].mxu0
      %v565 = vadd.f32 %v479, %v564
      %v566 = vpop.f32.mrb[0].mxu0
      %v567 = vadd.f32 %v483, %v566
      %v568 = vpop.f32.mrb[0].mxu0
      %v569 = vpop.f32.mrb[0].mxu0
      %570 = vdwg.mxu0
      %v571 = vmul.f32 %v565, 0.35355338
      %v572 = vpack.c.bf16 %v565, %v565
      %v573 = vld [vmem:[%s1] sm:$0x1]
      %v574 = vlaneseq
      %v575 = vshrl.u32 %v574, 7
      %v576 = vsub.s32 0, %v575
      %v577 = vrot.slane %v573, %v576
      %v578 = vmul.f32 %v571, %v577
      %v579 = vpack.c.bf16 %v578, %v578
      %581 = vrot.lane.b32.xlu0 %v572, 64
      %v582 = vpop.permute.xlu0 %581
      %v584 = vsel %vm526, %v579, 0
      %v587 = vsel %vm526, %v582, 0
      %589 = vmatprep.subr.bf16.mxu0 0
      %590 = vmatpush1.bf16.xpose.msra.mxu0 %v587
      %591 = vmatprep.subr.bf16.mxu0 0
      %592 = vmatpush1.bf16.xpose.msra.mxu0 0
      %593 = vmatprep.subr.bf16.mxu0 0
      %594 = vmatpush1.bf16.xpose.msra.mxu0 0
      %595 = vmatprep.subr.bf16.mxu0 0
      %596 = vmatpush1.bf16.xpose.msra.mxu0 0
      %597 = vmatprep.subr.bf16.mxu0 0
      %598 = vmatpush1.bf16.xpose.msra.mxu0 0
      %599 = vmatprep.subr.bf16.mxu0 0
      %600 = vmatpush1.bf16.xpose.msra.mxu0 0
      %601 = vmatprep.subr.bf16.mxu0 0
      %602 = vmatpush1.bf16.xpose.msra.mxu0 0
      %603 = vmatprep.subr.bf16.mxu0 0
      %604 = vmatpush1.bf16.xpose.msra.mxu0 0
      %605 = vmatprep.subr.bf16.mxu0 0
      %606 = vmatpush1.bf16.xpose.msra.mxu0 0
      %607 = vmatprep.subr.bf16.mxu0 0
      %608 = vmatpush1.bf16.xpose.msra.mxu0 0
      %609 = vmatprep.subr.bf16.mxu0 0
      %610 = vmatpush1.bf16.xpose.msra.mxu0 0
      %611 = vmatprep.subr.bf16.mxu0 0
      %612 = vmatpush1.bf16.xpose.msra.mxu0 0
      %613 = vmatprep.subr.bf16.mxu0 0
      %614 = vmatpush1.bf16.xpose.msra.mxu0 0
      %615 = vmatprep.subr.bf16.mxu0 0
      %616 = vmatpush1.bf16.xpose.msra.mxu0 0
      %617 = vmatprep.subr.bf16.mxu0 0
      %618 = vmatpush1.bf16.xpose.msra.mxu0 0
      %619 = vmatprep.subr.bf16.mxu0 0
      %620 = vmatpush1.bf16.xpose.msra.mxu0 0
      %621 = vmatprep.mubr.bf16.mxu0 0
      %622 = vmatmul.mubr.bf16.gmra.mrb[0].mxu0 %v584
      %v623 = vpop.f32.mrb[0].mxu0
      %v624 = vadd.f32 0.0, %v623
      %v625 = vpop.f32.mrb[0].mxu0
      %v626 = vpop.f32.mrb[0].mxu0
      %v627 = vpop.f32.mrb[0].mxu0
      %628 = vdwg.mxu0
      %vm629 = vcmask 64512
      %v630 = vsel %vm629, %v624, -inf
      %631 = vmax.xlane.f32.xlu0 %v630
      %v632 = vpop.xlane.xlu0 %631
      %v633 = vsub.f32 %v624, %v632
      %v634 = vmul.f32 %v633, 1.442695
      %v635 = vpow.pop %v634
      %v636 = vsel %vm629, %v635, 0.0
      %637 = vadd.xlane.f32.xlu0 %v636
      %v638 = vpop.xlane.xlu0 %637
      %v639 = vrcp.pop %v638
      %v640 = vmul.f32 %v635, %v639
      %v641 = vmul.f32 %v567, %v577
      %v642 = vpack.c.bf16 %v641, %v641
      %v643 = vpack.c.bf16 %v640, %v640
      %v644 = vld [vmem:[%s1 + $0x1] sm:$0x1]
      %v645 = vlaneseq
      %v646 = vshrl.u32 %v645, 7
      %v647 = vsub.s32 0, %v646
      %v648 = vrot.slane %v644, %v647
      %v649 = vmul.f32 %v571, %v648
      %v650 = vpack.c.bf16 %v649, %v649
      %v652 = vsel %vm526, %v650, 0
      %654 = vmatprep.subr.bf16.mxu0 0
      %655 = vmatpush1.bf16.xpose.msra.mxu0 %v587
      %656 = vmatprep.subr.bf16.mxu0 0
      %657 = vmatpush1.bf16.xpose.msra.mxu0 0
      %658 = vmatprep.subr.bf16.mxu0 0
      %659 = vmatpush1.bf16.xpose.msra.mxu0 0
      %660 = vmatprep.subr.bf16.mxu0 0
      %661 = vmatpush1.bf16.xpose.msra.mxu0 0
      %662 = vmatprep.subr.bf16.mxu0 0
      %663 = vmatpush1.bf16.xpose.msra.mxu0 0
      %664 = vmatprep.subr.bf16.mxu0 0
      %665 = vmatpush1.bf16.xpose.msra.mxu0 0
      %666 = vmatprep.subr.bf16.mxu0 0
      %667 = vmatpush1.bf16.xpose.msra.mxu0 0
      %668 = vmatprep.subr.bf16.mxu0 0
      %669 = vmatpush1.bf16.xpose.msra.mxu0 0
      %670 = vmatprep.subr.bf16.mxu0 0
      %671 = vmatpush1.bf16.xpose.msra.mxu0 0
      %672 = vmatprep.subr.bf16.mxu0 0
      %673 = vmatpush1.bf16.xpose.msra.mxu0 0
      %674 = vmatprep.subr.bf16.mxu0 0
      %675 = vmatpush1.bf16.xpose.msra.mxu0 0
      %676 = vmatprep.subr.bf16.mxu0 0
      %677 = vmatpush1.bf16.xpose.msra.mxu0 0
      %678 = vmatprep.subr.bf16.mxu0 0
      %679 = vmatpush1.bf16.xpose.msra.mxu0 0
      %680 = vmatprep.subr.bf16.mxu0 0
      %681 = vmatpush1.bf16.xpose.msra.mxu0 0
      %682 = vmatprep.subr.bf16.mxu0 0
      %683 = vmatpush1.bf16.xpose.msra.mxu0 0
      %684 = vmatprep.subr.bf16.mxu0 0
      %685 = vmatpush1.bf16.xpose.msra.mxu0 0
      %686 = vmatprep.mubr.bf16.mxu0 0
      %687 = vmatmul.mubr.bf16.gmra.mrb[0].mxu0 %v652
      %v688 = vpop.f32.mrb[0].mxu0
      %v689 = vadd.f32 0.0, %v688
      %v690 = vpop.f32.mrb[0].mxu0
      %v691 = vpop.f32.mrb[0].mxu0
      %v692 = vpop.f32.mrb[0].mxu0
      %693 = vdwg.mxu0
      %v694 = vsel %vm629, %v689, -inf
      %695 = vmax.xlane.f32.xlu0 %v694
      %v696 = vpop.xlane.xlu0 %695
      %v697 = vsub.f32 %v689, %v696
      %v698 = vmul.f32 %v697, 1.442695
      %v699 = vpow.pop %v698
      %v700 = vsel %vm629, %v699, 0.0
      %701 = vadd.xlane.f32.xlu0 %v700
      %v702 = vpop.xlane.xlu0 %701
      %v703 = vrcp.pop %v702
      %v704 = vmul.f32 %v699, %v703
      %v705 = vmul.f32 %v567, %v648
      %v706 = vpack.c.bf16 %v705, %v705
      %v707 = vpack.c.bf16 %v704, %v704
      %v709 = vsel %vm629, %v707, 0
      %vm711 = vcmask 1043456
      %v713 = vsel %vm711, %v706, 0
      %715 = vmatprep.subr.bf16.mxu0 0
      %716 = vmatpush1.bf16.msra.mxu0 %v713
      %717 = vmatprep.subr.bf16.mxu0 0
      %718 = vmatpush1.bf16.msra.mxu0 0
      %719 = vmatprep.subr.bf16.mxu0 0
      %720 = vmatpush1.bf16.msra.mxu0 0
      %721 = vmatprep.subr.bf16.mxu0 0
      %722 = vmatpush1.bf16.msra.mxu0 0
      %723 = vmatprep.subr.bf16.mxu0 0
      %724 = vmatpush1.bf16.msra.mxu0 0
      %725 = vmatprep.subr.bf16.mxu0 0
      %726 = vmatpush1.bf16.msra.mxu0 0
      %727 = vmatprep.subr.bf16.mxu0 0
      %728 = vmatpush1.bf16.msra.mxu0 0
      %729 = vmatprep.subr.bf16.mxu0 0
      %730 = vmatpush1.bf16.msra.mxu0 0
      %731 = vmatprep.subr.bf16.mxu0 0
      %732 = vmatpush1.bf16.msra.mxu0 0
      %733 = vmatprep.subr.bf16.mxu0 0
      %734 = vmatpush1.bf16.msra.mxu0 0
      %735 = vmatprep.subr.bf16.mxu0 0
      %736 = vmatpush1.bf16.msra.mxu0 0
      %737 = vmatprep.subr.bf16.mxu0 0
      %738 = vmatpush1.bf16.msra.mxu0 0
      %739 = vmatprep.subr.bf16.mxu0 0
      %740 = vmatpush1.bf16.msra.mxu0 0
      %741 = vmatprep.subr.bf16.mxu0 0
      %742 = vmatpush1.bf16.msra.mxu0 0
      %743 = vmatprep.subr.bf16.mxu0 0
      %744 = vmatpush1.bf16.msra.mxu0 0
      %745 = vmatprep.subr.bf16.mxu0 0
      %746 = vmatpush1.bf16.msra.mxu0 0
      %747 = vmatprep.mubr.bf16.mxu0 0
      %748 = vmatmul.mubr.bf16.gmra.mrb[0].mxu0 %v709
      %v749 = vpop.f32.mrb[0].mxu0
      %v750 = vadd.f32 0.0, %v749
      %v751 = vpop.f32.mrb[0].mxu0
      %v752 = vpop.f32.mrb[0].mxu0
      %v753 = vpop.f32.mrb[0].mxu0
      %754 = vdwg.mxu0
      %v756 = vsel %vm629, %v643, 0
      %v759 = vsel %vm711, %v642, 0
      %761 = vmatprep.subr.bf16.mxu0 0
      %762 = vmatpush1.bf16.msra.mxu0 %v759
      %763 = vmatprep.subr.bf16.mxu0 0
      %764 = vmatpush1.bf16.msra.mxu0 0
      %765 = vmatprep.subr.bf16.mxu0 0
      %766 = vmatpush1.bf16.msra.mxu0 0
      %767 = vmatprep.subr.bf16.mxu0 0
      %768 = vmatpush1.bf16.msra.mxu0 0
      %769 = vmatprep.subr.bf16.mxu0 0
      %770 = vmatpush1.bf16.msra.mxu0 0
      %771 = vmatprep.subr.bf16.mxu0 0
      %772 = vmatpush1.bf16.msra.mxu0 0
      %773 = vmatprep.subr.bf16.mxu0 0
      %774 = vmatpush1.bf16.msra.mxu0 0
      %775 = vmatprep.subr.bf16.mxu0 0
      %776 = vmatpush1.bf16.msra.mxu0 0
      %777 = vmatprep.subr.bf16.mxu0 0
      %778 = vmatpush1.bf16.msra.mxu0 0
      %779 = vmatprep.subr.bf16.mxu0 0
      %780 = vmatpush1.bf16.msra.mxu0 0
      %781 = vmatprep.subr.bf16.mxu0 0
      %782 = vmatpush1.bf16.msra.mxu0 0
      %783 = vmatprep.subr.bf16.mxu0 0
      %784 = vmatpush1.bf16.msra.mxu0 0
      %785 = vmatprep.subr.bf16.mxu0 0
      %786 = vmatpush1.bf16.msra.mxu0 0
      %787 = vmatprep.subr.bf16.mxu0 0
      %788 = vmatpush1.bf16.msra.mxu0 0
      %789 = vmatprep.subr.bf16.mxu0 0
      %790 = vmatpush1.bf16.msra.mxu0 0
      %791 = vmatprep.subr.bf16.mxu0 0
      %792 = vmatpush1.bf16.msra.mxu0 0
      %793 = vmatprep.mubr.bf16.mxu0 0
      %794 = vmatmul.mubr.bf16.gmra.mrb[0].mxu0 %v756
      %v795 = vpop.f32.mrb[0].mxu0
      %v796 = vadd.f32 %v750, %v795
      %v797 = vpop.f32.mrb[0].mxu0
      %v798 = vpop.f32.mrb[0].mxu0
      %v799 = vpop.f32.mrb[0].mxu0
      %800 = vdwg.mxu0
      %v801 = vld [vmem:[%s1 + $0x2] sm:$0x1]
      %v802 = vlaneseq
      %v803 = vshrl.u32 %v802, 7
      %v804 = vsub.s32 0, %v803
      %v805 = vrot.slane %v801, %v804
      %v806 = vmul.f32 %v571, %v805
      %v807 = vpack.c.bf16 %v806, %v806
      %v809 = vsel %vm526, %v807, 0
      %811 = vmatprep.subr.bf16.mxu0 0
      %812 = vmatpush1.bf16.xpose.msra.mxu0 %v587
      %813 = vmatprep.subr.bf16.mxu0 0
      %814 = vmatpush1.bf16.xpose.msra.mxu0 0
      %815 = vmatprep.subr.bf16.mxu0 0
      %816 = vmatpush1.bf16.xpose.msra.mxu0 0
      %817 = vmatprep.subr.bf16.mxu0 0
      %818 = vmatpush1.bf16.xpose.msra.mxu0 0
      %819 = vmatprep.subr.bf16.mxu0 0
      %820 = vmatpush1.bf16.xpose.msra.mxu0 0
      %821 = vmatprep.subr.bf16.mxu0 0
      %822 = vmatpush1.bf16.xpose.msra.mxu0 0
      %823 = vmatprep.subr.bf16.mxu0 0
      %824 = vmatpush1.bf16.xpose.msra.mxu0 0
      %825 = vmatprep.subr.bf16.mxu0 0
      %826 = vmatpush1.bf16.xpose.msra.mxu0 0
      %827 = vmatprep.subr.bf16.mxu0 0
      %828 = vmatpush1.bf16.xpose.msra.mxu0 0
      %829 = vmatprep.subr.bf16.mxu0 0
      %830 = vmatpush1.bf16.xpose.msra.mxu0 0
      %831 = vmatprep.subr.bf16.mxu0 0
      %832 = vmatpush1.bf16.xpose.msra.mxu0 0
      %833 = vmatprep.subr.bf16.mxu0 0
      %834 = vmatpush1.bf16.xpose.msra.mxu0 0
      %835 = vmatprep.subr.bf16.mxu0 0
      %836 = vmatpush1.bf16.xpose.msra.mxu0 0
      %837 = vmatprep.subr.bf16.mxu0 0
      %838 = vmatpush1.bf16.xpose.msra.mxu0 0
      %839 = vmatprep.subr.bf16.mxu0 0
      %840 = vmatpush1.bf16.xpose.msra.mxu0 0
      %841 = vmatprep.subr.bf16.mxu0 0
      %842 = vmatpush1.bf16.xpose.msra.mxu0 0
      %843 = vmatprep.mubr.bf16.mxu0 0
      %844 = vmatmul.mubr.bf16.gmra.mrb[0].mxu0 %v809
      %v845 = vpop.f32.mrb[0].mxu0
      %v846 = vadd.f32 0.0, %v845
      %v847 = vpop.f32.mrb[0].mxu0
      %v848 = vpop.f32.mrb[0].mxu0
      %v849 = vpop.f32.mrb[0].mxu0
      %850 = vdwg.mxu0
      %v851 = vsel %vm629, %v846, -inf
      %852 = vmax.xlane.f32.xlu0 %v851
      %v853 = vpop.xlane.xlu0 %852
      %v854 = vsub.f32 %v846, %v853
      %v855 = vmul.f32 %v854, 1.442695
      %v856 = vpow.pop %v855
      %v857 = vsel %vm629, %v856, 0.0
      %858 = vadd.xlane.f32.xlu0 %v857
      %v859 = vpop.xlane.xlu0 %858
      %v860 = vrcp.pop %v859
      %v861 = vmul.f32 %v856, %v860
      %v862 = vmul.f32 %v567, %v805
      %v863 = vpack.c.bf16 %v862, %v862
      %v864 = vpack.c.bf16 %v861, %v861
      %v866 = vsel %vm629, %v864, 0
      %v869 = vsel %vm711, %v863, 0
      %871 = vmatprep.subr.bf16.mxu0 0
      %872 = vmatpush1.bf16.msra.mxu0 %v869
      %873 = vmatprep.subr.bf16.mxu0 0
      %874 = vmatpush1.bf16.msra.mxu0 0
      %875 = vmatprep.subr.bf16.mxu0 0
      %876 = vmatpush1.bf16.msra.mxu0 0
      %877 = vmatprep.subr.bf16.mxu0 0
      %878 = vmatpush1.bf16.msra.mxu0 0
      %879 = vmatprep.subr.bf16.mxu0 0
      %880 = vmatpush1.bf16.msra.mxu0 0
      %881 = vmatprep.subr.bf16.mxu0 0
      %882 = vmatpush1.bf16.msra.mxu0 0
      %883 = vmatprep.subr.bf16.mxu0 0
      %884 = vmatpush1.bf16.msra.mxu0 0
      %885 = vmatprep.subr.bf16.mxu0 0
      %886 = vmatpush1.bf16.msra.mxu0 0
      %887 = vmatprep.subr.bf16.mxu0 0
      %888 = vmatpush1.bf16.msra.mxu0 0
      %889 = vmatprep.subr.bf16.mxu0 0
      %890 = vmatpush1.bf16.msra.mxu0 0
      %891 = vmatprep.subr.bf16.mxu0 0
      %892 = vmatpush1.bf16.msra.mxu0 0
      %893 = vmatprep.subr.bf16.mxu0 0
      %894 = vmatpush1.bf16.msra.mxu0 0
      %895 = vmatprep.subr.bf16.mxu0 0
      %896 = vmatpush1.bf16.msra.mxu0 0
      %897 = vmatprep.subr.bf16.mxu0 0
      %898 = vmatpush1.bf16.msra.mxu0 0
      %899 = vmatprep.subr.bf16.mxu0 0
      %900 = vmatpush1.bf16.msra.mxu0 0
      %901 = vmatprep.subr.bf16.mxu0 0
      %902 = vmatpush1.bf16.msra.mxu0 0
      %903 = vmatprep.mubr.bf16.mxu0 0
      %904 = vmatmul.mubr.bf16.gmra.mrb[0].mxu0 %v866
      %v905 = vpop.f32.mrb[0].mxu0
      %v906 = vadd.f32 0.0, %v905
      %v907 = vpop.f32.mrb[0].mxu0
      %v908 = vpop.f32.mrb[0].mxu0
      %v909 = vpop.f32.mrb[0].mxu0
      %910 = vdwg.mxu0
      %v911 = vadd.f32 %v796, %v906
      %v912 = vld [vmem:[%s1 + $0x3] sm:$0x1]
      %v913 = vlaneseq
      %v914 = vshrl.u32 %v913, 7
      %v915 = vsub.s32 0, %v914
      %v916 = vrot.slane %v912, %v915
      %v917 = vmul.f32 %v571, %v916
      %v918 = vpack.c.bf16 %v917, %v917
      %v920 = vsel %vm526, %v918, 0
      %922 = vmatprep.subr.bf16.mxu0 0
      %923 = vmatpush1.bf16.xpose.msra.mxu0 %v587
      %924 = vmatprep.subr.bf16.mxu0 0
      %925 = vmatpush1.bf16.xpose.msra.mxu0 0
      %926 = vmatprep.subr.bf16.mxu0 0
      %927 = vmatpush1.bf16.xpose.msra.mxu0 0
      %928 = vmatprep.subr.bf16.mxu0 0
      %929 = vmatpush1.bf16.xpose.msra.mxu0 0
      %930 = vmatprep.subr.bf16.mxu0 0
      %931 = vmatpush1.bf16.xpose.msra.mxu0 0
      %932 = vmatprep.subr.bf16.mxu0 0
      %933 = vmatpush1.bf16.xpose.msra.mxu0 0
      %934 = vmatprep.subr.bf16.mxu0 0
      %935 = vmatpush1.bf16.xpose.msra.mxu0 0
      %936 = vmatprep.subr.bf16.mxu0 0
      %937 = vmatpush1.bf16.xpose.msra.mxu0 0
      %938 = vmatprep.subr.bf16.mxu0 0
      %939 = vmatpush1.bf16.xpose.msra.mxu0 0
      %940 = vmatprep.subr.bf16.mxu0 0
      %941 = vmatpush1.bf16.xpose.msra.mxu0 0
      %942 = vmatprep.subr.bf16.mxu0 0
      %943 = vmatpush1.bf16.xpose.msra.mxu0 0
      %944 = vmatprep.subr.bf16.mxu0 0
      %945 = vmatpush1.bf16.xpose.msra.mxu0 0
      %946 = vmatprep.subr.bf16.mxu0 0
      %947 = vmatpush1.bf16.xpose.msra.mxu0 0
      %948 = vmatprep.subr.bf16.mxu0 0
      %949 = vmatpush1.bf16.xpose.msra.mxu0 0
      %950 = vmatprep.subr.bf16.mxu0 0
      %951 = vmatpush1.bf16.xpose.msra.mxu0 0
      %952 = vmatprep.subr.bf16.mxu0 0
      %953 = vmatpush1.bf16.xpose.msra.mxu0 0
      %954 = vmatprep.mubr.bf16.mxu0 0
      %955 = vmatmul.mubr.bf16.gmra.mrb[0].mxu0 %v920
      %v956 = vpop.f32.mrb[0].mxu0
      %v957 = vadd.f32 0.0, %v956
      %v958 = vpop.f32.mrb[0].mxu0
      %v959 = vpop.f32.mrb[0].mxu0
      %v960 = vpop.f32.mrb[0].mxu0
      %961 = vdwg.mxu0
      %v962 = vsel %vm629, %v957, -inf
      %963 = vmax.xlane.f32.xlu0 %v962
      %v964 = vpop.xlane.xlu0 %963
      %v965 = vsub.f32 %v957, %v964
      %v966 = vmul.f32 %v965, 1.442695
      %v967 = vpow.pop %v966
      %v968 = vsel %vm629, %v967, 0.0
      %969 = vadd.xlane.f32.xlu0 %v968
      %v970 = vpop.xlane.xlu0 %969
      %v971 = vrcp.pop %v970
      %v972 = vmul.f32 %v967, %v971
      %v973 = vmul.f32 %v567, %v916
      %v974 = vpack.c.bf16 %v973, %v973
      %v975 = vpack.c.bf16 %v972, %v972
      %v977 = vsel %vm629, %v975, 0
      %v980 = vsel %vm711, %v974, 0
      %982 = vmatprep.subr.bf16.mxu0 0
      %983 = vmatpush1.bf16.msra.mxu0 %v980
      %984 = vmatprep.subr.bf16.mxu0 0
      %985 = vmatpush1.bf16.msra.mxu0 0
      %986 = vmatprep.subr.bf16.mxu0 0
      %987 = vmatpush1.bf16.msra.mxu0 0
      %988 = vmatprep.subr.bf16.mxu0 0
      %989 = vmatpush1.bf16.msra.mxu0 0
      %990 = vmatprep.subr.bf16.mxu0 0
      %991 = vmatpush1.bf16.msra.mxu0 0
      %992 = vmatprep.subr.bf16.mxu0 0
      %993 = vmatpush1.bf16.msra.mxu0 0
      %994 = vmatprep.subr.bf16.mxu0 0
      %995 = vmatpush1.bf16.msra.mxu0 0
      %996 = vmatprep.subr.bf16.mxu0 0
      %997 = vmatpush1.bf16.msra.mxu0 0
      %998 = vmatprep.subr.bf16.mxu0 0
      %999 = vmatpush1.bf16.msra.mxu0 0
      %1000 = vmatprep.subr.bf16.mxu0 0
      %1001 = vmatpush1.bf16.msra.mxu0 0
      %1002 = vmatprep.subr.bf16.mxu0 0
      %1003 = vmatpush1.bf16.msra.mxu0 0
      %1004 = vmatprep.subr.bf16.mxu0 0
      %1005 = vmatpush1.bf16.msra.mxu0 0
      %1006 = vmatprep.subr.bf16.mxu0 0
      %1007 = vmatpush1.bf16.msra.mxu0 0
      %1008 = vmatprep.subr.bf16.mxu0 0
      %1009 = vmatpush1.bf16.msra.mxu0 0
      %1010 = vmatprep.subr.bf16.mxu0 0
      %1011 = vmatpush1.bf16.msra.mxu0 0
      %1012 = vmatprep.subr.bf16.mxu0 0
      %1013 = vmatpush1.bf16.msra.mxu0 0
      %1014 = vmatprep.mubr.bf16.mxu0 0
      %1015 = vmatmul.mubr.bf16.gmra.mrb[0].mxu0 %v977
      %v1016 = vpop.f32.mrb[0].mxu0
      %v1017 = vadd.f32 0.0, %v1016
      %v1018 = vpop.f32.mrb[0].mxu0
      %v1019 = vpop.f32.mrb[0].mxu0
      %v1020 = vpop.f32.mrb[0].mxu0
      %1021 = vdwg.mxu0
      %v1022 = vadd.f32 %v911, %v1017
      %v1023 = vld [vmem:[%s1 + $0x4] sm:$0x1]
      %v1024 = vlaneseq
      %v1025 = vshrl.u32 %v1024, 7
      %v1026 = vsub.s32 0, %v1025
      %v1027 = vrot.slane %v1023, %v1026
      %v1028 = vmul.f32 %v571, %v1027
      %v1029 = vpack.c.bf16 %v1028, %v1028
      %v1031 = vsel %vm526, %v1029, 0
      %1033 = vmatprep.subr.bf16.mxu0 0
      %1034 = vmatpush1.bf16.xpose.msra.mxu0 %v587
      %1035 = vmatprep.subr.bf16.mxu0 0
      %1036 = vmatpush1.bf16.xpose.msra.mxu0 0
      %1037 = vmatprep.subr.bf16.mxu0 0
      %1038 = vmatpush1.bf16.xpose.msra.mxu0 0
      %1039 = vmatprep.subr.bf16.mxu0 0
      %1040 = vmatpush1.bf16.xpose.msra.mxu0 0
      %1041 = vmatprep.subr.bf16.mxu0 0
      %1042 = vmatpush1.bf16.xpose.msra.mxu0 0
      %1043 = vmatprep.subr.bf16.mxu0 0
      %1044 = vmatpush1.bf16.xpose.msra.mxu0 0
      %1045 = vmatprep.subr.bf16.mxu0 0
      %1046 = vmatpush1.bf16.xpose.msra.mxu0 0
      %1047 = vmatprep.subr.bf16.mxu0 0
      %1048 = vmatpush1.bf16.xpose.msra.mxu0 0
      %1049 = vmatprep.subr.bf16.mxu0 0
      %1050 = vmatpush1.bf16.xpose.msra.mxu0 0
      %1051 = vmatprep.subr.bf16.mxu0 0
      %1052 = vmatpush1.bf16.xpose.msra.mxu0 0
      %1053 = vmatprep.subr.bf16.mxu0 0
      %1054 = vmatpush1.bf16.xpose.msra.mxu0 0
      %1055 = vmatprep.subr.bf16.mxu0 0
      %1056 = vmatpush1.bf16.xpose.msra.mxu0 0
      %1057 = vmatprep.subr.bf16.mxu0 0
      %1058 = vmatpush1.bf16.xpose.msra.mxu0 0
      %1059 = vmatprep.subr.bf16.mxu0 0
      %1060 = vmatpush1.bf16.xpose.msra.mxu0 0
      %1061 = vmatprep.subr.bf16.mxu0 0
      %1062 = vmatpush1.bf16.xpose.msra.mxu0 0
      %1063 = vmatprep.subr.bf16.mxu0 0
      %1064 = vmatpush1.bf16.xpose.msra.mxu0 0
      %1065 = vmatprep.mubr.bf16.mxu0 0
      %1066 = vmatmul.mubr.bf16.gmra.mrb[0].mxu0 %v1031
      %v1067 = vpop.f32.mrb[0].mxu0
      %v1068 = vadd.f32 0.0, %v1067
      %v1069 = vpop.f32.mrb[0].mxu0
      %v1070 = vpop.f32.mrb[0].mxu0
      %v1071 = vpop.f32.mrb[0].mxu0
      %1072 = vdwg.mxu0
      %v1073 = vsel %vm629, %v1068, -inf
      %1074 = vmax.xlane.f32.xlu0 %v1073
      %v1075 = vpop.xlane.xlu0 %1074
      %v1076 = vsub.f32 %v1068, %v1075
      %v1077 = vmul.f32 %v1076, 1.442695
      %v1078 = vpow.pop %v1077
      %v1079 = vsel %vm629, %v1078, 0.0
      %1080 = vadd.xlane.f32.xlu0 %v1079
      %v1081 = vpop.xlane.xlu0 %1080
      %v1082 = vrcp.pop %v1081
      %v1083 = vmul.f32 %v1078, %v1082
      %v1084 = vmul.f32 %v567, %v1027
      %v1085 = vpack.c.bf16 %v1084, %v1084
      %v1086 = vpack.c.bf16 %v1083, %v1083
      %v1088 = vsel %vm629, %v1086, 0
      %v1091 = vsel %vm711, %v1085, 0
      %1093 = vmatprep.subr.bf16.mxu0 0
      %1094 = vmatpush1.bf16.msra.mxu0 %v1091
      %1095 = vmatprep.subr.bf16.mxu0 0
      %1096 = vmatpush1.bf16.msra.mxu0 0
      %1097 = vmatprep.subr.bf16.mxu0 0
      %1098 = vmatpush1.bf16.msra.mxu0 0
      %1099 = vmatprep.subr.bf16.mxu0 0
      %1100 = vmatpush1.bf16.msra.mxu0 0
      %1101 = vmatprep.subr.bf16.mxu0 0
      %1102 = vmatpush1.bf16.msra.mxu0 0
      %1103 = vmatprep.subr.bf16.mxu0 0
      %1104 = vmatpush1.bf16.msra.mxu0 0
      %1105 = vmatprep.subr.bf16.mxu0 0
      %1106 = vmatpush1.bf16.msra.mxu0 0
      %1107 = vmatprep.subr.bf16.mxu0 0
      %1108 = vmatpush1.bf16.msra.mxu0 0
      %1109 = vmatprep.subr.bf16.mxu0 0
      %1110 = vmatpush1.bf16.msra.mxu0 0
      %1111 = vmatprep.subr.bf16.mxu0 0
      %1112 = vmatpush1.bf16.msra.mxu0 0
      %1113 = vmatprep.subr.bf16.mxu0 0
      %1114 = vmatpush1.bf16.msra.mxu0 0
      %1115 = vmatprep.subr.bf16.mxu0 0
      %1116 = vmatpush1.bf16.msra.mxu0 0
      %1117 = vmatprep.subr.bf16.mxu0 0
      %1118 = vmatpush1.bf16.msra.mxu0 0
      %1119 = vmatprep.subr.bf16.mxu0 0
      %1120 = vmatpush1.bf16.msra.mxu0 0
      %1121 = vmatprep.subr.bf16.mxu0 0
      %1122 = vmatpush1.bf16.msra.mxu0 0
      %1123 = vmatprep.subr.bf16.mxu0 0
      %1124 = vmatpush1.bf16.msra.mxu0 0
      %1125 = vmatprep.mubr.bf16.mxu0 0
      %1126 = vmatmul.mubr.bf16.gmra.mrb[0].mxu0 %v1088
      %v1127 = vpop.f32.mrb[0].mxu0
      %v1128 = vadd.f32 0.0, %v1127
      %v1129 = vpop.f32.mrb[0].mxu0
      %v1130 = vpop.f32.mrb[0].mxu0
      %v1131 = vpop.f32.mrb[0].mxu0
      %1132 = vdwg.mxu0
      %v1133 = vadd.f32 %v1022, %v1128
      %v1134 = vld [vmem:[%s1 + $0x5] sm:$0x1]
      %v1135 = vlaneseq
      %v1136 = vshrl.u32 %v1135, 7
      %v1137 = vsub.s32 0, %v1136
      %v1138 = vrot.slane %v1134, %v1137
      %v1139 = vmul.f32 %v571, %v1138
      %v1140 = vpack.c.bf16 %v1139, %v1139
      %v1142 = vsel %vm526, %v1140, 0
      %1144 = vmatprep.subr.bf16.mxu0 0
      %1145 = vmatpush1.bf16.xpose.msra.mxu0 %v587
      %1146 = vmatprep.subr.bf16.mxu0 0
      %1147 = vmatpush1.bf16.xpose.msra.mxu0 0
      %1148 = vmatprep.subr.bf16.mxu0 0
      %1149 = vmatpush1.bf16.xpose.msra.mxu0 0
      %1150 = vmatprep.subr.bf16.mxu0 0
      %1151 = vmatpush1.bf16.xpose.msra.mxu0 0
      %1152 = vmatprep.subr.bf16.mxu0 0
      %1153 = vmatpush1.bf16.xpose.msra.mxu0 0
      %1154 = vmatprep.subr.bf16.mxu0 0
      %1155 = vmatpush1.bf16.xpose.msra.mxu0 0
      %1156 = vmatprep.subr.bf16.mxu0 0
      %1157 = vmatpush1.bf16.xpose.msra.mxu0 0
      %1158 = vmatprep.subr.bf16.mxu0 0
      %1159 = vmatpush1.bf16.xpose.msra.mxu0 0
      %1160 = vmatprep.subr.bf16.mxu0 0
      %1161 = vmatpush1.bf16.xpose.msra.mxu0 0
      %1162 = vmatprep.subr.bf16.mxu0 0
      %1163 = vmatpush1.bf16.xpose.msra.mxu0 0
      %1164 = vmatprep.subr.bf16.mxu0 0
      %1165 = vmatpush1.bf16.xpose.msra.mxu0 0
      %1166 = vmatprep.subr.bf16.mxu0 0
      %1167 = vmatpush1.bf16.xpose.msra.mxu0 0
      %1168 = vmatprep.subr.bf16.mxu0 0
      %1169 = vmatpush1.bf16.xpose.msra.mxu0 0
      %1170 = vmatprep.subr.bf16.mxu0 0
      %1171 = vmatpush1.bf16.xpose.msra.mxu0 0
      %1172 = vmatprep.subr.bf16.mxu0 0
      %1173 = vmatpush1.bf16.xpose.msra.mxu0 0
      %1174 = vmatprep.subr.bf16.mxu0 0
      %1175 = vmatpush1.bf16.xpose.msra.mxu0 0
      %1176 = vmatprep.mubr.bf16.mxu0 0
      %1177 = vmatmul.mubr.bf16.gmra.mrb[0].mxu0 %v1142
      %v1178 = vpop.f32.mrb[0].mxu0
      %v1179 = vadd.f32 0.0, %v1178
      %v1180 = vpop.f32.mrb[0].mxu0
      %v1181 = vpop.f32.mrb[0].mxu0
      %v1182 = vpop.f32.mrb[0].mxu0
      %1183 = vdwg.mxu0
      %v1184 = vsel %vm629, %v1179, -inf
      %1185 = vmax.xlane.f32.xlu0 %v1184
      %v1186 = vpop.xlane.xlu0 %1185
      %v1187 = vsub.f32 %v1179, %v1186
      %v1188 = vmul.f32 %v1187, 1.442695
      %v1189 = vpow.pop %v1188
      %v1190 = vsel %vm629, %v1189, 0.0
      %1191 = vadd.xlane.f32.xlu0 %v1190
      %v1192 = vpop.xlane.xlu0 %1191
      %v1193 = vrcp.pop %v1192
      %v1194 = vmul.f32 %v1189, %v1193
      %v1195 = vmul.f32 %v567, %v1138
      %v1196 = vpack.c.bf16 %v1195, %v1195
      %v1197 = vpack.c.bf16 %v1194, %v1194
      %v1199 = vsel %vm629, %v1197, 0
      %v1202 = vsel %vm711, %v1196, 0
      %1204 = vmatprep.subr.bf16.mxu0 0
      %1205 = vmatpush1.bf16.msra.mxu0 %v1202
      %1206 = vmatprep.subr.bf16.mxu0 0
      %1207 = vmatpush1.bf16.msra.mxu0 0
      %1208 = vmatprep.subr.bf16.mxu0 0
      %1209 = vmatpush1.bf16.msra.mxu0 0
      %1210 = vmatprep.subr.bf16.mxu0 0
      %1211 = vmatpush1.bf16.msra.mxu0 0
      %1212 = vmatprep.subr.bf16.mxu0 0
      %1213 = vmatpush1.bf16.msra.mxu0 0
      %1214 = vmatprep.subr.bf16.mxu0 0
      %1215 = vmatpush1.bf16.msra.mxu0 0
      %1216 = vmatprep.subr.bf16.mxu0 0
      %1217 = vmatpush1.bf16.msra.mxu0 0
      %1218 = vmatprep.subr.bf16.mxu0 0
      %1219 = vmatpush1.bf16.msra.mxu0 0
      %1220 = vmatprep.subr.bf16.mxu0 0
      %1221 = vmatpush1.bf16.msra.mxu0 0
      %1222 = vmatprep.subr.bf16.mxu0 0
      %1223 = vmatpush1.bf16.msra.mxu0 0
      %1224 = vmatprep.subr.bf16.mxu0 0
      %1225 = vmatpush1.bf16.msra.mxu0 0
      %1226 = vmatprep.subr.bf16.mxu0 0
      %1227 = vmatpush1.bf16.msra.mxu0 0
      %1228 = vmatprep.subr.bf16.mxu0 0
      %1229 = vmatpush1.bf16.msra.mxu0 0
      %1230 = vmatprep.subr.bf16.mxu0 0
      %1231 = vmatpush1.bf16.msra.mxu0 0
      %1232 = vmatprep.subr.bf16.mxu0 0
      %1233 = vmatpush1.bf16.msra.mxu0 0
      %1234 = vmatprep.subr.bf16.mxu0 0
      %1235 = vmatpush1.bf16.msra.mxu0 0
      %1236 = vmatprep.mubr.bf16.mxu0 0
      %1237 = vmatmul.mubr.bf16.gmra.mrb[0].mxu0 %v1199
      %v1238 = vpop.f32.mrb[0].mxu0
      %v1239 = vadd.f32 0.0, %v1238
      %v1240 = vpop.f32.mrb[0].mxu0
      %v1241 = vpop.f32.mrb[0].mxu0
      %v1242 = vpop.f32.mrb[0].mxu0
      %1243 = vdwg.mxu0
      %v1244 = vadd.f32 %v1133, %v1239
      %v1245 = vld [vmem:[%s1 + $0x6] sm:$0x1]
      %v1246 = vlaneseq
      %v1247 = vshrl.u32 %v1246, 7
      %v1248 = vsub.s32 0, %v1247
      %v1249 = vrot.slane %v1245, %v1248
      %v1250 = vmul.f32 %v571, %v1249
      %v1251 = vpack.c.bf16 %v1250, %v1250
      %v1253 = vsel %vm526, %v1251, 0
      %1255 = vmatprep.subr.bf16.mxu0 0
      %1256 = vmatpush1.bf16.xpose.msra.mxu0 %v587
      %1257 = vmatprep.subr.bf16.mxu0 0
      %1258 = vmatpush1.bf16.xpose.msra.mxu0 0
      %1259 = vmatprep.subr.bf16.mxu0 0
      %1260 = vmatpush1.bf16.xpose.msra.mxu0 0
      %1261 = vmatprep.subr.bf16.mxu0 0
      %1262 = vmatpush1.bf16.xpose.msra.mxu0 0
      %1263 = vmatprep.subr.bf16.mxu0 0
      %1264 = vmatpush1.bf16.xpose.msra.mxu0 0
      %1265 = vmatprep.subr.bf16.mxu0 0
      %1266 = vmatpush1.bf16.xpose.msra.mxu0 0
      %1267 = vmatprep.subr.bf16.mxu0 0
      %1268 = vmatpush1.bf16.xpose.msra.mxu0 0
      %1269 = vmatprep.subr.bf16.mxu0 0
      %1270 = vmatpush1.bf16.xpose.msra.mxu0 0
      %1271 = vmatprep.subr.bf16.mxu0 0
      %1272 = vmatpush1.bf16.xpose.msra.mxu0 0
      %1273 = vmatprep.subr.bf16.mxu0 0
      %1274 = vmatpush1.bf16.xpose.msra.mxu0 0
      %1275 = vmatprep.subr.bf16.mxu0 0
      %1276 = vmatpush1.bf16.xpose.msra.mxu0 0
      %1277 = vmatprep.subr.bf16.mxu0 0
      %1278 = vmatpush1.bf16.xpose.msra.mxu0 0
      %1279 = vmatprep.subr.bf16.mxu0 0
      %1280 = vmatpush1.bf16.xpose.msra.mxu0 0
      %1281 = vmatprep.subr.bf16.mxu0 0
      %1282 = vmatpush1.bf16.xpose.msra.mxu0 0
      %1283 = vmatprep.subr.bf16.mxu0 0
      %1284 = vmatpush1.bf16.xpose.msra.mxu0 0
      %1285 = vmatprep.subr.bf16.mxu0 0
      %1286 = vmatpush1.bf16.xpose.msra.mxu0 0
      %1287 = vmatprep.mubr.bf16.mxu0 0
      %1288 = vmatmul.mubr.bf16.gmra.mrb[0].mxu0 %v1253
      %v1289 = vpop.f32.mrb[0].mxu0
      %v1290 = vadd.f32 0.0, %v1289
      %v1291 = vpop.f32.mrb[0].mxu0
      %v1292 = vpop.f32.mrb[0].mxu0
      %v1293 = vpop.f32.mrb[0].mxu0
      %1294 = vdwg.mxu0
      %v1295 = vsel %vm629, %v1290, -inf
      %1296 = vmax.xlane.f32.xlu0 %v1295
      %v1297 = vpop.xlane.xlu0 %1296
      %v1298 = vsub.f32 %v1290, %v1297
      %v1299 = vmul.f32 %v1298, 1.442695
      %v1300 = vpow.pop %v1299
      %v1301 = vsel %vm629, %v1300, 0.0
      %1302 = vadd.xlane.f32.xlu0 %v1301
      %v1303 = vpop.xlane.xlu0 %1302
      %v1304 = vrcp.pop %v1303
      %v1305 = vmul.f32 %v1300, %v1304
      %v1306 = vmul.f32 %v567, %v1249
      %v1307 = vpack.c.bf16 %v1306, %v1306
      %v1308 = vpack.c.bf16 %v1305, %v1305
      %v1310 = vsel %vm629, %v1308, 0
      %v1313 = vsel %vm711, %v1307, 0
      %1315 = vmatprep.subr.bf16.mxu0 0
      %1316 = vmatpush1.bf16.msra.mxu0 %v1313
      %1317 = vmatprep.subr.bf16.mxu0 0
      %1318 = vmatpush1.bf16.msra.mxu0 0
      %1319 = vmatprep.subr.bf16.mxu0 0
      %1320 = vmatpush1.bf16.msra.mxu0 0
      %1321 = vmatprep.subr.bf16.mxu0 0
      %1322 = vmatpush1.bf16.msra.mxu0 0
      %1323 = vmatprep.subr.bf16.mxu0 0
      %1324 = vmatpush1.bf16.msra.mxu0 0
      %1325 = vmatprep.subr.bf16.mxu0 0
      %1326 = vmatpush1.bf16.msra.mxu0 0
      %1327 = vmatprep.subr.bf16.mxu0 0
      %1328 = vmatpush1.bf16.msra.mxu0 0
      %1329 = vmatprep.subr.bf16.mxu0 0
      %1330 = vmatpush1.bf16.msra.mxu0 0
      %1331 = vmatprep.subr.bf16.mxu0 0
      %1332 = vmatpush1.bf16.msra.mxu0 0
      %1333 = vmatprep.subr.bf16.mxu0 0
      %1334 = vmatpush1.bf16.msra.mxu0 0
      %1335 = vmatprep.subr.bf16.mxu0 0
      %1336 = vmatpush1.bf16.msra.mxu0 0
      %1337 = vmatprep.subr.bf16.mxu0 0
      %1338 = vmatpush1.bf16.msra.mxu0 0
      %1339 = vmatprep.subr.bf16.mxu0 0
      %1340 = vmatpush1.bf16.msra.mxu0 0
      %1341 = vmatprep.subr.bf16.mxu0 0
      %1342 = vmatpush1.bf16.msra.mxu0 0
      %1343 = vmatprep.subr.bf16.mxu0 0
      %1344 = vmatpush1.bf16.msra.mxu0 0
      %1345 = vmatprep.subr.bf16.mxu0 0
      %1346 = vmatpush1.bf16.msra.mxu0 0
      %1347 = vmatprep.mubr.bf16.mxu0 0
      %1348 = vmatmul.mubr.bf16.gmra.mrb[0].mxu0 %v1310
      %v1349 = vpop.f32.mrb[0].mxu0
      %v1350 = vadd.f32 0.0, %v1349
      %v1351 = vpop.f32.mrb[0].mxu0
      %v1352 = vpop.f32.mrb[0].mxu0
      %v1353 = vpop.f32.mrb[0].mxu0
      %1354 = vdwg.mxu0
      %v1355 = vadd.f32 %v1244, %v1350
      %v1356 = vld [vmem:[%s1 + $0x7] sm:$0x1]
      %v1357 = vlaneseq
      %v1358 = vshrl.u32 %v1357, 7
      %v1359 = vsub.s32 0, %v1358
      %v1360 = vrot.slane %v1356, %v1359
      %v1361 = vmul.f32 %v571, %v1360
      %v1362 = vpack.c.bf16 %v1361, %v1361
      %v1364 = vsel %vm526, %v1362, 0
      %1366 = vmatprep.subr.bf16.mxu0 0
      %1367 = vmatpush1.bf16.xpose.msra.mxu0 %v587
      %1368 = vmatprep.subr.bf16.mxu0 0
      %1369 = vmatpush1.bf16.xpose.msra.mxu0 0
      %1370 = vmatprep.subr.bf16.mxu0 0
      %1371 = vmatpush1.bf16.xpose.msra.mxu0 0
      %1372 = vmatprep.subr.bf16.mxu0 0
      %1373 = vmatpush1.bf16.xpose.msra.mxu0 0
      %1374 = vmatprep.subr.bf16.mxu0 0
      %1375 = vmatpush1.bf16.xpose.msra.mxu0 0
      %1376 = vmatprep.subr.bf16.mxu0 0
      %1377 = vmatpush1.bf16.xpose.msra.mxu0 0
      %1378 = vmatprep.subr.bf16.mxu0 0
      %1379 = vmatpush1.bf16.xpose.msra.mxu0 0
      %1380 = vmatprep.subr.bf16.mxu0 0
      %1381 = vmatpush1.bf16.xpose.msra.mxu0 0
      %1382 = vmatprep.subr.bf16.mxu0 0
      %1383 = vmatpush1.bf16.xpose.msra.mxu0 0
      %1384 = vmatprep.subr.bf16.mxu0 0
      %1385 = vmatpush1.bf16.xpose.msra.mxu0 0
      %1386 = vmatprep.subr.bf16.mxu0 0
      %1387 = vmatpush1.bf16.xpose.msra.mxu0 0
      %1388 = vmatprep.subr.bf16.mxu0 0
      %1389 = vmatpush1.bf16.xpose.msra.mxu0 0
      %1390 = vmatprep.subr.bf16.mxu0 0
      %1391 = vmatpush1.bf16.xpose.msra.mxu0 0
      %1392 = vmatprep.subr.bf16.mxu0 0
      %1393 = vmatpush1.bf16.xpose.msra.mxu0 0
      %1394 = vmatprep.subr.bf16.mxu0 0
      %1395 = vmatpush1.bf16.xpose.msra.mxu0 0
      %1396 = vmatprep.subr.bf16.mxu0 0
      %1397 = vmatpush1.bf16.xpose.msra.mxu0 0
      %1398 = vmatprep.mubr.bf16.mxu0 0
      %1399 = vmatmul.mubr.bf16.gmra.mrb[0].mxu0 %v1364
      %v1400 = vpop.f32.mrb[0].mxu0
      %v1401 = vadd.f32 0.0, %v1400
      %v1402 = vpop.f32.mrb[0].mxu0
      %v1403 = vpop.f32.mrb[0].mxu0
      %v1404 = vpop.f32.mrb[0].mxu0
      %1405 = vdwg.mxu0
      %v1406 = vsel %vm629, %v1401, -inf
      %1407 = vmax.xlane.f32.xlu0 %v1406
      %v1408 = vpop.xlane.xlu0 %1407
      %v1409 = vsub.f32 %v1401, %v1408
      %v1410 = vmul.f32 %v1409, 1.442695
      %v1411 = vpow.pop %v1410
      %v1412 = vsel %vm629, %v1411, 0.0
      %1413 = vadd.xlane.f32.xlu0 %v1412
      %v1414 = vpop.xlane.xlu0 %1413
      %v1415 = vrcp.pop %v1414
      %v1416 = vmul.f32 %v1411, %v1415
      %v1417 = vmul.f32 %v567, %v1360
      %v1418 = vpack.c.bf16 %v1417, %v1417
      %v1419 = vpack.c.bf16 %v1416, %v1416
      %v1421 = vsel %vm629, %v1419, 0
      %v1424 = vsel %vm711, %v1418, 0
      %1426 = vmatprep.subr.bf16.mxu0 0
      %1427 = vmatpush1.bf16.msra.mxu0 %v1424
      %1428 = vmatprep.subr.bf16.mxu0 0
      %1429 = vmatpush1.bf16.msra.mxu0 0
      %1430 = vmatprep.subr.bf16.mxu0 0
      %1431 = vmatpush1.bf16.msra.mxu0 0
      %1432 = vmatprep.subr.bf16.mxu0 0
      %1433 = vmatpush1.bf16.msra.mxu0 0
      %1434 = vmatprep.subr.bf16.mxu0 0
      %1435 = vmatpush1.bf16.msra.mxu0 0
      %1436 = vmatprep.subr.bf16.mxu0 0
      %1437 = vmatpush1.bf16.msra.mxu0 0
      %1438 = vmatprep.subr.bf16.mxu0 0
      %1439 = vmatpush1.bf16.msra.mxu0 0
      %1440 = vmatprep.subr.bf16.mxu0 0
      %1441 = vmatpush1.bf16.msra.mxu0 0
      %1442 = vmatprep.subr.bf16.mxu0 0
      %1443 = vmatpush1.bf16.msra.mxu0 0
      %1444 = vmatprep.subr.bf16.mxu0 0
      %1445 = vmatpush1.bf16.msra.mxu0 0
      %1446 = vmatprep.subr.bf16.mxu0 0
      %1447 = vmatpush1.bf16.msra.mxu0 0
      %1448 = vmatprep.subr.bf16.mxu0 0
      %1449 = vmatpush1.bf16.msra.mxu0 0
      %1450 = vmatprep.subr.bf16.mxu0 0
      %1451 = vmatpush1.bf16.msra.mxu0 0
      %1452 = vmatprep.subr.bf16.mxu0 0
      %1453 = vmatpush1.bf16.msra.mxu0 0
      %1454 = vmatprep.subr.bf16.mxu0 0
      %1455 = vmatpush1.bf16.msra.mxu0 0
      %1456 = vmatprep.subr.bf16.mxu0 0
      %1457 = vmatpush1.bf16.msra.mxu0 0
      %1458 = vmatprep.mubr.bf16.mxu0 0
      %1459 = vmatmul.mubr.bf16.gmra.mrb[0].mxu0 %v1421
      %v1460 = vpop.f32.mrb[0].mxu0
      %v1461 = vadd.f32 0.0, %v1460
      %v1462 = vpop.f32.mrb[0].mxu0
      %v1463 = vpop.f32.mrb[0].mxu0
      %v1464 = vpop.f32.mrb[0].mxu0
      %1465 = vdwg.mxu0
      %v1466 = vadd.f32 %v1355, %v1461
      %v1467 = vpack.c.bf16 %v1466, %v1466
      %v1468 = vld [vmem:[%s4] sm:$0xf]
      %v1469 = vld [vmem:[%s4 + $0x4] sm:$0xf]
      %v1470 = vld [vmem:[%s4 + $0x8] sm:$0xf]
      %v1471 = vld [vmem:[%s4 + $0xc] sm:$0xf]
      %v1472 = vld [vmem:[%s4 + $0x10] sm:$0xf]
      %v1473 = vld [vmem:[%s4 + $0x14] sm:$0xf]
      %v1474 = vld [vmem:[%s4 + $0x18] sm:$0xf]
      %v1475 = vld [vmem:[%s4 + $0x1c] sm:$0xf]
      %v1476 = vld [vmem:[%s5] sm:$0x1]
      %v1478 = vlaneseq
      %v1479 = vshrl.u32 %v1478, 7
      %v1480 = vsub.s32 0, %v1479
      %v1481 = vrot.slane %v1476, %v1480
      %v1491 = vunpack.c.l.b16 %v1468
      %v1492 = vunpack.c.l.b16 %v1469
      %v1493 = vunpack.c.l.b16 %v1470
      %v1494 = vunpack.c.l.b16 %v1471
      %v1495 = vunpack.c.l.b16 %v1472
      %v1496 = vunpack.c.l.b16 %v1473
      %v1497 = vunpack.c.l.b16 %v1474
      %v1498 = vunpack.c.l.b16 %v1475
      %v1499 = vpack.c.b16 %v1492, %v1491
      %v1500 = vpack.c.b16 %v1494, %v1493
      %v1501 = vpack.c.b16 %v1496, %v1495
      %v1502 = vpack.c.b16 %v1498, %v1497
      %v1508 = vsel %vm526, %v1467, 0
      %1510 = vmatprep.subr.bf16.mxu0 0
      %1511 = vmatpush1.bf16.msra.mxu0 %v1499
      %1512 = vmatprep.subr.bf16.mxu0 0
      %1513 = vmatpush1.bf16.msra.mxu0 %v1500
      %1514 = vmatprep.subr.bf16.mxu0 0
      %1515 = vmatpush1.bf16.msra.mxu0 %v1501
      %1516 = vmatprep.subr.bf16.mxu0 0
      %1517 = vmatpush1.bf16.msra.mxu0 %v1502
      %1518 = vmatprep.subr.bf16.mxu0 0
      %1519 = vmatpush1.bf16.msra.mxu0 0
      %1520 = vmatprep.subr.bf16.mxu0 0
      %1521 = vmatpush1.bf16.msra.mxu0 0
      %1522 = vmatprep.subr.bf16.mxu0 0
      %1523 = vmatpush1.bf16.msra.mxu0 0
      %1524 = vmatprep.subr.bf16.mxu0 0
      %1525 = vmatpush1.bf16.msra.mxu0 0
      %1526 = vmatprep.subr.bf16.mxu0 0
      %1527 = vmatpush1.bf16.msra.mxu0 0
      %1528 = vmatprep.subr.bf16.mxu0 0
      %1529 = vmatpush1.bf16.msra.mxu0 0
      %1530 = vmatprep.subr.bf16.mxu0 0
      %1531 = vmatpush1.bf16.msra.mxu0 0
      %1532 = vmatprep.subr.bf16.mxu0 0
      %1533 = vmatpush1.bf16.msra.mxu0 0
      %1534 = vmatprep.subr.bf16.mxu0 0
      %1535 = vmatpush1.bf16.msra.mxu0 0
      %1536 = vmatprep.subr.bf16.mxu0 0
      %1537 = vmatpush1.bf16.msra.mxu0 0
      %1538 = vmatprep.subr.bf16.mxu0 0
      %1539 = vmatpush1.bf16.msra.mxu0 0
      %1540 = vmatprep.subr.bf16.mxu0 0
      %1541 = vmatpush1.bf16.msra.mxu0 0
      %1542 = vmatprep.mubr.bf16.mxu0 0
      %1543 = vmatmul.mubr.bf16.gmra.mrb[0].mxu0 %v1508
      %v1544 = vpop.f32.mrb[0].mxu0
      %v1545 = vadd.f32 %v1481, %v1544
      %v1546 = vpop.f32.mrb[0].mxu0
      %v1547 = vpop.f32.mrb[0].mxu0
      %v1548 = vpop.f32.mrb[0].mxu0
      %1549 = vdwg.mxu0
      %v1550 = vadd.f32 %v464, %v1545
      %v1551 = vld [vmem:[%s6] sm:$0x1]
      %v1552 = vld [vmem:[%s7] sm:$0x1]
      %v1553 = vsel %vm526, %v1550, 0.0
      %1554 = vadd.xlane.f32.xlu0 %v1553
      %v1555 = vpop.xlane.xlu0 %1554
      %v1556 = vrcp.pop 64.0
      %v1557 = vmul.f32 %v1555, %v1556
      %v1558 = vsub.f32 %v1550, %v1557
      %v1559 = vmul.f32 %v1558, %v1558
      %v1560 = vsel %vm526, %v1559, 0.0
      %1561 = vadd.xlane.f32.xlu0 %v1560
      %v1562 = vpop.xlane.xlu0 %1561
      %v1563 = vmul.f32 %v1562, %v1556
      %v1564 = vadd.f32 %v1563, 1e-05
      %v1565 = vrsqrt.pop %v1564
      %v1566 = vmul.f32 %v1558, %v1565
      %v1568 = vlaneseq
      %v1569 = vshrl.u32 %v1568, 7
      %v1570 = vsub.s32 0, %v1569
      %v1571 = vrot.slane %v1551, %v1570
      %v1573 = vmul.f32 %v1566, %v1571
      %v1575 = vlaneseq
      %v1576 = vshrl.u32 %v1575, 7
      %v1577 = vsub.s32 0, %v1576
      %v1578 = vrot.slane %v1552, %v1577
      %v1580 = vadd.f32 %v1573, %v1578
      %v1581 = vpack.c.bf16 %v1580, %v1580
      %v1582 = vld [vmem:[%s8] sm:$0xff]
      %v1583 = vld [vmem:[%s8 + $0x8] sm:$0xff]
      %v1584 = vld [vmem:[%s8 + $0x10] sm:$0xff]
      %v1585 = vld [vmem:[%s8 + $0x18] sm:$0xff]
      %v1586 = vld [vmem:[%s8 + $0x20] sm:$0xff]
      %v1587 = vld [vmem:[%s8 + $0x28] sm:$0xff]
      %v1588 = vld [vmem:[%s8 + $0x30] sm:$0xff]
      %v1589 = vld [vmem:[%s8 + $0x38] sm:$0xff]
      %v1590 = vld [vmem:[%s9] sm:$0x3]
      %v1592 = vlaneseq
      %v1593 = vshrl.u32 %v1592, 7
      %v1594 = vsub.s32 0, %v1593
      %v1595 = vrot.slane %v1590, %v1594
      %v1596 = vlaneseq
      %v1597 = vshrl.u32 %v1596, 7
      %v1598 = vsub.s32 1, %v1597
      %v1599 = vrot.slane %v1590, %v1598
      %v1610 = vunpack.c.l.b16 %v1582
      %v1611 = vunpack.c.h.b16 %v1582
      %v1612 = vunpack.c.l.b16 %v1583
      %v1613 = vunpack.c.h.b16 %v1583
      %v1614 = vunpack.c.l.b16 %v1584
      %v1615 = vunpack.c.h.b16 %v1584
      %v1616 = vunpack.c.l.b16 %v1585
      %v1617 = vunpack.c.h.b16 %v1585
      %v1618 = vunpack.c.l.b16 %v1586
      %v1619 = vunpack.c.h.b16 %v1586
      %v1620 = vunpack.c.l.b16 %v1587
      %v1621 = vunpack.c.h.b16 %v1587
      %v1622 = vunpack.c.l.b16 %v1588
      %v1623 = vunpack.c.h.b16 %v1588
      %v1624 = vunpack.c.l.b16 %v1589
      %v1625 = vunpack.c.h.b16 %v1589
      %v1626 = vpack.c.b16 %v1612, %v1610
      %v1627 = vpack.c.b16 %v1613, %v1611
      %v1628 = vpack.c.b16 %v1616, %v1614
      %v1629 = vpack.c.b16 %v1617, %v1615
      %v1630 = vpack.c.b16 %v1620, %v1618
      %v1631 = vpack.c.b16 %v1621, %v1619
      %v1632 = vpack.c.b16 %v1624, %v1622
      %v1633 = vpack.c.b16 %v1625, %v1623
      %v1643 = vsel %vm526, %v1581, 0
      %1645 = vmatprep.subr.bf16.mxu0 %v1627
      %1646 = vmatpush1.bf16.msra.mxu0 %v1626
      %1647 = vmatprep.subr.bf16.mxu0 %v1629
      %1648 = vmatpush1.bf16.msra.mxu0 %v1628
      %1649 = vmatprep.subr.bf16.mxu0 %v1631
      %1650 = vmatpush1.bf16.msra.mxu0 %v1630
      %1651 = vmatprep.subr.bf16.mxu0 %v1633
      %1652 = vmatpush1.bf16.msra.mxu0 %v1632
      %1653 = vmatprep.subr.bf16.mxu0 0
      %1654 = vmatpush1.bf16.msra.mxu0 0
      %1655 = vmatprep.subr.bf16.mxu0 0
      %1656 = vmatpush1.bf16.msra.mxu0 0
      %1657 = vmatprep.subr.bf16.mxu0 0
      %1658 = vmatpush1.bf16.msra.mxu0 0
      %1659 = vmatprep.subr.bf16.mxu0 0
      %1660 = vmatpush1.bf16.msra.mxu0 0
      %1661 = vmatprep.subr.bf16.mxu0 0
      %1662 = vmatpush1.bf16.msra.mxu0 0
      %1663 = vmatprep.subr.bf16.mxu0 0
      %1664 = vmatpush1.bf16.msra.mxu0 0
      %1665 = vmatprep.subr.bf16.mxu0 0
      %1666 = vmatpush1.bf16.msra.mxu0 0
      %1667 = vmatprep.subr.bf16.mxu0 0
      %1668 = vmatpush1.bf16.msra.mxu0 0
      %1669 = vmatprep.subr.bf16.mxu0 0
      %1670 = vmatpush1.bf16.msra.mxu0 0
      %1671 = vmatprep.subr.bf16.mxu0 0
      %1672 = vmatpush1.bf16.msra.mxu0 0
      %1673 = vmatprep.subr.bf16.mxu0 0
      %1674 = vmatpush1.bf16.msra.mxu0 0
      %1675 = vmatprep.subr.bf16.mxu0 0
      %1676 = vmatpush1.bf16.msra.mxu0 0
      %1677 = vmatprep.mubr.bf16.mxu0 0
      %1678 = vmatmul.mubr.bf16.gmra.mrb[0].mxu0 %v1643
      %v1679 = vpop.f32.mrb[0].mxu0
      %v1680 = vadd.f32 %v1595, %v1679
      %v1681 = vpop.f32.mrb[0].mxu0
      %v1682 = vadd.f32 %v1599, %v1681
      %v1683 = vpop.f32.mrb[0].mxu0
      %v1684 = vpop.f32.mrb[0].mxu0
      %1685 = vdwg.mxu0
      %v1686 = vmul.f32 %v1680, 0.5
      %v1687 = vmul.f32 %v1682, 0.5
      %v1688 = vmul.f32 %v1680, 0.70710677
      %v1689 = vmul.f32 %v1682, 0.70710677
      %v1690 = vand.u32 2147483647, %v1688
      %v1691 = vand.u32 2147483647, %v1689
      %v1692 = vmul.f32 %v1690, 0.3275911
      %v1693 = vmul.f32 %v1691, 0.3275911
      %v1694 = vadd.f32 %v1692, 1.0
      %v1695 = vadd.f32 %v1693, 1.0
      %v1696 = vrcp.pop %v1694
      %v1697 = vmul.f32 1.0, %v1696
      %v1698 = vrcp.pop %v1695
      %v1699 = vmul.f32 1.0, %v1698
      %v1700 = vmul.f32 %v1697, 1.0614054
      %v1701 = vmul.f32 %v1699, 1.0614054
      %v1702 = vadd.f32 %v1700, -1.4531521
      %v1703 = vadd.f32 %v1701, -1.4531521
      %v1704 = vmul.f32 %v1702, %v1697
      %v1705 = vmul.f32 %v1703, %v1699
      %v1706 = vadd.f32 %v1704, 1.4214138
      %v1707 = vadd.f32 %v1705, 1.4214138
      %v1708 = vmul.f32 %v1706, %v1697
      %v1709 = vmul.f32 %v1707, %v1699
      %v1710 = vadd.f32 %v1708, -0.28449672
      %v1711 = vadd.f32 %v1709, -0.28449672
      %v1712 = vmul.f32 %v1710, %v1697
      %v1713 = vmul.f32 %v1711, %v1699
      %v1714 = vadd.f32 %v1712, 0.2548296
      %v1715 = vadd.f32 %v1713, 0.2548296
      %v1716 = vmul.f32 %v1714, %v1697
      %v1717 = vmul.f32 %v1715, %v1699
      %v1718 = vsub.f32 0.0, %v1690
      %v1719 = vsub.f32 0.0, %v1691
      %v1720 = vmul.f32 %v1718, %v1690
      %v1721 = vmul.f32 %v1719, %v1691
      %v1722 = vmul.f32 %v1720, 1.442695
      %v1723 = vpow.pop %v1722
      %v1724 = vmul.f32 %v1721, 1.442695
      %v1725 = vpow.pop %v1724
      %v1726 = vmul.f32 %v1716, %v1723
      %v1727 = vmul.f32 %v1717, %v1725
      %v1728 = vsub.f32 1.0, %v1726
      %v1729 = vsub.f32 1.0, %v1727
      %vm1730 = vcmp.ge.f32.partialorder %v1688, 0.0
      %vm1731 = vcmp.ge.f32.partialorder %v1689, 0.0
      %v1732 = vsub.f32 0.0, %v1728
      %v1733 = vsub.f32 0.0, %v1729
      %v1734 = vsel %vm1730, %v1728, %v1732
      %v1735 = vsel %vm1731, %v1729, %v1733
      %v1736 = vadd.f32 %v1734, 1.0
      %v1737 = vadd.f32 %v1735, 1.0
      %v1738 = vmul.f32 %v1686, %v1736
      %v1739 = vmul.f32 %v1687, %v1737
      %v1740 = vpack.c.bf16 %v1738, %v1738
      %v1741 = vpack.c.bf16 %v1739, %v1739
      %v1742 = vld [vmem:[%s10] sm:$0xf]
      %v1743 = vld [vmem:[%s10 + $0x4] sm:$0xf]
      %v1744 = vld [vmem:[%s10 + $0x8] sm:$0xf]
      %v1745 = vld [vmem:[%s10 + $0xc] sm:$0xf]
      %v1746 = vld [vmem:[%s10 + $0x10] sm:$0xf]
      %v1747 = vld [vmem:[%s10 + $0x14] sm:$0xf]
      %v1748 = vld [vmem:[%s10 + $0x18] sm:$0xf]
      %v1749 = vld [vmem:[%s10 + $0x1c] sm:$0xf]
      %v1750 = vld [vmem:[%s10 + $0x20] sm:$0xf]
      %v1751 = vld [vmem:[%s10 + $0x24] sm:$0xf]
      %v1752 = vld [vmem:[%s10 + $0x28] sm:$0xf]
      %v1753 = vld [vmem:[%s10 + $0x2c] sm:$0xf]
      %v1754 = vld [vmem:[%s10 + $0x30] sm:$0xf]
      %v1755 = vld [vmem:[%s10 + $0x34] sm:$0xf]
      %v1756 = vld [vmem:[%s10 + $0x38] sm:$0xf]
      %v1757 = vld [vmem:[%s10 + $0x3c] sm:$0xf]
      %v1758 = vld [vmem:[%s10 + $0x40] sm:$0xf]
      %v1759 = vld [vmem:[%s10 + $0x44] sm:$0xf]
      %v1760 = vld [vmem:[%s10 + $0x48] sm:$0xf]
      %v1761 = vld [vmem:[%s10 + $0x4c] sm:$0xf]
      %v1762 = vld [vmem:[%s10 + $0x50] sm:$0xf]
      %v1763 = vld [vmem:[%s10 + $0x54] sm:$0xf]
      %v1764 = vld [vmem:[%s10 + $0x58] sm:$0xf]
      %v1765 = vld [vmem:[%s10 + $0x5c] sm:$0xf]
      %v1766 = vld [vmem:[%s10 + $0x60] sm:$0xf]
      %v1767 = vld [vmem:[%s10 + $0x64] sm:$0xf]
      %v1768 = vld [vmem:[%s10 + $0x68] sm:$0xf]
      %v1769 = vld [vmem:[%s10 + $0x6c] sm:$0xf]
      %v1770 = vld [vmem:[%s10 + $0x70] sm:$0xf]
      %v1771 = vld [vmem:[%s10 + $0x74] sm:$0xf]
      %v1772 = vld [vmem:[%s10 + $0x78] sm:$0xf]
      %v1773 = vld [vmem:[%s10 + $0x7c] sm:$0xf]
      %v1774 = vld [vmem:[%s11] sm:$0x1]
      %v1776 = vlaneseq
      %v1777 = vshrl.u32 %v1776, 7
      %v1778 = vsub.s32 0, %v1777
      %v1779 = vrot.slane %v1774, %v1778
      %v1813 = vunpack.c.l.b16 %v1742
      %v1814 = vunpack.c.l.b16 %v1743
      %v1815 = vunpack.c.l.b16 %v1744
      %v1816 = vunpack.c.l.b16 %v1745
      %v1817 = vunpack.c.l.b16 %v1746
      %v1818 = vunpack.c.l.b16 %v1747
      %v1819 = vunpack.c.l.b16 %v1748
      %v1820 = vunpack.c.l.b16 %v1749
      %v1821 = vunpack.c.l.b16 %v1750
      %v1822 = vunpack.c.l.b16 %v1751
      %v1823 = vunpack.c.l.b16 %v1752
      %v1824 = vunpack.c.l.b16 %v1753
      %v1825 = vunpack.c.l.b16 %v1754
      %v1826 = vunpack.c.l.b16 %v1755
      %v1827 = vunpack.c.l.b16 %v1756
      %v1828 = vunpack.c.l.b16 %v1757
      %v1829 = vunpack.c.l.b16 %v1758
      %v1830 = vunpack.c.l.b16 %v1759
      %v1831 = vunpack.c.l.b16 %v1760
      %v1832 = vunpack.c.l.b16 %v1761
      %v1833 = vunpack.c.l.b16 %v1762
      %v1834 = vunpack.c.l.b16 %v1763
      %v1835 = vunpack.c.l.b16 %v1764
      %v1836 = vunpack.c.l.b16 %v1765
      %v1837 = vunpack.c.l.b16 %v1766
      %v1838 = vunpack.c.l.b16 %v1767
      %v1839 = vunpack.c.l.b16 %v1768
      %v1840 = vunpack.c.l.b16 %v1769
      %v1841 = vunpack.c.l.b16 %v1770
      %v1842 = vunpack.c.l.b16 %v1771
      %v1843 = vunpack.c.l.b16 %v1772
      %v1844 = vunpack.c.l.b16 %v1773
      %v1845 = vpack.c.b16 %v1814, %v1813
      %v1846 = vpack.c.b16 %v1816, %v1815
      %v1847 = vpack.c.b16 %v1818, %v1817
      %v1848 = vpack.c.b16 %v1820, %v1819
      %v1849 = vpack.c.b16 %v1822, %v1821
      %v1850 = vpack.c.b16 %v1824, %v1823
      %v1851 = vpack.c.b16 %v1826, %v1825
      %v1852 = vpack.c.b16 %v1828, %v1827
      %v1853 = vpack.c.b16 %v1830, %v1829
      %v1854 = vpack.c.b16 %v1832, %v1831
      %v1855 = vpack.c.b16 %v1834, %v1833
      %v1856 = vpack.c.b16 %v1836, %v1835
      %v1857 = vpack.c.b16 %v1838, %v1837
      %v1858 = vpack.c.b16 %v1840, %v1839
      %v1859 = vpack.c.b16 %v1842, %v1841
      %v1860 = vpack.c.b16 %v1844, %v1843
      %1877 = vmatprep.subr.bf16.mxu0 0
      %1878 = vmatpush1.bf16.msra.mxu0 %v1845
      %1879 = vmatprep.subr.bf16.mxu0 0
      %1880 = vmatpush1.bf16.msra.mxu0 %v1846
      %1881 = vmatprep.subr.bf16.mxu0 0
      %1882 = vmatpush1.bf16.msra.mxu0 %v1847
      %1883 = vmatprep.subr.bf16.mxu0 0
      %1884 = vmatpush1.bf16.msra.mxu0 %v1848
      %1885 = vmatprep.subr.bf16.mxu0 0
      %1886 = vmatpush1.bf16.msra.mxu0 %v1849
      %1887 = vmatprep.subr.bf16.mxu0 0
      %1888 = vmatpush1.bf16.msra.mxu0 %v1850
      %1889 = vmatprep.subr.bf16.mxu0 0
      %1890 = vmatpush1.bf16.msra.mxu0 %v1851
      %1891 = vmatprep.subr.bf16.mxu0 0
      %1892 = vmatpush1.bf16.msra.mxu0 %v1852
      %1893 = vmatprep.subr.bf16.mxu0 0
      %1894 = vmatpush1.bf16.msra.mxu0 %v1853
      %1895 = vmatprep.subr.bf16.mxu0 0
      %1896 = vmatpush1.bf16.msra.mxu0 %v1854
      %1897 = vmatprep.subr.bf16.mxu0 0
      %1898 = vmatpush1.bf16.msra.mxu0 %v1855
      %1899 = vmatprep.subr.bf16.mxu0 0
      %1900 = vmatpush1.bf16.msra.mxu0 %v1856
      %1901 = vmatprep.subr.bf16.mxu0 0
      %1902 = vmatpush1.bf16.msra.mxu0 %v1857
      %1903 = vmatprep.subr.bf16.mxu0 0
      %1904 = vmatpush1.bf16.msra.mxu0 %v1858
      %1905 = vmatprep.subr.bf16.mxu0 0
      %1906 = vmatpush1.bf16.msra.mxu0 %v1859
      %1907 = vmatprep.subr.bf16.mxu0 0
      %1908 = vmatpush1.bf16.msra.mxu0 %v1860
      %1909 = vmatprep.mubr.bf16.mxu0 %v1741
      %1910 = vmatmul.mubr.bf16.gmra.mrb[0].mxu0 %v1740
      %v1911 = vpop.f32.mrb[0].mxu0
      %v1912 = vadd.f32 %v1779, %v1911
      %v1913 = vpop.f32.mrb[0].mxu0
      %v1914 = vpop.f32.mrb[0].mxu0
      %v1915 = vpop.f32.mrb[0].mxu0
      %1916 = vdwg.mxu0
      %v1917 = vadd.f32 %v1580, %v1912
      %v1918 = vld [vmem:[%s12] sm:$0x1]
      %v1919 = vld [vmem:[%s13] sm:$0x1]
      %v1920 = vsel %vm526, %v1917, 0.0
      %1921 = vadd.xlane.f32.xlu0 %v1920
      %v1922 = vpop.xlane.xlu0 %1921
      %v1923 = vmul.f32 %v1922, %v1556
      %v1924 = vsub.f32 %v1917, %v1923
      %v1925 = vmul.f32 %v1924, %v1924
      %v1926 = vsel %vm526, %v1925, 0.0
      %1927 = vadd.xlane.f32.xlu0 %v1926
      %v1928 = vpop.xlane.xlu0 %1927
      %v1929 = vmul.f32 %v1928, %v1556
      %v1930 = vadd.f32 %v1929, 1e-05
      %v1931 = vrsqrt.pop %v1930
      %v1932 = vmul.f32 %v1924, %v1931
      %v1934 = vlaneseq
      %v1935 = vshrl.u32 %v1934, 7
      %v1936 = vsub.s32 0, %v1935
      %v1937 = vrot.slane %v1918, %v1936
      %v1939 = vmul.f32 %v1932, %v1937
      %v1941 = vlaneseq
      %v1942 = vshrl.u32 %v1941, 7
      %v1943 = vsub.s32 0, %v1942
      %v1944 = vrot.slane %v1919, %v1943
      %v1946 = vadd.f32 %v1939, %v1944
      %1947 = vst.msk [vmem:[%s462] sm:$0xff] %vm526, %v1946
      %p1948 = scmp.lt.s32.totalorder %s25, 1
      %s1949 = scalar_select %p1948, %s25, 1
      %s1950 = smul.addr %s1949, 8
      %s1951 = scalar_lea.vmem %s14, %s1950
      // Predicated region
      $region77: #{sensor_transformer_forward.7} parent=75 // pred_check
        %p1952 = pneg %p342
      $region78: #{sensor_transformer_forward.7} parent=75 // pred_check_branch
        %1954 = sbr.rel (%p1952) target = $region80
      $region79: #{sensor_transformer_forward.7} parent=75 // pred_region
        _
      $region80: #{sensor_transformer_forward.7} parent=75 // pred_fallthru
        _
    $region76: #{sensor_transformer_forward.7} parent=5 // pred_fallthru
      _
    %p1955 = scmp.le.s32.totalorder 2, %s20
    // Predicated region
    $region81: #{sensor_transformer_forward.7} parent=5 // pred_check
      %p1956 = pneg %p1955
    $region82: #{sensor_transformer_forward.7} parent=5 // pred_check_branch
      %1958 = sbr.rel (%p1956) target = $region84
    $region83: #{sensor_transformer_forward.7} parent=5 // pred_region
      %s1959 = ssub.s32 %s20, 2
      // Predicated region
      $region85: #{sensor_transformer_forward.7} parent=83 // pred_check
        %p1960 = pneg %p348
      $region86: #{sensor_transformer_forward.7} parent=83 // pred_check_branch
        %1962 = sbr.rel (%p1960) target = $region88
      $region87: #{sensor_transformer_forward.7} parent=83 // pred_region
        %p1963 = scmp.lt.s32.totalorder %s26, 1
        %s1964 = scalar_select %p1963, %s26, 1
        %s1965 = smul.addr %s1964, 8
        %s1966 = scalar_lea.vmem %s14, %s1965
      $region88: #{sensor_transformer_forward.7} parent=83 // pred_fallthru
        _
    $region84: #{sensor_transformer_forward.7} parent=5 // pred_fallthru
      _
  $region6: #{sensor_transformer_forward.7} parent=0 // loop_footer
    %s24 = sadd.s32 1, %s20
  $region7: #{sensor_transformer_forward.7} parent=0 // loop_footer_branch
    %19 = sbr.rel target = $region3
  $region8: #{sensor_transformer_forward.7} parent=0 // loop_exit
    _

</llo_original>
